<compile_context>
chip_gen: v5e
topology: v5e:2x2
jax: 0.10.0
libtpu: 0.0.40
codegen_flags: <defaults>
</compile_context>

<pallas_src>
import functools

import jax
import jax.numpy as jnp
from jax.experimental import pallas as pl
from jax.experimental.pallas import tpu as pltpu

LN_EPS = 1e-12


def _layernorm(x, g, b):
    mu = jnp.mean(x, axis=-1, keepdims=True)
    var = jnp.mean((x - mu) ** 2, axis=-1, keepdims=True)
    return (x - mu) * jax.lax.rsqrt(var + LN_EPS) * g + b


def _pick_tile(n, candidates):
    for c in candidates:
        if n % c == 0:
            return c
    return n


def _vmem_limit_bytes():
    # ~75% of physical VMEM (v5e/v6e: 128 MiB -> 96 MiB, v7x: 64 MiB -> 48 MiB).
    try:
        cap = getattr(pltpu.get_tpu_info(), "vmem_capacity_bytes",
                      64 * 1024 * 1024)
    except Exception:
        cap = 64 * 1024 * 1024
    return max(int(cap * 3 // 4), 32 * 1024 * 1024)


def _choose_tf(D, F, S, tq, n_heads, vmem_limit, attn_bytes, write_attn):
    """Prefer fully-resident FFN weights (tf = F); else stream chunks."""
    budget = int(vmem_limit * 0.8)
    fixed = (4 * D * D * 2            # wq/wk/wv/wo bf16, single-buffered
             + 12 * D * 4             # biases + LN params (f32, generous)
             + 2 * S * D * 2          # K/V bf16 caches
             + 2 * S * D * 4          # x block (double-buffered, f32 worst case)
             + 2 * tq * D * 4         # out block (double-buffered)
             + 2 * tq * D * 4         # h1 f32 + FFN accumulator scratches
             + 2 * tq * D * 2)        # h1 bf16 + ctx bf16 scratches
    if write_attn:
        fixed += 2 * n_heads * tq * S * attn_bytes
    resident = 4 * D * F + 4 * F + 4 * tq * F   # w1+w2 bf16 (1-buf) + b1 + ff act
    if fixed + resident <= budget:
        return F
    for tf in (4096, 2048, 1024, 512, 256, 128):
        if F % tf == 0 and fixed + (8 * D * tf + 8 * tf + 4 * tq * tf) <= budget:
            return tf
    return _pick_tile(F, (256, 128))


def _encoder_layer_body(x_ref, mask_ref,
                        wq_ref, bq_ref, wk_ref, bk_ref, wv_ref, bv_ref,
                        wo_ref, bo_ref, g1_ref, be1_ref,
                        w1_ref, b1_ref, w2_ref, b2_ref, g2_ref, be2_ref,
                        out_ref, attn_ref,
                        k_cache, v_cache, h1f_ref, h1b_ref, acc_ref, ctx_ref,
                        *, n_heads, tq):
    qi = pl.program_id(1)
    f = pl.program_id(2)
    n_f = pl.num_programs(2)

    # ---- K/V projection: once per batch element (first q-tile, first chunk) --
    @pl.when((qi == 0) & (f == 0))
    def _project_kv():
        x_all = x_ref[0].astype(jnp.bfloat16)                 # (S, D)
        k = jnp.dot(x_all, wk_ref[...],
                    preferred_element_type=jnp.float32) + bk_ref[...]
        v = jnp.dot(x_all, wv_ref[...],
                    preferred_element_type=jnp.float32) + bv_ref[...]
        k_cache[...] = k.astype(jnp.bfloat16)
        v_cache[...] = v.astype(jnp.bfloat16)

    # ---- attention + residual + LN1: once per (batch, q-tile) ---------------
    @pl.when(f == 0)
    def _attention():
        q_start = pl.multiple_of(qi * tq, tq)
        x_q_f32 = x_ref[0, pl.ds(q_start, tq), :].astype(jnp.float32)  # (tq, D)
        x_q = x_q_f32.astype(jnp.bfloat16)
        mask = mask_ref[0]                                    # (1, S) additive f32
        D = x_q_f32.shape[-1]
        hd = D // n_heads
        scale = 1.0 / (hd ** 0.5)

        q = (jnp.dot(x_q, wq_ref[...], preferred_element_type=jnp.float32)
             + bq_ref[...]) * scale
        q = q.astype(jnp.bfloat16)
        k = k_cache[...]
        v = v_cache[...]

        # Per-head softmax; context written directly into VMEM scratch.
        for h in range(n_heads):
            sl = slice(h * hd, (h + 1) * hd)
            sc = jax.lax.dot_general(                         # q @ k^T (f32)
                q[:, sl], k[:, sl], (((1,), (1,)), ((), ())),
                preferred_element_type=jnp.float32) + mask
            m = jnp.max(sc, axis=-1, keepdims=True)
            e = jnp.exp(sc - m)
            p = e * pl.reciprocal(jnp.sum(e, axis=-1, keepdims=True),
                                  approx=True)
            if attn_ref is not None:
                attn_ref[0, h] = p.astype(attn_ref.dtype)
            ctx_ref[:, sl] = jnp.dot(
                p.astype(jnp.bfloat16), v[:, sl],
                preferred_element_type=jnp.float32).astype(jnp.bfloat16)

        attn_out = jnp.dot(ctx_ref[...], wo_ref[...],
                           preferred_element_type=jnp.float32) + bo_ref[...]
        h1 = _layernorm(x_q_f32 + attn_out, g1_ref[...], be1_ref[...])
        h1f_ref[...] = h1
        h1b_ref[...] = h1.astype(jnp.bfloat16)                # cast once, not per chunk
        acc_ref[...] = jnp.zeros_like(acc_ref)

    # ---- FFN (resident weights when nf == 1, else streamed over F chunks) ---
    ff = jnp.dot(h1b_ref[...], w1_ref[...],
                 preferred_element_type=jnp.float32) + b1_ref[...]
    ff = jax.nn.gelu(ff, approximate=True)
    acc_ref[...] += jnp.dot(ff.astype(jnp.bfloat16), w2_ref[...],
                            preferred_element_type=jnp.float32)

    # ---- residual + LN2 + writeback on the last chunk ------------------------
    @pl.when(f == n_f - 1)
    def _finalize():
        out = _layernorm(h1f_ref[...] + acc_ref[...] + b2_ref[...],
                         g2_ref[...], be2_ref[...])
        out_ref[0] = out.astype(out_ref.dtype)


def _make_layer_kernel(n_heads, tq, write_attn):
    n_in = 18

    def kernel(*refs):
        in_refs = refs[:n_in]
        if write_attn:
            out_ref, attn_ref = refs[n_in], refs[n_in + 1]
            scratch = refs[n_in + 2:]
        else:
            out_ref, attn_ref = refs[n_in], None
            scratch = refs[n_in + 1:]
        _encoder_layer_body(*in_refs, out_ref, attn_ref, *scratch,
                            n_heads=n_heads, tq=tq)

    return kernel


def encoder_layer(x, mask_add, lp, n_heads, *, attn_dtype=jnp.bfloat16,
                  collect_attn_probs=True, single_buffer_weights=True):
    B, S, D = x.shape
    F = lp['w1'].shape[1]
    vmem_limit = _vmem_limit_bytes()
    tq = _pick_tile(S, (256, 128, 64, 32, 16, 8))              # query-row tile
    tf = _choose_tf(D, F, S, tq, n_heads, vmem_limit,
                    jnp.dtype(attn_dtype).itemsize, collect_attn_probs)
    nq, nf = S // tq, F // tf

    def cspec(shape):
        # Grid-invariant (weight / LN param) block: constant index_map; single
        # buffered so resident weights are not doubled in VMEM.
        nd = len(shape)
        idx = lambda b, qi, f, _nd=nd: (0,) * _nd
        if single_buffer_weights:
            return pl.BlockSpec(shape, idx,
                                pipeline_mode=pl.Buffered(buffer_count=1))
        return pl.BlockSpec(shape, idx)

    if nf == 1:
        # FFN weights fully resident (grid-invariant, single-buffered).
        w1_spec, b1_spec, w2_spec = cspec((D, F)), cspec((1, F)), cspec((F, D))
    else:
        # Stream F in chunks over the innermost ("arbitrary") grid axis.
        w1_spec = pl.BlockSpec((D, tf), lambda b, qi, f: (0, f))
        b1_spec = pl.BlockSpec((1, tf), lambda b, qi, f: (0, f))
        w2_spec = pl.BlockSpec((tf, D), lambda b, qi, f: (f, 0))

    in_specs = [
        pl.BlockSpec((1, S, D), lambda b, qi, f: (b, 0, 0)),   # x (read once per b)
        pl.BlockSpec((1, 1, S), lambda b, qi, f: (b, 0, 0)),   # additive key mask
        cspec((D, D)), cspec((1, D)),                          # wq, bq
        cspec((D, D)), cspec((1, D)),                          # wk, bk
        cspec((D, D)), cspec((1, D)),                          # wv, bv
        cspec((D, D)), cspec((1, D)),                          # wo, bo
        cspec((1, D)), cspec((1, D)),                          # ln1 gamma/beta
        w1_spec, b1_spec, w2_spec,                             # FFN weights
        cspec((1, D)),                                         # b2
        cspec((1, D)), cspec((1, D)),                          # ln2 gamma/beta
    ]

    out_spec_x = pl.BlockSpec((1, tq, D), lambda b, qi, f: (b, qi, 0))
    if collect_attn_probs:
        out_specs = [out_spec_x,
                     pl.BlockSpec((1, n_heads, tq, S),
                                  lambda b, qi, f: (b, 0, qi, 0))]
        out_shape = [jax.ShapeDtypeStruct((B, S, D), x.dtype),
                     jax.ShapeDtypeStruct((B, n_heads, S, S), attn_dtype)]
    else:
        out_specs = out_spec_x
        out_shape = jax.ShapeDtypeStruct((B, S, D), x.dtype)

    scratch_shapes = [
        pltpu.VMEM((S, D), jnp.bfloat16),    # K cache (per batch element)
        pltpu.VMEM((S, D), jnp.bfloat16),    # V cache
        pltpu.VMEM((tq, D), jnp.float32),    # h1 f32 (for LN2 residual)
        pltpu.VMEM((tq, D), jnp.bfloat16),   # h1 bf16 (FFN matmul operand)
        pltpu.VMEM((tq, D), jnp.float32),    # FFN accumulator
        pltpu.VMEM((tq, D), jnp.bfloat16),   # attention context (no concat)
    ]

    fn = pl.pallas_call(
        _make_layer_kernel(n_heads, tq, collect_attn_probs),
        grid=(B, nq, nf),
        in_specs=in_specs,
        out_specs=out_specs,
        out_shape=out_shape,
        scratch_shapes=scratch_shapes,
        compiler_params=pltpu.CompilerParams(
            # qi is "arbitrary" so the K/V caches filled at qi == 0 are valid
            # for later q-tiles on the same core.
            dimension_semantics=("parallel", "arbitrary", "arbitrary"),
            vmem_limit_bytes=vmem_limit),
    )
    res = fn(x, mask_add,
             lp['wq'], lp['bq'], lp['wk'], lp['bk'], lp['wv'], lp['bv'],
             lp['wo'], lp['bo'], lp['ln1_g'], lp['ln1_b'],
             lp['w1'], lp['b1'], lp['w2'], lp['b2'],
             lp['ln2_g'], lp['ln2_b'])
    if collect_attn_probs:
        return res[0], res[1]
    return res, None


def pooler_kernel(cls_ref, w_ref, b_ref, out_ref):
    out_ref[...] = jnp.tanh(
        jnp.dot(cls_ref[...].astype(jnp.bfloat16), w_ref[...],
                preferred_element_type=jnp.float32) + b_ref[...])


def pooler(cls_x, w_bf16, b):
    B, D = cls_x.shape
    return pl.pallas_call(
        pooler_kernel,
        out_shape=jax.ShapeDtypeStruct((B, D), jnp.float32),
    )(cls_x, w_bf16, b)


def bert_forward(params, inputs, segments, *, n_heads, pad_id=0,
                 attn_dtype=jnp.bfloat16, collect_attn_probs=True,
                 single_buffer_weights=True, hidden_dtype=jnp.float32):
    B, S = inputs.shape
    # --- embedding glue (gathers in plain XLA), matches BERT: tok + pos + seg
    tok = jnp.take(params['tok_emb'], inputs, axis=0)
    not_pad = (inputs != pad_id).astype(jnp.int32)
    positions = jnp.arange(1, S + 1, dtype=jnp.int32)[None, :] * not_pad  # pad -> 0
    pos = jnp.take(params['pos_emb'], positions, axis=0)
    seg = jnp.take(params['seg_emb'], segments, axis=0)
    x = (tok + pos + seg).astype(hidden_dtype)

    # compact additive pad mask on keys: (B, 1, S); broadcast inside the kernel
    key_pad = (inputs == pad_id)
    mask_add = jnp.where(key_pad[:, None, :], jnp.float32(-1e9), jnp.float32(0.0))

    # cast matmul weights once to bf16 (halves weight DMA; bf16 MXU everywhere)
    layers_bf16 = []
    for lp in params['layers']:
        lp2 = dict(lp)
        for k in ('wq', 'wk', 'wv', 'wo', 'w1', 'w2'):
            lp2[k] = lp[k].astype(jnp.bfloat16)
        layers_bf16.append(lp2)

    attn_probs = []
    for lp in layers_bf16:
        x, p = encoder_layer(x, mask_add, lp, n_heads,
                             attn_dtype=attn_dtype,
                             collect_attn_probs=collect_attn_probs,
                             single_buffer_weights=single_buffer_weights)
        if collect_attn_probs:
            attn_probs.append(p)

    cls = x[:, 0, :]                                       # outputs[:, 0]
    cls_out = pooler(cls, params['pool_w'].astype(jnp.bfloat16),
                     params['pool_b'])
    # per-layer tuple (no jnp.stack -> no extra HBM copy of all L layers)
    return x, cls_out, tuple(attn_probs)


def init_params(key, *, vocab, n_seg, seq, D, F, L):
    keys = jax.random.split(key, 4 + L)

    def nrm(k, shape, s=0.02):
        return (s * jax.random.normal(k, shape)).astype(jnp.float32)

    params = {
        'tok_emb': nrm(keys[0], (vocab, D)),
        'pos_emb': nrm(keys[1], (seq + 1, D)),
        'seg_emb': nrm(keys[2], (n_seg, D)),
        'pool_w': nrm(keys[3], (D, D)),
        'pool_b': jnp.zeros((1, D), jnp.float32),
        'layers': [],
    }
    for l in range(L):
        lk = jax.random.split(keys[4 + l], 6)
        params['layers'].append({
            'wq': nrm(lk[0], (D, D)), 'bq': jnp.zeros((1, D), jnp.float32),
            'wk': nrm(lk[1], (D, D)), 'bk': jnp.zeros((1, D), jnp.float32),
            'wv': nrm(lk[2], (D, D)), 'bv': jnp.zeros((1, D), jnp.float32),
            'wo': nrm(lk[3], (D, D)), 'bo': jnp.zeros((1, D), jnp.float32),
            'ln1_g': jnp.ones((1, D), jnp.float32),
            'ln1_b': jnp.zeros((1, D), jnp.float32),
            'w1': nrm(lk[4], (D, F)), 'b1': jnp.zeros((1, F), jnp.float32),
            'w2': nrm(lk[5], (F, D)), 'b2': jnp.zeros((1, D), jnp.float32),
            'ln2_g': jnp.ones((1, D), jnp.float32),
            'ln2_b': jnp.zeros((1, D), jnp.float32),
        })
    return params


if __name__ == "__main__":
    # small config: batch=2, seq=8, hidden=32, heads=4, ffn=64, layers=2
    B, S, D, H, F, L = 2, 8, 32, 4, 64, 2
    VOCAB, N_SEG, PAD = 32, 2, 0

    key = jax.random.PRNGKey(0)
    kp, ki = jax.random.split(key)
    params = init_params(kp, vocab=VOCAB, n_seg=N_SEG, seq=S, D=D, F=F, L=L)

    inputs = jax.random.randint(ki, (B, S), 1, VOCAB, dtype=jnp.int32)
    inputs = inputs.at[1, S - 2:].set(PAD)   # pad tail on second sequence
    segments = jnp.concatenate(
        [jnp.zeros((B, S // 2), jnp.int32), jnp.ones((B, S // 2), jnp.int32)],
        axis=1)

    run = functools.partial(bert_forward, params, inputs, segments,
                            n_heads=H, pad_id=PAD)
    try:
        outputs, outputs_cls, attn_probs = run(single_buffer_weights=True)
    except Exception:
        # Fallback only changes pipeline_mode=pl.Buffered(1) -> default double
        # buffering; any unrelated error will re-raise from this second call.
        outputs, outputs_cls, attn_probs = run(single_buffer_weights=False)
    jax.block_until_ready((outputs, outputs_cls, attn_probs))

    assert outputs.shape == (B, S, D)
    assert outputs_cls.shape == (B, D)
    assert len(attn_probs) == L
    assert all(p.shape == (B, H, S, S) for p in attn_probs)

    # Exercise the no-attention-probs fast path (pure inference mode); the
    # hidden-state math is identical.
    outputs2, outputs_cls2, attn_probs2 = run(collect_attn_probs=False)
    jax.block_until_ready((outputs2, outputs_cls2))
    assert attn_probs2 == ()
    assert outputs2.shape == (B, S, D)
    assert bool(jnp.allclose(outputs, outputs2, atol=1e-5, rtol=1e-5))

    print("KERNEL_OK")
</pallas_src>

<mosaic_0001>
module attributes {stable_mosaic.version = 11 : i64} {
  func.func @kernel(%arg0: i32, %arg1: i32, %arg2: i32, %arg3: memref<1x8x32xf32, #tpu.memory_space<vmem>>, %arg4: memref<1x1x8xf32, #tpu.memory_space<vmem>>, %arg5: memref<32x32xbf16, #tpu.memory_space<vmem>>, %arg6: memref<1x32xf32, #tpu.memory_space<vmem>>, %arg7: memref<32x32xbf16, #tpu.memory_space<vmem>>, %arg8: memref<1x32xf32, #tpu.memory_space<vmem>>, %arg9: memref<32x32xbf16, #tpu.memory_space<vmem>>, %arg10: memref<1x32xf32, #tpu.memory_space<vmem>>, %arg11: memref<32x32xbf16, #tpu.memory_space<vmem>>, %arg12: memref<1x32xf32, #tpu.memory_space<vmem>>, %arg13: memref<1x32xf32, #tpu.memory_space<vmem>>, %arg14: memref<1x32xf32, #tpu.memory_space<vmem>>, %arg15: memref<32x64xbf16, #tpu.memory_space<vmem>>, %arg16: memref<1x64xf32, #tpu.memory_space<vmem>>, %arg17: memref<64x32xbf16, #tpu.memory_space<vmem>>, %arg18: memref<1x32xf32, #tpu.memory_space<vmem>>, %arg19: memref<1x32xf32, #tpu.memory_space<vmem>>, %arg20: memref<1x32xf32, #tpu.memory_space<vmem>>, %arg21: memref<1x8x32xf32, #tpu.memory_space<vmem>>, %arg22: memref<1x4x8x8xbf16, #tpu.memory_space<vmem>>, %arg23: memref<8x32xbf16, #tpu.memory_space<vmem>>, %arg24: memref<8x32xbf16, #tpu.memory_space<vmem>>, %arg25: memref<8x32xf32, #tpu.memory_space<vmem>>, %arg26: memref<8x32xbf16, #tpu.memory_space<vmem>>, %arg27: memref<8x32xf32, #tpu.memory_space<vmem>>, %arg28: memref<8x32xbf16, #tpu.memory_space<vmem>>) attributes {dimension_semantics = [#tpu.dimension_semantics<parallel>, #tpu.dimension_semantics<arbitrary>, #tpu.dimension_semantics<arbitrary>], iteration_bounds = array<i64: 2, 1, 1>, scalar_prefetch = 0 : i64, scratch_operands = 6 : i64, tpu.core_type = #tpu.core_type<tc>, window_params = [{transform_indices = @transform_0, window_bounds = array<i64: 1, 8, 32>}, {transform_indices = @transform_1, window_bounds = array<i64: 1, 1, 8>}, {pipeline_mode = #tpu.pipeline_mode<synchronous>, transform_indices = @transform_2, window_bounds = array<i64: 32, 32>}, {pipeline_mode = #tpu.pipeline_mode<synchronous>, transform_indices = @transform_3, window_bounds = array<i64: 1, 32>}, {pipeline_mode = #tpu.pipeline_mode<synchronous>, transform_indices = @transform_4, window_bounds = array<i64: 32, 32>}, {pipeline_mode = #tpu.pipeline_mode<synchronous>, transform_indices = @transform_5, window_bounds = array<i64: 1, 32>}, {pipeline_mode = #tpu.pipeline_mode<synchronous>, transform_indices = @transform_6, window_bounds = array<i64: 32, 32>}, {pipeline_mode = #tpu.pipeline_mode<synchronous>, transform_indices = @transform_7, window_bounds = array<i64: 1, 32>}, {pipeline_mode = #tpu.pipeline_mode<synchronous>, transform_indices = @transform_8, window_bounds = array<i64: 32, 32>}, {pipeline_mode = #tpu.pipeline_mode<synchronous>, transform_indices = @transform_9, window_bounds = array<i64: 1, 32>}, {pipeline_mode = #tpu.pipeline_mode<synchronous>, transform_indices = @transform_10, window_bounds = array<i64: 1, 32>}, {pipeline_mode = #tpu.pipeline_mode<synchronous>, transform_indices = @transform_11, window_bounds = array<i64: 1, 32>}, {pipeline_mode = #tpu.pipeline_mode<synchronous>, transform_indices = @transform_12, window_bounds = array<i64: 32, 64>}, {pipeline_mode = #tpu.pipeline_mode<synchronous>, transform_indices = @transform_13, window_bounds = array<i64: 1, 64>}, {pipeline_mode = #tpu.pipeline_mode<synchronous>, transform_indices = @transform_14, window_bounds = array<i64: 64, 32>}, {pipeline_mode = #tpu.pipeline_mode<synchronous>, transform_indices = @transform_15, window_bounds = array<i64: 1, 32>}, {pipeline_mode = #tpu.pipeline_mode<synchronous>, transform_indices = @transform_16, window_bounds = array<i64: 1, 32>}, {pipeline_mode = #tpu.pipeline_mode<synchronous>, transform_indices = @transform_17, window_bounds = array<i64: 1, 32>}, {transform_indices = @transform_18, window_bounds = array<i64: 1, 8, 32>}, {transform_indices = @transform_19, window_bounds = array<i64: 1, 4, 8, 8>}]} {
    %c0_i32 = arith.constant 0 : i32
    %0 = arith.cmpi eq, %arg1, %c0_i32 : i32
    %c0_i32_0 = arith.constant 0 : i32
    %1 = arith.cmpi eq, %arg2, %c0_i32_0 : i32
    %2 = arith.andi %0, %1 : i1
    %3 = arith.extui %2 : i1 to i32
    %c0_i32_1 = arith.constant 0 : i32
    %4 = arith.cmpi ne, %3, %c0_i32_1 : i32
    scf.if %4 {
      %c0_22 = arith.constant 0 : index
      %c0_23 = arith.constant 0 : index
      %c0_24 = arith.constant 0 : index
      %36 = vector.load %arg3[%c0_22, %c0_23, %c0_24] : memref<1x8x32xf32, #tpu.memory_space<vmem>>, vector<1x8x32xf32>
      %37 = vector.shape_cast %36 : vector<1x8x32xf32> to vector<8x32xf32>
      %38 = arith.truncf %37 : vector<8x32xf32> to vector<8x32xbf16>
      %c0_25 = arith.constant 0 : index
      %c0_26 = arith.constant 0 : index
      %39 = vector.load %arg7[%c0_25, %c0_26] : memref<32x32xbf16, #tpu.memory_space<vmem>>, vector<32x32xbf16>
      %cst_27 = arith.constant dense<0.000000e+00> : vector<8x32xf32>
      %40 = tpu.matmul %38, %39, %cst_27 {dimension_numbers = #tpu.dot_dimension_numbers<[1], [0], [0], [1], [0, 0, 1, 1], [], []>} : vector<8x32xbf16>, vector<32x32xbf16>, vector<8x32xf32> -> vector<8x32xf32>
      %c0_28 = arith.constant 0 : index
      %c0_29 = arith.constant 0 : index
      %41 = vector.load %arg8[%c0_28, %c0_29] : memref<1x32xf32, #tpu.memory_space<vmem>>, vector<1x32xf32>
      %42 = vector.broadcast %41 : vector<1x32xf32> to vector<8x32xf32>
      %43 = arith.addf %40, %42 : vector<8x32xf32>
      %c0_30 = arith.constant 0 : index
      %c0_31 = arith.constant 0 : index
      %44 = vector.load %arg9[%c0_30, %c0_31] : memref<32x32xbf16, #tpu.memory_space<vmem>>, vector<32x32xbf16>
      %cst_32 = arith.constant dense<0.000000e+00> : vector<8x32xf32>
      %45 = tpu.matmul %38, %44, %cst_32 {dimension_numbers = #tpu.dot_dimension_numbers<[1], [0], [0], [1], [0, 0, 1, 1], [], []>} : vector<8x32xbf16>, vector<32x32xbf16>, vector<8x32xf32> -> vector<8x32xf32>
      %c0_33 = arith.constant 0 : index
      %c0_34 = arith.constant 0 : index
      %46 = vector.load %arg10[%c0_33, %c0_34] : memref<1x32xf32, #tpu.memory_space<vmem>>, vector<1x32xf32>
      %47 = vector.broadcast %46 : vector<1x32xf32> to vector<8x32xf32>
      %48 = arith.addf %45, %47 : vector<8x32xf32>
      %49 = arith.truncf %43 : vector<8x32xf32> to vector<8x32xbf16>
      %c0_35 = arith.constant 0 : index
      %c0_36 = arith.constant 0 : index
      %50 = vector.load %arg23[%c0_35, %c0_36] : memref<8x32xbf16, #tpu.memory_space<vmem>>, vector<8x32xbf16>
      tpu.vector_store %arg23[%c0_35, %c0_36], %49 {strides = array<i32>} : memref<8x32xbf16, #tpu.memory_space<vmem>>, vector<8x32xbf16>,
      %51 = arith.truncf %48 : vector<8x32xf32> to vector<8x32xbf16>
      %c0_37 = arith.constant 0 : index
      %c0_38 = arith.constant 0 : index
      %52 = vector.load %arg24[%c0_37, %c0_38] : memref<8x32xbf16, #tpu.memory_space<vmem>>, vector<8x32xbf16>
      tpu.vector_store %arg24[%c0_37, %c0_38], %51 {strides = array<i32>} : memref<8x32xbf16, #tpu.memory_space<vmem>>, vector<8x32xbf16>,
    } else {
    }
    %c0_i32_2 = arith.constant 0 : i32
    %5 = arith.cmpi eq, %arg2, %c0_i32_2 : i32
    %6 = arith.extui %5 : i1 to i32
    %c0_i32_3 = arith.constant 0 : i32
    %7 = arith.cmpi ne, %6, %c0_i32_3 : i32
    scf.if %7 {
      %c8_i32 = arith.constant 8 : i32
      %36 = arith.muli %arg1, %c8_i32 : i32
      %37 = tpu.assume_multiple %36, 8 : i32
      %c0_22 = arith.constant 0 : index
      %38 = arith.index_cast %37 : i32 to index
      %c0_23 = arith.constant 0 : index
      %39 = vector.load %arg3[%c0_22, %38, %c0_23] : memref<1x8x32xf32, #tpu.memory_space<vmem>>, vector<1x8x32xf32>
      %40 = vector.shape_cast %39 : vector<1x8x32xf32> to vector<8x32xf32>
      %41 = arith.truncf %40 : vector<8x32xf32> to vector<8x32xbf16>
      %c0_24 = arith.constant 0 : index
      %c0_25 = arith.constant 0 : index
      %c0_26 = arith.constant 0 : index
      %42 = vector.load %arg4[%c0_24, %c0_25, %c0_26] : memref<1x1x8xf32, #tpu.memory_space<vmem>>, vector<1x1x8xf32>
      %43 = vector.shape_cast %42 : vector<1x1x8xf32> to vector<1x8xf32>
      %c0_27 = arith.constant 0 : index
      %c0_28 = arith.constant 0 : index
      %44 = vector.load %arg5[%c0_27, %c0_28] : memref<32x32xbf16, #tpu.memory_space<vmem>>, vector<32x32xbf16>
      %cst_29 = arith.constant dense<0.000000e+00> : vector<8x32xf32>
      %45 = tpu.matmul %41, %44, %cst_29 {dimension_numbers = #tpu.dot_dimension_numbers<[1], [0], [0], [1], [0, 0, 1, 1], [], []>} : vector<8x32xbf16>, vector<32x32xbf16>, vector<8x32xf32> -> vector<8x32xf32>
      %c0_30 = arith.constant 0 : index
      %c0_31 = arith.constant 0 : index
      %46 = vector.load %arg6[%c0_30, %c0_31] : memref<1x32xf32, #tpu.memory_space<vmem>>, vector<1x32xf32>
      %47 = vector.broadcast %46 : vector<1x32xf32> to vector<8x32xf32>
      %48 = arith.addf %45, %47 : vector<8x32xf32>
      %cst_32 = arith.constant 0.353553385 : f32
      %49 = vector.broadcast %cst_32 : f32 to vector<8x32xf32>
      %50 = arith.mulf %48, %49 : vector<8x32xf32>
      %51 = arith.truncf %50 : vector<8x32xf32> to vector<8x32xbf16>
      %c0_33 = arith.constant 0 : index
      %c0_34 = arith.constant 0 : index
      %52 = vector.load %arg23[%c0_33, %c0_34] : memref<8x32xbf16, #tpu.memory_space<vmem>>, vector<8x32xbf16>
      %c0_35 = arith.constant 0 : index
      %c0_36 = arith.constant 0 : index
      %53 = vector.load %arg24[%c0_35, %c0_36] : memref<8x32xbf16, #tpu.memory_space<vmem>>, vector<8x32xbf16>
      %54 = vector.extract_strided_slice %51 {offsets = [0, 0], sizes = [8, 8], strides = [1, 1]} : vector<8x32xbf16> to vector<8x8xbf16>
      %55 = vector.extract_strided_slice %52 {offsets = [0, 0], sizes = [8, 8], strides = [1, 1]} : vector<8x32xbf16> to vector<8x8xbf16>
      %cst_37 = arith.constant dense<0.000000e+00> : vector<8x8xf32>
      %56 = tpu.matmul %54, %55, %cst_37 {dimension_numbers = #tpu.dot_dimension_numbers<[1], [1], [0], [0], [0, 0, 1, 0], [], []>} : vector<8x8xbf16>, vector<8x8xbf16>, vector<8x8xf32> -> vector<8x8xf32>
      %57 = vector.broadcast %43 : vector<1x8xf32> to vector<8x8xf32>
      %58 = arith.addf %56, %57 : vector<8x8xf32>
      %cst_38 = arith.constant dense<0xFF800000> : vector<8xf32>
      %59 = vector.multi_reduction <maximumf>, %58, %cst_38 [1] : vector<8x8xf32> to vector<8xf32>
      %60 = vector.shape_cast %59 : vector<8xf32> to vector<8x1xf32>
      %61 = vector.broadcast %60 : vector<8x1xf32> to vector<8x8xf32>
      %62 = arith.subf %58, %61 : vector<8x8xf32>
      %63 = math.exp %62 : vector<8x8xf32>
      %cst_39 = arith.constant dense<0.000000e+00> : vector<8xf32>
      %64 = vector.multi_reduction <add>, %63, %cst_39 [1] : vector<8x8xf32> to vector<8xf32>
      %65 = vector.shape_cast %64 : vector<8xf32> to vector<8x1xf32>
      %66 = tpu.reciprocal %65 {approx = true} : vector<8x1xf32> -> vector<8x1xf32>
      %67 = vector.broadcast %66 : vector<8x1xf32> to vector<8x8xf32>
      %68 = arith.mulf %63, %67 : vector<8x8xf32>
      %69 = arith.truncf %68 : vector<8x8xf32> to vector<8x8xbf16>
      %c0_40 = arith.constant 0 : index
      %c0_41 = arith.constant 0 : index
      %c0_42 = arith.constant 0 : index
      %c0_43 = arith.constant 0 : index
      %70 = vector.load %arg22[%c0_40, %c0_41, %c0_42, %c0_43] : memref<1x4x8x8xbf16, #tpu.memory_space<vmem>>, vector<1x1x8x8xbf16>
      %71 = vector.shape_cast %70 : vector<1x1x8x8xbf16> to vector<8x8xbf16>
      %72 = vector.shape_cast %69 : vector<8x8xbf16> to vector<1x1x8x8xbf16>
      tpu.vector_store %arg22[%c0_40, %c0_41, %c0_42, %c0_43], %72 {strides = array<i32>} : memref<1x4x8x8xbf16, #tpu.memory_space<vmem>>, vector<1x1x8x8xbf16>,
      %73 = arith.truncf %68 : vector<8x8xf32> to vector<8x8xbf16>
      %74 = vector.extract_strided_slice %53 {offsets = [0, 0], sizes = [8, 8], strides = [1, 1]} : vector<8x32xbf16> to vector<8x8xbf16>
      %cst_44 = arith.constant dense<0.000000e+00> : vector<8x8xf32>
      %75 = tpu.matmul %73, %74, %cst_44 {dimension_numbers = #tpu.dot_dimension_numbers<[1], [0], [0], [1], [0, 0, 1, 1], [], []>} : vector<8x8xbf16>, vector<8x8xbf16>, vector<8x8xf32> -> vector<8x8xf32>
      %76 = arith.truncf %75 : vector<8x8xf32> to vector<8x8xbf16>
      %c0_45 = arith.constant 0 : index
      %c0_46 = arith.constant 0 : index
      %77 = vector.load %arg28[%c0_45, %c0_46] : memref<8x32xbf16, #tpu.memory_space<vmem>>, vector<8x8xbf16>
      tpu.vector_store %arg28[%c0_45, %c0_46], %76 {strides = array<i32>} : memref<8x32xbf16, #tpu.memory_space<vmem>>, vector<8x8xbf16>,
      %78 = vector.extract_strided_slice %51 {offsets = [0, 8], sizes = [8, 8], strides = [1, 1]} : vector<8x32xbf16> to vector<8x8xbf16>
      %79 = vector.extract_strided_slice %52 {offsets = [0, 8], sizes = [8, 8], strides = [1, 1]} : vector<8x32xbf16> to vector<8x8xbf16>
      %cst_47 = arith.constant dense<0.000000e+00> : vector<8x8xf32>
      %80 = tpu.matmul %78, %79, %cst_47 {dimension_numbers = #tpu.dot_dimension_numbers<[1], [1], [0], [0], [0, 0, 1, 0], [], []>} : vector<8x8xbf16>, vector<8x8xbf16>, vector<8x8xf32> -> vector<8x8xf32>
      %81 = vector.broadcast %43 : vector<1x8xf32> to vector<8x8xf32>
      %82 = arith.addf %80, %81 : vector<8x8xf32>
      %cst_48 = arith.constant dense<0xFF800000> : vector<8xf32>
      %83 = vector.multi_reduction <maximumf>, %82, %cst_48 [1] : vector<8x8xf32> to vector<8xf32>
      %84 = vector.shape_cast %83 : vector<8xf32> to vector<8x1xf32>
      %85 = vector.broadcast %84 : vector<8x1xf32> to vector<8x8xf32>
      %86 = arith.subf %82, %85 : vector<8x8xf32>
      %87 = math.exp %86 : vector<8x8xf32>
      %cst_49 = arith.constant dense<0.000000e+00> : vector<8xf32>
      %88 = vector.multi_reduction <add>, %87, %cst_49 [1] : vector<8x8xf32> to vector<8xf32>
      %89 = vector.shape_cast %88 : vector<8xf32> to vector<8x1xf32>
      %90 = tpu.reciprocal %89 {approx = true} : vector<8x1xf32> -> vector<8x1xf32>
      %91 = vector.broadcast %90 : vector<8x1xf32> to vector<8x8xf32>
      %92 = arith.mulf %87, %91 : vector<8x8xf32>
      %93 = arith.truncf %92 : vector<8x8xf32> to vector<8x8xbf16>
      %c0_50 = arith.constant 0 : index
      %c1 = arith.constant 1 : index
      %c0_51 = arith.constant 0 : index
      %c0_52 = arith.constant 0 : index
      %94 = vector.load %arg22[%c0_50, %c1, %c0_51, %c0_52] : memref<1x4x8x8xbf16, #tpu.memory_space<vmem>>, vector<1x1x8x8xbf16>
      %95 = vector.shape_cast %94 : vector<1x1x8x8xbf16> to vector<8x8xbf16>
      %96 = vector.shape_cast %93 : vector<8x8xbf16> to vector<1x1x8x8xbf16>
      tpu.vector_store %arg22[%c0_50, %c1, %c0_51, %c0_52], %96 {strides = array<i32>} : memref<1x4x8x8xbf16, #tpu.memory_space<vmem>>, vector<1x1x8x8xbf16>,
      %97 = arith.truncf %92 : vector<8x8xf32> to vector<8x8xbf16>
      %98 = vector.extract_strided_slice %53 {offsets = [0, 8], sizes = [8, 8], strides = [1, 1]} : vector<8x32xbf16> to vector<8x8xbf16>
      %cst_53 = arith.constant dense<0.000000e+00> : vector<8x8xf32>
      %99 = tpu.matmul %97, %98, %cst_53 {dimension_numbers = #tpu.dot_dimension_numbers<[1], [0], [0], [1], [0, 0, 1, 1], [], []>} : vector<8x8xbf16>, vector<8x8xbf16>, vector<8x8xf32> -> vector<8x8xf32>
      %100 = arith.truncf %99 : vector<8x8xf32> to vector<8x8xbf16>
      %c0_54 = arith.constant 0 : index
      %c8 = arith.constant 8 : index
      %101 = vector.load %arg28[%c0_54, %c8] : memref<8x32xbf16, #tpu.memory_space<vmem>>, vector<8x8xbf16>
      tpu.vector_store %arg28[%c0_54, %c8], %100 {strides = array<i32>} : memref<8x32xbf16, #tpu.memory_space<vmem>>, vector<8x8xbf16>,
      %102 = vector.extract_strided_slice %51 {offsets = [0, 16], sizes = [8, 8], strides = [1, 1]} : vector<8x32xbf16> to vector<8x8xbf16>
      %103 = vector.extract_strided_slice %52 {offsets = [0, 16], sizes = [8, 8], strides = [1, 1]} : vector<8x32xbf16> to vector<8x8xbf16>
      %cst_55 = arith.constant dense<0.000000e+00> : vector<8x8xf32>
      %104 = tpu.matmul %102, %103, %cst_55 {dimension_numbers = #tpu.dot_dimension_numbers<[1], [1], [0], [0], [0, 0, 1, 0], [], []>} : vector<8x8xbf16>, vector<8x8xbf16>, vector<8x8xf32> -> vector<8x8xf32>
      %105 = vector.broadcast %43 : vector<1x8xf32> to vector<8x8xf32>
      %106 = arith.addf %104, %105 : vector<8x8xf32>
      %cst_56 = arith.constant dense<0xFF800000> : vector<8xf32>
      %107 = vector.multi_reduction <maximumf>, %106, %cst_56 [1] : vector<8x8xf32> to vector<8xf32>
      %108 = vector.shape_cast %107 : vector<8xf32> to vector<8x1xf32>
      %109 = vector.broadcast %108 : vector<8x1xf32> to vector<8x8xf32>
      %110 = arith.subf %106, %109 : vector<8x8xf32>
      %111 = math.exp %110 : vector<8x8xf32>
      %cst_57 = arith.constant dense<0.000000e+00> : vector<8xf32>
      %112 = vector.multi_reduction <add>, %111, %cst_57 [1] : vector<8x8xf32> to vector<8xf32>
      %113 = vector.shape_cast %112 : vector<8xf32> to vector<8x1xf32>
      %114 = tpu.reciprocal %113 {approx = true} : vector<8x1xf32> -> vector<8x1xf32>
      %115 = vector.broadcast %114 : vector<8x1xf32> to vector<8x8xf32>
      %116 = arith.mulf %111, %115 : vector<8x8xf32>
      %117 = arith.truncf %116 : vector<8x8xf32> to vector<8x8xbf16>
      %c0_58 = arith.constant 0 : index
      %c2 = arith.constant 2 : index
      %c0_59 = arith.constant 0 : index
      %c0_60 = arith.constant 0 : index
      %118 = vector.load %arg22[%c0_58, %c2, %c0_59, %c0_60] : memref<1x4x8x8xbf16, #tpu.memory_space<vmem>>, vector<1x1x8x8xbf16>
      %119 = vector.shape_cast %118 : vector<1x1x8x8xbf16> to vector<8x8xbf16>
      %120 = vector.shape_cast %117 : vector<8x8xbf16> to vector<1x1x8x8xbf16>
      tpu.vector_store %arg22[%c0_58, %c2, %c0_59, %c0_60], %120 {strides = array<i32>} : memref<1x4x8x8xbf16, #tpu.memory_space<vmem>>, vector<1x1x8x8xbf16>,
      %121 = arith.truncf %116 : vector<8x8xf32> to vector<8x8xbf16>
      %122 = vector.extract_strided_slice %53 {offsets = [0, 16], sizes = [8, 8], strides = [1, 1]} : vector<8x32xbf16> to vector<8x8xbf16>
      %cst_61 = arith.constant dense<0.000000e+00> : vector<8x8xf32>
      %123 = tpu.matmul %121, %122, %cst_61 {dimension_numbers = #tpu.dot_dimension_numbers<[1], [0], [0], [1], [0, 0, 1, 1], [], []>} : vector<8x8xbf16>, vector<8x8xbf16>, vector<8x8xf32> -> vector<8x8xf32>
      %124 = arith.truncf %123 : vector<8x8xf32> to vector<8x8xbf16>
      %c0_62 = arith.constant 0 : index
      %c16 = arith.constant 16 : index
      %125 = vector.load %arg28[%c0_62, %c16] : memref<8x32xbf16, #tpu.memory_space<vmem>>, vector<8x8xbf16>
      tpu.vector_store %arg28[%c0_62, %c16], %124 {strides = array<i32>} : memref<8x32xbf16, #tpu.memory_space<vmem>>, vector<8x8xbf16>,
      %126 = vector.extract_strided_slice %51 {offsets = [0, 24], sizes = [8, 8], strides = [1, 1]} : vector<8x32xbf16> to vector<8x8xbf16>
      %127 = vector.extract_strided_slice %52 {offsets = [0, 24], sizes = [8, 8], strides = [1, 1]} : vector<8x32xbf16> to vector<8x8xbf16>
      %cst_63 = arith.constant dense<0.000000e+00> : vector<8x8xf32>
      %128 = tpu.matmul %126, %127, %cst_63 {dimension_numbers = #tpu.dot_dimension_numbers<[1], [1], [0], [0], [0, 0, 1, 0], [], []>} : vector<8x8xbf16>, vector<8x8xbf16>, vector<8x8xf32> -> vector<8x8xf32>
      %129 = vector.broadcast %43 : vector<1x8xf32> to vector<8x8xf32>
      %130 = arith.addf %128, %129 : vector<8x8xf32>
      %cst_64 = arith.constant dense<0xFF800000> : vector<8xf32>
      %131 = vector.multi_reduction <maximumf>, %130, %cst_64 [1] : vector<8x8xf32> to vector<8xf32>
      %132 = vector.shape_cast %131 : vector<8xf32> to vector<8x1xf32>
      %133 = vector.broadcast %132 : vector<8x1xf32> to vector<8x8xf32>
      %134 = arith.subf %130, %133 : vector<8x8xf32>
      %135 = math.exp %134 : vector<8x8xf32>
      %cst_65 = arith.constant dense<0.000000e+00> : vector<8xf32>
      %136 = vector.multi_reduction <add>, %135, %cst_65 [1] : vector<8x8xf32> to vector<8xf32>
      %137 = vector.shape_cast %136 : vector<8xf32> to vector<8x1xf32>
      %138 = tpu.reciprocal %137 {approx = true} : vector<8x1xf32> -> vector<8x1xf32>
      %139 = vector.broadcast %138 : vector<8x1xf32> to vector<8x8xf32>
      %140 = arith.mulf %135, %139 : vector<8x8xf32>
      %141 = arith.truncf %140 : vector<8x8xf32> to vector<8x8xbf16>
      %c0_66 = arith.constant 0 : index
      %c3 = arith.constant 3 : index
      %c0_67 = arith.constant 0 : index
      %c0_68 = arith.constant 0 : index
      %142 = vector.load %arg22[%c0_66, %c3, %c0_67, %c0_68] : memref<1x4x8x8xbf16, #tpu.memory_space<vmem>>, vector<1x1x8x8xbf16>
      %143 = vector.shape_cast %142 : vector<1x1x8x8xbf16> to vector<8x8xbf16>
      %144 = vector.shape_cast %141 : vector<8x8xbf16> to vector<1x1x8x8xbf16>
      tpu.vector_store %arg22[%c0_66, %c3, %c0_67, %c0_68], %144 {strides = array<i32>} : memref<1x4x8x8xbf16, #tpu.memory_space<vmem>>, vector<1x1x8x8xbf16>,
      %145 = arith.truncf %140 : vector<8x8xf32> to vector<8x8xbf16>
      %146 = vector.extract_strided_slice %53 {offsets = [0, 24], sizes = [8, 8], strides = [1, 1]} : vector<8x32xbf16> to vector<8x8xbf16>
      %cst_69 = arith.constant dense<0.000000e+00> : vector<8x8xf32>
      %147 = tpu.matmul %145, %146, %cst_69 {dimension_numbers = #tpu.dot_dimension_numbers<[1], [0], [0], [1], [0, 0, 1, 1], [], []>} : vector<8x8xbf16>, vector<8x8xbf16>, vector<8x8xf32> -> vector<8x8xf32>
      %148 = arith.truncf %147 : vector<8x8xf32> to vector<8x8xbf16>
      %c0_70 = arith.constant 0 : index
      %c24 = arith.constant 24 : index
      %149 = vector.load %arg28[%c0_70, %c24] : memref<8x32xbf16, #tpu.memory_space<vmem>>, vector<8x8xbf16>
      tpu.vector_store %arg28[%c0_70, %c24], %148 {strides = array<i32>} : memref<8x32xbf16, #tpu.memory_space<vmem>>, vector<8x8xbf16>,
      %c0_71 = arith.constant 0 : index
      %c0_72 = arith.constant 0 : index
      %150 = vector.load %arg28[%c0_71, %c0_72] : memref<8x32xbf16, #tpu.memory_space<vmem>>, vector<8x32xbf16>
      %c0_73 = arith.constant 0 : index
      %c0_74 = arith.constant 0 : index
      %151 = vector.load %arg11[%c0_73, %c0_74] : memref<32x32xbf16, #tpu.memory_space<vmem>>, vector<32x32xbf16>
      %cst_75 = arith.constant dense<0.000000e+00> : vector<8x32xf32>
      %152 = tpu.matmul %150, %151, %cst_75 {dimension_numbers = #tpu.dot_dimension_numbers<[1], [0], [0], [1], [0, 0, 1, 1], [], []>} : vector<8x32xbf16>, vector<32x32xbf16>, vector<8x32xf32> -> vector<8x32xf32>
      %c0_76 = arith.constant 0 : index
      %c0_77 = arith.constant 0 : index
      %153 = vector.load %arg12[%c0_76, %c0_77] : memref<1x32xf32, #tpu.memory_space<vmem>>, vector<1x32xf32>
      %154 = vector.broadcast %153 : vector<1x32xf32> to vector<8x32xf32>
      %155 = arith.addf %152, %154 : vector<8x32xf32>
      %156 = arith.addf %40, %155 : vector<8x32xf32>
      %c0_78 = arith.constant 0 : index
      %c0_79 = arith.constant 0 : index
      %157 = vector.load %arg13[%c0_78, %c0_79] : memref<1x32xf32, #tpu.memory_space<vmem>>, vector<1x32xf32>
      %c0_80 = arith.constant 0 : index
      %c0_81 = arith.constant 0 : index
      %158 = vector.load %arg14[%c0_80, %c0_81] : memref<1x32xf32, #tpu.memory_space<vmem>>, vector<1x32xf32>
      %cst_82 = arith.constant dense<0.000000e+00> : vector<8xf32>
      %159 = vector.multi_reduction <add>, %156, %cst_82 [1] : vector<8x32xf32> to vector<8xf32>
      %160 = vector.shape_cast %159 : vector<8xf32> to vector<8x1xf32>
      %cst_83 = arith.constant 3.200000e+01 : f32
      %161 = vector.broadcast %cst_83 : f32 to vector<8x1xf32>
      %162 = arith.divf %160, %161 : vector<8x1xf32>
      %163 = vector.broadcast %162 : vector<8x1xf32> to vector<8x32xf32>
      %164 = arith.subf %156, %163 : vector<8x32xf32>
      %165 = arith.mulf %164, %164 : vector<8x32xf32>
      %cst_84 = arith.constant dense<0.000000e+00> : vector<8xf32>
      %166 = vector.multi_reduction <add>, %165, %cst_84 [1] : vector<8x32xf32> to vector<8xf32>
      %167 = vector.shape_cast %166 : vector<8xf32> to vector<8x1xf32>
      %cst_85 = arith.constant 3.200000e+01 : f32
      %168 = vector.broadcast %cst_85 : f32 to vector<8x1xf32>
      %169 = arith.divf %167, %168 : vector<8x1xf32>
      %170 = vector.broadcast %162 : vector<8x1xf32> to vector<8x32xf32>
      %171 = arith.subf %156, %170 : vector<8x32xf32>
      %cst_86 = arith.constant 9.99999996E-13 : f32
      %172 = vector.broadcast %cst_86 : f32 to vector<8x1xf32>
      %173 = arith.addf %169, %172 : vector<8x1xf32>
      %174 = math.rsqrt %173 : vector<8x1xf32>
      %175 = vector.broadcast %174 : vector<8x1xf32> to vector<8x32xf32>
      %176 = arith.mulf %171, %175 : vector<8x32xf32>
      %177 = vector.broadcast %157 : vector<1x32xf32> to vector<8x32xf32>
      %178 = arith.mulf %176, %177 : vector<8x32xf32>
      %179 = vector.broadcast %158 : vector<1x32xf32> to vector<8x32xf32>
      %180 = arith.addf %178, %179 : vector<8x32xf32>
      %c0_87 = arith.constant 0 : index
      %c0_88 = arith.constant 0 : index
      %181 = vector.load %arg25[%c0_87, %c0_88] : memref<8x32xf32, #tpu.memory_space<vmem>>, vector<8x32xf32>
      tpu.vector_store %arg25[%c0_87, %c0_88], %180 {strides = array<i32>} : memref<8x32xf32, #tpu.memory_space<vmem>>, vector<8x32xf32>,
      %182 = arith.truncf %180 : vector<8x32xf32> to vector<8x32xbf16>
      %c0_89 = arith.constant 0 : index
      %c0_90 = arith.constant 0 : index
      %183 = vector.load %arg26[%c0_89, %c0_90] : memref<8x32xbf16, #tpu.memory_space<vmem>>, vector<8x32xbf16>
      tpu.vector_store %arg26[%c0_89, %c0_90], %182 {strides = array<i32>} : memref<8x32xbf16, #tpu.memory_space<vmem>>, vector<8x32xbf16>,
      %cst_91 = arith.constant 0.000000e+00 : f32
      %184 = vector.broadcast %cst_91 : f32 to vector<8x32xf32>
      %c0_92 = arith.constant 0 : index
      %c0_93 = arith.constant 0 : index
      %185 = vector.load %arg27[%c0_92, %c0_93] : memref<8x32xf32, #tpu.memory_space<vmem>>, vector<8x32xf32>
      tpu.vector_store %arg27[%c0_92, %c0_93], %184 {strides = array<i32>} : memref<8x32xf32, #tpu.memory_space<vmem>>, vector<8x32xf32>,
    } else {
    }
    %c0 = arith.constant 0 : index
    %c0_4 = arith.constant 0 : index
    %8 = vector.load %arg26[%c0, %c0_4] : memref<8x32xbf16, #tpu.memory_space<vmem>>, vector<8x32xbf16>
    %c0_5 = arith.constant 0 : index
    %c0_6 = arith.constant 0 : index
    %9 = vector.load %arg15[%c0_5, %c0_6] : memref<32x64xbf16, #tpu.memory_space<vmem>>, vector<32x64xbf16>
    %cst = arith.constant dense<0.000000e+00> : vector<8x64xf32>
    %10 = tpu.matmul %8, %9, %cst {dimension_numbers = #tpu.dot_dimension_numbers<[1], [0], [0], [1], [0, 0, 1, 1], [], []>} : vector<8x32xbf16>, vector<32x64xbf16>, vector<8x64xf32> -> vector<8x64xf32>
    %c0_7 = arith.constant 0 : index
    %c0_8 = arith.constant 0 : index
    %11 = vector.load %arg16[%c0_7, %c0_8] : memref<1x64xf32, #tpu.memory_space<vmem>>, vector<1x64xf32>
    %12 = vector.broadcast %11 : vector<1x64xf32> to vector<8x64xf32>
    %13 = arith.addf %10, %12 : vector<8x64xf32>
    %14 = arith.mulf %13, %13 : vector<8x64xf32>
    %15 = arith.mulf %13, %14 : vector<8x64xf32>
    %cst_9 = arith.constant 4.471500e-02 : f32
    %16 = vector.broadcast %cst_9 : f32 to vector<8x64xf32>
    %17 = arith.mulf %16, %15 : vector<8x64xf32>
    %18 = arith.addf %13, %17 : vector<8x64xf32>
    %cst_10 = arith.constant 0.797884583 : f32
    %19 = vector.broadcast %cst_10 : f32 to vector<8x64xf32>
    %20 = arith.mulf %19, %18 : vector<8x64xf32>
    %21 = math.tanh %20 : vector<8x64xf32>
    %cst_11 = arith.constant 1.000000e+00 : f32
    %22 = vector.broadcast %cst_11 : f32 to vector<8x64xf32>
    %23 = arith.addf %22, %21 : vector<8x64xf32>
    %cst_12 = arith.constant 5.000000e-01 : f32
    %24 = vector.broadcast %cst_12 : f32 to vector<8x64xf32>
    %25 = arith.mulf %24, %23 : vector<8x64xf32>
    %26 = arith.mulf %13, %25 : vector<8x64xf32>
    %c0_13 = arith.constant 0 : index
    %c0_14 = arith.constant 0 : index
    %27 = vector.load %arg27[%c0_13, %c0_14] : memref<8x32xf32, #tpu.memory_space<vmem>>, vector<8x32xf32>
    %28 = arith.truncf %26 : vector<8x64xf32> to vector<8x64xbf16>
    %c0_15 = arith.constant 0 : index
    %c0_16 = arith.constant 0 : index
    %29 = vector.load %arg17[%c0_15, %c0_16] : memref<64x32xbf16, #tpu.memory_space<vmem>>, vector<64x32xbf16>
    %cst_17 = arith.constant dense<0.000000e+00> : vector<8x32xf32>
    %30 = tpu.matmul %28, %29, %cst_17 {dimension_numbers = #tpu.dot_dimension_numbers<[1], [0], [0], [1], [0, 0, 1, 1], [], []>} : vector<8x64xbf16>, vector<64x32xbf16>, vector<8x32xf32> -> vector<8x32xf32>
    %31 = arith.addf %27, %30 : vector<8x32xf32>
    %c0_18 = arith.constant 0 : index
    %c0_19 = arith.constant 0 : index
    %32 = vector.load %arg27[%c0_18, %c0_19] : memref<8x32xf32, #tpu.memory_space<vmem>>, vector<8x32xf32>
    tpu.vector_store %arg27[%c0_18, %c0_19], %31 {strides = array<i32>} : memref<8x32xf32, #tpu.memory_space<vmem>>, vector<8x32xf32>,
    %c0_i32_20 = arith.constant 0 : i32
    %33 = arith.cmpi eq, %arg2, %c0_i32_20 : i32
    %34 = arith.extui %33 : i1 to i32
    %c0_i32_21 = arith.constant 0 : i32
    %35 = arith.cmpi ne, %34, %c0_i32_21 : i32
    scf.if %35 {
      %c0_22 = arith.constant 0 : index
      %c0_23 = arith.constant 0 : index
      %36 = vector.load %arg25[%c0_22, %c0_23] : memref<8x32xf32, #tpu.memory_space<vmem>>, vector<8x32xf32>
      %c0_24 = arith.constant 0 : index
      %c0_25 = arith.constant 0 : index
      %37 = vector.load %arg27[%c0_24, %c0_25] : memref<8x32xf32, #tpu.memory_space<vmem>>, vector<8x32xf32>
      %38 = arith.addf %36, %37 : vector<8x32xf32>
      %c0_26 = arith.constant 0 : index
      %c0_27 = arith.constant 0 : index
      %39 = vector.load %arg18[%c0_26, %c0_27] : memref<1x32xf32, #tpu.memory_space<vmem>>, vector<1x32xf32>
      %40 = vector.broadcast %39 : vector<1x32xf32> to vector<8x32xf32>
      %41 = arith.addf %38, %40 : vector<8x32xf32>
      %c0_28 = arith.constant 0 : index
      %c0_29 = arith.constant 0 : index
      %42 = vector.load %arg19[%c0_28, %c0_29] : memref<1x32xf32, #tpu.memory_space<vmem>>, vector<1x32xf32>
      %c0_30 = arith.constant 0 : index
      %c0_31 = arith.constant 0 : index
      %43 = vector.load %arg20[%c0_30, %c0_31] : memref<1x32xf32, #tpu.memory_space<vmem>>, vector<1x32xf32>
      %cst_32 = arith.constant dense<0.000000e+00> : vector<8xf32>
      %44 = vector.multi_reduction <add>, %41, %cst_32 [1] : vector<8x32xf32> to vector<8xf32>
      %45 = vector.shape_cast %44 : vector<8xf32> to vector<8x1xf32>
      %cst_33 = arith.constant 3.200000e+01 : f32
      %46 = vector.broadcast %cst_33 : f32 to vector<8x1xf32>
      %47 = arith.divf %45, %46 : vector<8x1xf32>
      %48 = vector.broadcast %47 : vector<8x1xf32> to vector<8x32xf32>
      %49 = arith.subf %41, %48 : vector<8x32xf32>
      %50 = arith.mulf %49, %49 : vector<8x32xf32>
      %cst_34 = arith.constant dense<0.000000e+00> : vector<8xf32>
      %51 = vector.multi_reduction <add>, %50, %cst_34 [1] : vector<8x32xf32> to vector<8xf32>
      %52 = vector.shape_cast %51 : vector<8xf32> to vector<8x1xf32>
      %cst_35 = arith.constant 3.200000e+01 : f32
      %53 = vector.broadcast %cst_35 : f32 to vector<8x1xf32>
      %54 = arith.divf %52, %53 : vector<8x1xf32>
      %55 = vector.broadcast %47 : vector<8x1xf32> to vector<8x32xf32>
      %56 = arith.subf %41, %55 : vector<8x32xf32>
      %cst_36 = arith.constant 9.99999996E-13 : f32
      %57 = vector.broadcast %cst_36 : f32 to vector<8x1xf32>
      %58 = arith.addf %54, %57 : vector<8x1xf32>
      %59 = math.rsqrt %58 : vector<8x1xf32>
      %60 = vector.broadcast %59 : vector<8x1xf32> to vector<8x32xf32>
      %61 = arith.mulf %56, %60 : vector<8x32xf32>
      %62 = vector.broadcast %42 : vector<1x32xf32> to vector<8x32xf32>
      %63 = arith.mulf %61, %62 : vector<8x32xf32>
      %64 = vector.broadcast %43 : vector<1x32xf32> to vector<8x32xf32>
      %65 = arith.addf %63, %64 : vector<8x32xf32>
      %c0_37 = arith.constant 0 : index
      %c0_38 = arith.constant 0 : index
      %c0_39 = arith.constant 0 : index
      %66 = vector.load %arg21[%c0_37, %c0_38, %c0_39] : memref<1x8x32xf32, #tpu.memory_space<vmem>>, vector<1x8x32xf32>
      %67 = vector.shape_cast %66 : vector<1x8x32xf32> to vector<8x32xf32>
      %68 = vector.shape_cast %65 : vector<8x32xf32> to vector<1x8x32xf32>
      tpu.vector_store %arg21[%c0_37, %c0_38, %c0_39], %68 {strides = array<i32>} : memref<1x8x32xf32, #tpu.memory_space<vmem>>, vector<1x8x32xf32>,
    } else {
    }
    return
  }
  func.func @transform_0(%arg0: i32, %arg1: i32, %arg2: i32) -> (i32, i32, i32) {
    %c0_i32 = arith.constant 0 : i32
    %c0_i32_0 = arith.constant 0 : i32
    %c0_i32_1 = arith.constant 0 : i32
    return %arg0, %c0_i32, %c0_i32_0 : i32, i32, i32
  }
  func.func @transform_1(%arg0: i32, %arg1: i32, %arg2: i32) -> (i32, i32, i32) {
    %c0_i32 = arith.constant 0 : i32
    %c0_i32_0 = arith.constant 0 : i32
    %c0_i32_1 = arith.constant 0 : i32
    return %arg0, %c0_i32, %c0_i32_0 : i32, i32, i32
  }
  func.func @transform_2(%arg0: i32, %arg1: i32, %arg2: i32) -> (i32, i32) {
    %c0_i32 = arith.constant 0 : i32
    %c0_i32_0 = arith.constant 0 : i32
    %c0_i32_1 = arith.constant 0 : i32
    return %c0_i32, %c0_i32_0 : i32, i32
  }
  func.func @transform_3(%arg0: i32, %arg1: i32, %arg2: i32) -> (i32, i32) {
    %c0_i32 = arith.constant 0 : i32
    %c0_i32_0 = arith.constant 0 : i32
    %c0_i32_1 = arith.constant 0 : i32
    return %c0_i32, %c0_i32_0 : i32, i32
  }
  func.func @transform_4(%arg0: i32, %arg1: i32, %arg2: i32) -> (i32, i32) {
    %c0_i32 = arith.constant 0 : i32
    %c0_i32_0 = arith.constant 0 : i32
    %c0_i32_1 = arith.constant 0 : i32
    return %c0_i32, %c0_i32_0 : i32, i32
  }
  func.func @transform_5(%arg0: i32, %arg1: i32, %arg2: i32) -> (i32, i32) {
    %c0_i32 = arith.constant 0 : i32
    %c0_i32_0 = arith.constant 0 : i32
    %c0_i32_1 = arith.constant 0 : i32
    return %c0_i32, %c0_i32_0 : i32, i32
  }
  func.func @transform_6(%arg0: i32, %arg1: i32, %arg2: i32) -> (i32, i32) {
    %c0_i32 = arith.constant 0 : i32
    %c0_i32_0 = arith.constant 0 : i32
    %c0_i32_1 = arith.constant 0 : i32
    return %c0_i32, %c0_i32_0 : i32, i32
  }
  func.func @transform_7(%arg0: i32, %arg1: i32, %arg2: i32) -> (i32, i32) {
    %c0_i32 = arith.constant 0 : i32
    %c0_i32_0 = arith.constant 0 : i32
    %c0_i32_1 = arith.constant 0 : i32
    return %c0_i32, %c0_i32_0 : i32, i32
  }
  func.func @transform_8(%arg0: i32, %arg1: i32, %arg2: i32) -> (i32, i32) {
    %c0_i32 = arith.constant 0 : i32
    %c0_i32_0 = arith.constant 0 : i32
    %c0_i32_1 = arith.constant 0 : i32
    return %c0_i32, %c0_i32_0 : i32, i32
  }
  func.func @transform_9(%arg0: i32, %arg1: i32, %arg2: i32) -> (i32, i32) {
    %c0_i32 = arith.constant 0 : i32
    %c0_i32_0 = arith.constant 0 : i32
    %c0_i32_1 = arith.constant 0 : i32
    return %c0_i32, %c0_i32_0 : i32, i32
  }
  func.func @transform_10(%arg0: i32, %arg1: i32, %arg2: i32) -> (i32, i32) {
    %c0_i32 = arith.constant 0 : i32
    %c0_i32_0 = arith.constant 0 : i32
    %c0_i32_1 = arith.constant 0 : i32
    return %c0_i32, %c0_i32_0 : i32, i32
  }
  func.func @transform_11(%arg0: i32, %arg1: i32, %arg2: i32) -> (i32, i32) {
    %c0_i32 = arith.constant 0 : i32
    %c0_i32_0 = arith.constant 0 : i32
    %c0_i32_1 = arith.constant 0 : i32
    return %c0_i32, %c0_i32_0 : i32, i32
  }
  func.func @transform_12(%arg0: i32, %arg1: i32, %arg2: i32) -> (i32, i32) {
    %c0_i32 = arith.constant 0 : i32
    %c0_i32_0 = arith.constant 0 : i32
    %c0_i32_1 = arith.constant 0 : i32
    return %c0_i32, %c0_i32_0 : i32, i32
  }
  func.func @transform_13(%arg0: i32, %arg1: i32, %arg2: i32) -> (i32, i32) {
    %c0_i32 = arith.constant 0 : i32
    %c0_i32_0 = arith.constant 0 : i32
    %c0_i32_1 = arith.constant 0 : i32
    return %c0_i32, %c0_i32_0 : i32, i32
  }
  func.func @transform_14(%arg0: i32, %arg1: i32, %arg2: i32) -> (i32, i32) {
    %c0_i32 = arith.constant 0 : i32
    %c0_i32_0 = arith.constant 0 : i32
    %c0_i32_1 = arith.constant 0 : i32
    return %c0_i32, %c0_i32_0 : i32, i32
  }
  func.func @transform_15(%arg0: i32, %arg1: i32, %arg2: i32) -> (i32, i32) {
    %c0_i32 = arith.constant 0 : i32
    %c0_i32_0 = arith.constant 0 : i32
    %c0_i32_1 = arith.constant 0 : i32
    return %c0_i32, %c0_i32_0 : i32, i32
  }
  func.func @transform_16(%arg0: i32, %arg1: i32, %arg2: i32) -> (i32, i32) {
    %c0_i32 = arith.constant 0 : i32
    %c0_i32_0 = arith.constant 0 : i32
    %c0_i32_1 = arith.constant 0 : i32
    return %c0_i32, %c0_i32_0 : i32, i32
  }
  func.func @transform_17(%arg0: i32, %arg1: i32, %arg2: i32) -> (i32, i32) {
    %c0_i32 = arith.constant 0 : i32
    %c0_i32_0 = arith.constant 0 : i32
    %c0_i32_1 = arith.constant 0 : i32
    return %c0_i32, %c0_i32_0 : i32, i32
  }
  func.func @transform_18(%arg0: i32, %arg1: i32, %arg2: i32) -> (i32, i32, i32) {
    %c0_i32 = arith.constant 0 : i32
    %c0_i32_0 = arith.constant 0 : i32
    return %arg0, %arg1, %c0_i32 : i32, i32, i32
  }
  func.func @transform_19(%arg0: i32, %arg1: i32, %arg2: i32) -> (i32, i32, i32, i32) {
    %c0_i32 = arith.constant 0 : i32
    %c0_i32_0 = arith.constant 0 : i32
    %c0_i32_1 = arith.constant 0 : i32
    return %arg0, %c0_i32, %arg1, %c0_i32_0 : i32, i32, i32, i32
  }
}

module attributes {stable_mosaic.version = 11 : i64} {
  func.func @kernel(%arg0: i32, %arg1: i32, %arg2: i32, %arg3: memref<1x8x32xf32, #tpu.memory_space<vmem>>, %arg4: memref<1x1x8xf32, #tpu.memory_space<vmem>>, %arg5: memref<32x32xbf16, #tpu.memory_space<vmem>>, %arg6: memref<1x32xf32, #tpu.memory_space<vmem>>, %arg7: memref<32x32xbf16, #tpu.memory_space<vmem>>, %arg8: memref<1x32xf32, #tpu.memory_space<vmem>>, %arg9: memref<32x32xbf16, #tpu.memory_space<vmem>>, %arg10: memref<1x32xf32, #tpu.memory_space<vmem>>, %arg11: memref<32x32xbf16, #tpu.memory_space<vmem>>, %arg12: memref<1x32xf32, #tpu.memory_space<vmem>>, %arg13: memref<1x32xf32, #tpu.memory_space<vmem>>, %arg14: memref<1x32xf32, #tpu.memory_space<vmem>>, %arg15: memref<32x64xbf16, #tpu.memory_space<vmem>>, %arg16: memref<1x64xf32, #tpu.memory_space<vmem>>, %arg17: memref<64x32xbf16, #tpu.memory_space<vmem>>, %arg18: memref<1x32xf32, #tpu.memory_space<vmem>>, %arg19: memref<1x32xf32, #tpu.memory_space<vmem>>, %arg20: memref<1x32xf32, #tpu.memory_space<vmem>>, %arg21: memref<1x8x32xf32, #tpu.memory_space<vmem>>, %arg22: memref<1x4x8x8xbf16, #tpu.memory_space<vmem>>, %arg23: memref<8x32xbf16, #tpu.memory_space<vmem>>, %arg24: memref<8x32xbf16, #tpu.memory_space<vmem>>, %arg25: memref<8x32xf32, #tpu.memory_space<vmem>>, %arg26: memref<8x32xbf16, #tpu.memory_space<vmem>>, %arg27: memref<8x32xf32, #tpu.memory_space<vmem>>, %arg28: memref<8x32xbf16, #tpu.memory_space<vmem>>) attributes {dimension_semantics = [#tpu.dimension_semantics<parallel>, #tpu.dimension_semantics<arbitrary>, #tpu.dimension_semantics<arbitrary>], iteration_bounds = array<i64: 2, 1, 1>, scalar_prefetch = 0 : i64, scratch_operands = 6 : i64, tpu.core_type = #tpu.core_type<tc>, window_params = [{transform_indices = @transform_0, window_bounds = array<i64: 1, 8, 32>}, {transform_indices = @transform_1, window_bounds = array<i64: 1, 1, 8>}, {pipeline_mode = #tpu.pipeline_mode<synchronous>, transform_indices = @transform_2, window_bounds = array<i64: 32, 32>}, {pipeline_mode = #tpu.pipeline_mode<synchronous>, transform_indices = @transform_3, window_bounds = array<i64: 1, 32>}, {pipeline_mode = #tpu.pipeline_mode<synchronous>, transform_indices = @transform_4, window_bounds = array<i64: 32, 32>}, {pipeline_mode = #tpu.pipeline_mode<synchronous>, transform_indices = @transform_5, window_bounds = array<i64: 1, 32>}, {pipeline_mode = #tpu.pipeline_mode<synchronous>, transform_indices = @transform_6, window_bounds = array<i64: 32, 32>}, {pipeline_mode = #tpu.pipeline_mode<synchronous>, transform_indices = @transform_7, window_bounds = array<i64: 1, 32>}, {pipeline_mode = #tpu.pipeline_mode<synchronous>, transform_indices = @transform_8, window_bounds = array<i64: 32, 32>}, {pipeline_mode = #tpu.pipeline_mode<synchronous>, transform_indices = @transform_9, window_bounds = array<i64: 1, 32>}, {pipeline_mode = #tpu.pipeline_mode<synchronous>, transform_indices = @transform_10, window_bounds = array<i64: 1, 32>}, {pipeline_mode = #tpu.pipeline_mode<synchronous>, transform_indices = @transform_11, window_bounds = array<i64: 1, 32>}, {pipeline_mode = #tpu.pipeline_mode<synchronous>, transform_indices = @transform_12, window_bounds = array<i64: 32, 64>}, {pipeline_mode = #tpu.pipeline_mode<synchronous>, transform_indices = @transform_13, window_bounds = array<i64: 1, 64>}, {pipeline_mode = #tpu.pipeline_mode<synchronous>, transform_indices = @transform_14, window_bounds = array<i64: 64, 32>}, {pipeline_mode = #tpu.pipeline_mode<synchronous>, transform_indices = @transform_15, window_bounds = array<i64: 1, 32>}, {pipeline_mode = #tpu.pipeline_mode<synchronous>, transform_indices = @transform_16, window_bounds = array<i64: 1, 32>}, {pipeline_mode = #tpu.pipeline_mode<synchronous>, transform_indices = @transform_17, window_bounds = array<i64: 1, 32>}, {transform_indices = @transform_18, window_bounds = array<i64: 1, 8, 32>}, {transform_indices = @transform_19, window_bounds = array<i64: 1, 4, 8, 8>}]} {
    %c0_i32 = arith.constant 0 : i32
    %0 = arith.cmpi eq, %arg1, %c0_i32 : i32
    %c0_i32_0 = arith.constant 0 : i32
    %1 = arith.cmpi eq, %arg2, %c0_i32_0 : i32
    %2 = arith.andi %0, %1 : i1
    %3 = arith.extui %2 : i1 to i32
    %c0_i32_1 = arith.constant 0 : i32
    %4 = arith.cmpi ne, %3, %c0_i32_1 : i32
    scf.if %4 {
      %c0_22 = arith.constant 0 : index
      %c0_23 = arith.constant 0 : index
      %c0_24 = arith.constant 0 : index
      %36 = vector.load %arg3[%c0_22, %c0_23, %c0_24] : memref<1x8x32xf32, #tpu.memory_space<vmem>>, vector<1x8x32xf32>
      %37 = vector.shape_cast %36 : vector<1x8x32xf32> to vector<8x32xf32>
      %38 = arith.truncf %37 : vector<8x32xf32> to vector<8x32xbf16>
      %c0_25 = arith.constant 0 : index
      %c0_26 = arith.constant 0 : index
      %39 = vector.load %arg7[%c0_25, %c0_26] : memref<32x32xbf16, #tpu.memory_space<vmem>>, vector<32x32xbf16>
      %cst_27 = arith.constant dense<0.000000e+00> : vector<8x32xf32>
      %40 = tpu.matmul %38, %39, %cst_27 {dimension_numbers = #tpu.dot_dimension_numbers<[1], [0], [0], [1], [0, 0, 1, 1], [], []>} : vector<8x32xbf16>, vector<32x32xbf16>, vector<8x32xf32> -> vector<8x32xf32>
      %c0_28 = arith.constant 0 : index
      %c0_29 = arith.constant 0 : index
      %41 = vector.load %arg8[%c0_28, %c0_29] : memref<1x32xf32, #tpu.memory_space<vmem>>, vector<1x32xf32>
      %42 = vector.broadcast %41 : vector<1x32xf32> to vector<8x32xf32>
      %43 = arith.addf %40, %42 : vector<8x32xf32>
      %c0_30 = arith.constant 0 : index
      %c0_31 = arith.constant 0 : index
      %44 = vector.load %arg9[%c0_30, %c0_31] : memref<32x32xbf16, #tpu.memory_space<vmem>>, vector<32x32xbf16>
      %cst_32 = arith.constant dense<0.000000e+00> : vector<8x32xf32>
      %45 = tpu.matmul %38, %44, %cst_32 {dimension_numbers = #tpu.dot_dimension_numbers<[1], [0], [0], [1], [0, 0, 1, 1], [], []>} : vector<8x32xbf16>, vector<32x32xbf16>, vector<8x32xf32> -> vector<8x32xf32>
      %c0_33 = arith.constant 0 : index
      %c0_34 = arith.constant 0 : index
      %46 = vector.load %arg10[%c0_33, %c0_34] : memref<1x32xf32, #tpu.memory_space<vmem>>, vector<1x32xf32>
      %47 = vector.broadcast %46 : vector<1x32xf32> to vector<8x32xf32>
      %48 = arith.addf %45, %47 : vector<8x32xf32>
      %49 = arith.truncf %43 : vector<8x32xf32> to vector<8x32xbf16>
      %c0_35 = arith.constant 0 : index
      %c0_36 = arith.constant 0 : index
      %50 = vector.load %arg23[%c0_35, %c0_36] : memref<8x32xbf16, #tpu.memory_space<vmem>>, vector<8x32xbf16>
      tpu.vector_store %arg23[%c0_35, %c0_36], %49 {strides = array<i32>} : memref<8x32xbf16, #tpu.memory_space<vmem>>, vector<8x32xbf16>,
      %51 = arith.truncf %48 : vector<8x32xf32> to vector<8x32xbf16>
      %c0_37 = arith.constant 0 : index
      %c0_38 = arith.constant 0 : index
      %52 = vector.load %arg24[%c0_37, %c0_38] : memref<8x32xbf16, #tpu.memory_space<vmem>>, vector<8x32xbf16>
      tpu.vector_store %arg24[%c0_37, %c0_38], %51 {strides = array<i32>} : memref<8x32xbf16, #tpu.memory_space<vmem>>, vector<8x32xbf16>,
    } else {
    }
    %c0_i32_2 = arith.constant 0 : i32
    %5 = arith.cmpi eq, %arg2, %c0_i32_2 : i32
    %6 = arith.extui %5 : i1 to i32
    %c0_i32_3 = arith.constant 0 : i32
    %7 = arith.cmpi ne, %6, %c0_i32_3 : i32
    scf.if %7 {
      %c8_i32 = arith.constant 8 : i32
      %36 = arith.muli %arg1, %c8_i32 : i32
      %37 = tpu.assume_multiple %36, 8 : i32
      %c0_22 = arith.constant 0 : index
      %38 = arith.index_cast %37 : i32 to index
      %c0_23 = arith.constant 0 : index
      %39 = vector.load %arg3[%c0_22, %38, %c0_23] : memref<1x8x32xf32, #tpu.memory_space<vmem>>, vector<1x8x32xf32>
      %40 = vector.shape_cast %39 : vector<1x8x32xf32> to vector<8x32xf32>
      %41 = arith.truncf %40 : vector<8x32xf32> to vector<8x32xbf16>
      %c0_24 = arith.constant 0 : index
      %c0_25 = arith.constant 0 : index
      %c0_26 = arith.constant 0 : index
      %42 = vector.load %arg4[%c0_24, %c0_25, %c0_26] : memref<1x1x8xf32, #tpu.memory_space<vmem>>, vector<1x1x8xf32>
      %43 = vector.shape_cast %42 : vector<1x1x8xf32> to vector<1x8xf32>
      %c0_27 = arith.constant 0 : index
      %c0_28 = arith.constant 0 : index
      %44 = vector.load %arg5[%c0_27, %c0_28] : memref<32x32xbf16, #tpu.memory_space<vmem>>, vector<32x32xbf16>
      %cst_29 = arith.constant dense<0.000000e+00> : vector<8x32xf32>
      %45 = tpu.matmul %41, %44, %cst_29 {dimension_numbers = #tpu.dot_dimension_numbers<[1], [0], [0], [1], [0, 0, 1, 1], [], []>} : vector<8x32xbf16>, vector<32x32xbf16>, vector<8x32xf32> -> vector<8x32xf32>
      %c0_30 = arith.constant 0 : index
      %c0_31 = arith.constant 0 : index
      %46 = vector.load %arg6[%c0_30, %c0_31] : memref<1x32xf32, #tpu.memory_space<vmem>>, vector<1x32xf32>
      %47 = vector.broadcast %46 : vector<1x32xf32> to vector<8x32xf32>
      %48 = arith.addf %45, %47 : vector<8x32xf32>
      %cst_32 = arith.constant 0.353553385 : f32
      %49 = vector.broadcast %cst_32 : f32 to vector<8x32xf32>
      %50 = arith.mulf %48, %49 : vector<8x32xf32>
      %51 = arith.truncf %50 : vector<8x32xf32> to vector<8x32xbf16>
      %c0_33 = arith.constant 0 : index
      %c0_34 = arith.constant 0 : index
      %52 = vector.load %arg23[%c0_33, %c0_34] : memref<8x32xbf16, #tpu.memory_space<vmem>>, vector<8x32xbf16>
      %c0_35 = arith.constant 0 : index
      %c0_36 = arith.constant 0 : index
      %53 = vector.load %arg24[%c0_35, %c0_36] : memref<8x32xbf16, #tpu.memory_space<vmem>>, vector<8x32xbf16>
      %54 = vector.extract_strided_slice %51 {offsets = [0, 0], sizes = [8, 8], strides = [1, 1]} : vector<8x32xbf16> to vector<8x8xbf16>
      %55 = vector.extract_strided_slice %52 {offsets = [0, 0], sizes = [8, 8], strides = [1, 1]} : vector<8x32xbf16> to vector<8x8xbf16>
      %cst_37 = arith.constant dense<0.000000e+00> : vector<8x8xf32>
      %56 = tpu.matmul %54, %55, %cst_37 {dimension_numbers = #tpu.dot_dimension_numbers<[1], [1], [0], [0], [0, 0, 1, 0], [], []>} : vector<8x8xbf16>, vector<8x8xbf16>, vector<8x8xf32> -> vector<8x8xf32>
      %57 = vector.broadcast %43 : vector<1x8xf32> to vector<8x8xf32>
      %58 = arith.addf %56, %57 : vector<8x8xf32>
      %cst_38 = arith.constant dense<0xFF800000> : vector<8xf32>
      %59 = vector.multi_reduction <maximumf>, %58, %cst_38 [1] : vector<8x8xf32> to vector<8xf32>
      %60 = vector.shape_cast %59 : vector<8xf32> to vector<8x1xf32>
      %61 = vector.broadcast %60 : vector<8x1xf32> to vector<8x8xf32>
      %62 = arith.subf %58, %61 : vector<8x8xf32>
      %63 = math.exp %62 : vector<8x8xf32>
      %cst_39 = arith.constant dense<0.000000e+00> : vector<8xf32>
      %64 = vector.multi_reduction <add>, %63, %cst_39 [1] : vector<8x8xf32> to vector<8xf32>
      %65 = vector.shape_cast %64 : vector<8xf32> to vector<8x1xf32>
      %66 = tpu.reciprocal %65 {approx = true} : vector<8x1xf32> -> vector<8x1xf32>
      %67 = vector.broadcast %66 : vector<8x1xf32> to vector<8x8xf32>
      %68 = arith.mulf %63, %67 : vector<8x8xf32>
      %69 = arith.truncf %68 : vector<8x8xf32> to vector<8x8xbf16>
      %c0_40 = arith.constant 0 : index
      %c0_41 = arith.constant 0 : index
      %c0_42 = arith.constant 0 : index
      %c0_43 = arith.constant 0 : index
      %70 = vector.load %arg22[%c0_40, %c0_41, %c0_42, %c0_43] : memref<1x4x8x8xbf16, #tpu.memory_space<vmem>>, vector<1x1x8x8xbf16>
      %71 = vector.shape_cast %70 : vector<1x1x8x8xbf16> to vector<8x8xbf16>
      %72 = vector.shape_cast %69 : vector<8x8xbf16> to vector<1x1x8x8xbf16>
      tpu.vector_store %arg22[%c0_40, %c0_41, %c0_42, %c0_43], %72 {strides = array<i32>} : memref<1x4x8x8xbf16, #tpu.memory_space<vmem>>, vector<1x1x8x8xbf16>,
      %73 = arith.truncf %68 : vector<8x8xf32> to vector<8x8xbf16>
      %74 = vector.extract_strided_slice %53 {offsets = [0, 0], sizes = [8, 8], strides = [1, 1]} : vector<8x32xbf16> to vector<8x8xbf16>
      %cst_44 = arith.constant dense<0.000000e+00> : vector<8x8xf32>
      %75 = tpu.matmul %73, %74, %cst_44 {dimension_numbers = #tpu.dot_dimension_numbers<[1], [0], [0], [1], [0, 0, 1, 1], [], []>} : vector<8x8xbf16>, vector<8x8xbf16>, vector<8x8xf32> -> vector<8x8xf32>
      %76 = arith.truncf %75 : vector<8x8xf32> to vector<8x8xbf16>
      %c0_45 = arith.constant 0 : index
      %c0_46 = arith.constant 0 : index
      %77 = vector.load %arg28[%c0_45, %c0_46] : memref<8x32xbf16, #tpu.memory_space<vmem>>, vector<8x8xbf16>
      tpu.vector_store %arg28[%c0_45, %c0_46], %76 {strides = array<i32>} : memref<8x32xbf16, #tpu.memory_space<vmem>>, vector<8x8xbf16>,
      %78 = vector.extract_strided_slice %51 {offsets = [0, 8], sizes = [8, 8], strides = [1, 1]} : vector<8x32xbf16> to vector<8x8xbf16>
      %79 = vector.extract_strided_slice %52 {offsets = [0, 8], sizes = [8, 8], strides = [1, 1]} : vector<8x32xbf16> to vector<8x8xbf16>
      %cst_47 = arith.constant dense<0.000000e+00> : vector<8x8xf32>
      %80 = tpu.matmul %78, %79, %cst_47 {dimension_numbers = #tpu.dot_dimension_numbers<[1], [1], [0], [0], [0, 0, 1, 0], [], []>} : vector<8x8xbf16>, vector<8x8xbf16>, vector<8x8xf32> -> vector<8x8xf32>
      %81 = vector.broadcast %43 : vector<1x8xf32> to vector<8x8xf32>
      %82 = arith.addf %80, %81 : vector<8x8xf32>
      %cst_48 = arith.constant dense<0xFF800000> : vector<8xf32>
      %83 = vector.multi_reduction <maximumf>, %82, %cst_48 [1] : vector<8x8xf32> to vector<8xf32>
      %84 = vector.shape_cast %83 : vector<8xf32> to vector<8x1xf32>
      %85 = vector.broadcast %84 : vector<8x1xf32> to vector<8x8xf32>
      %86 = arith.subf %82, %85 : vector<8x8xf32>
      %87 = math.exp %86 : vector<8x8xf32>
      %cst_49 = arith.constant dense<0.000000e+00> : vector<8xf32>
      %88 = vector.multi_reduction <add>, %87, %cst_49 [1] : vector<8x8xf32> to vector<8xf32>
      %89 = vector.shape_cast %88 : vector<8xf32> to vector<8x1xf32>
      %90 = tpu.reciprocal %89 {approx = true} : vector<8x1xf32> -> vector<8x1xf32>
      %91 = vector.broadcast %90 : vector<8x1xf32> to vector<8x8xf32>
      %92 = arith.mulf %87, %91 : vector<8x8xf32>
      %93 = arith.truncf %92 : vector<8x8xf32> to vector<8x8xbf16>
      %c0_50 = arith.constant 0 : index
      %c1 = arith.constant 1 : index
      %c0_51 = arith.constant 0 : index
      %c0_52 = arith.constant 0 : index
      %94 = vector.load %arg22[%c0_50, %c1, %c0_51, %c0_52] : memref<1x4x8x8xbf16, #tpu.memory_space<vmem>>, vector<1x1x8x8xbf16>
      %95 = vector.shape_cast %94 : vector<1x1x8x8xbf16> to vector<8x8xbf16>
      %96 = vector.shape_cast %93 : vector<8x8xbf16> to vector<1x1x8x8xbf16>
      tpu.vector_store %arg22[%c0_50, %c1, %c0_51, %c0_52], %96 {strides = array<i32>} : memref<1x4x8x8xbf16, #tpu.memory_space<vmem>>, vector<1x1x8x8xbf16>,
      %97 = arith.truncf %92 : vector<8x8xf32> to vector<8x8xbf16>
      %98 = vector.extract_strided_slice %53 {offsets = [0, 8], sizes = [8, 8], strides = [1, 1]} : vector<8x32xbf16> to vector<8x8xbf16>
      %cst_53 = arith.constant dense<0.000000e+00> : vector<8x8xf32>
      %99 = tpu.matmul %97, %98, %cst_53 {dimension_numbers = #tpu.dot_dimension_numbers<[1], [0], [0], [1], [0, 0, 1, 1], [], []>} : vector<8x8xbf16>, vector<8x8xbf16>, vector<8x8xf32> -> vector<8x8xf32>
      %100 = arith.truncf %99 : vector<8x8xf32> to vector<8x8xbf16>
      %c0_54 = arith.constant 0 : index
      %c8 = arith.constant 8 : index
      %101 = vector.load %arg28[%c0_54, %c8] : memref<8x32xbf16, #tpu.memory_space<vmem>>, vector<8x8xbf16>
      tpu.vector_store %arg28[%c0_54, %c8], %100 {strides = array<i32>} : memref<8x32xbf16, #tpu.memory_space<vmem>>, vector<8x8xbf16>,
      %102 = vector.extract_strided_slice %51 {offsets = [0, 16], sizes = [8, 8], strides = [1, 1]} : vector<8x32xbf16> to vector<8x8xbf16>
      %103 = vector.extract_strided_slice %52 {offsets = [0, 16], sizes = [8, 8], strides = [1, 1]} : vector<8x32xbf16> to vector<8x8xbf16>
      %cst_55 = arith.constant dense<0.000000e+00> : vector<8x8xf32>
      %104 = tpu.matmul %102, %103, %cst_55 {dimension_numbers = #tpu.dot_dimension_numbers<[1], [1], [0], [0], [0, 0, 1, 0], [], []>} : vector<8x8xbf16>, vector<8x8xbf16>, vector<8x8xf32> -> vector<8x8xf32>
      %105 = vector.broadcast %43 : vector<1x8xf32> to vector<8x8xf32>
      %106 = arith.addf %104, %105 : vector<8x8xf32>
      %cst_56 = arith.constant dense<0xFF800000> : vector<8xf32>
      %107 = vector.multi_reduction <maximumf>, %106, %cst_56 [1] : vector<8x8xf32> to vector<8xf32>
      %108 = vector.shape_cast %107 : vector<8xf32> to vector<8x1xf32>
      %109 = vector.broadcast %108 : vector<8x1xf32> to vector<8x8xf32>
      %110 = arith.subf %106, %109 : vector<8x8xf32>
      %111 = math.exp %110 : vector<8x8xf32>
      %cst_57 = arith.constant dense<0.000000e+00> : vector<8xf32>
      %112 = vector.multi_reduction <add>, %111, %cst_57 [1] : vector<8x8xf32> to vector<8xf32>
      %113 = vector.shape_cast %112 : vector<8xf32> to vector<8x1xf32>
      %114 = tpu.reciprocal %113 {approx = true} : vector<8x1xf32> -> vector<8x1xf32>
      %115 = vector.broadcast %114 : vector<8x1xf32> to vector<8x8xf32>
      %116 = arith.mulf %111, %115 : vector<8x8xf32>
      %117 = arith.truncf %116 : vector<8x8xf32> to vector<8x8xbf16>
      %c0_58 = arith.constant 0 : index
      %c2 = arith.constant 2 : index
      %c0_59 = arith.constant 0 : index
      %c0_60 = arith.constant 0 : index
      %118 = vector.load %arg22[%c0_58, %c2, %c0_59, %c0_60] : memref<1x4x8x8xbf16, #tpu.memory_space<vmem>>, vector<1x1x8x8xbf16>
      %119 = vector.shape_cast %118 : vector<1x1x8x8xbf16> to vector<8x8xbf16>
      %120 = vector.shape_cast %117 : vector<8x8xbf16> to vector<1x1x8x8xbf16>
      tpu.vector_store %arg22[%c0_58, %c2, %c0_59, %c0_60], %120 {strides = array<i32>} : memref<1x4x8x8xbf16, #tpu.memory_space<vmem>>, vector<1x1x8x8xbf16>,
      %121 = arith.truncf %116 : vector<8x8xf32> to vector<8x8xbf16>
      %122 = vector.extract_strided_slice %53 {offsets = [0, 16], sizes = [8, 8], strides = [1, 1]} : vector<8x32xbf16> to vector<8x8xbf16>
      %cst_61 = arith.constant dense<0.000000e+00> : vector<8x8xf32>
      %123 = tpu.matmul %121, %122, %cst_61 {dimension_numbers = #tpu.dot_dimension_numbers<[1], [0], [0], [1], [0, 0, 1, 1], [], []>} : vector<8x8xbf16>, vector<8x8xbf16>, vector<8x8xf32> -> vector<8x8xf32>
      %124 = arith.truncf %123 : vector<8x8xf32> to vector<8x8xbf16>
      %c0_62 = arith.constant 0 : index
      %c16 = arith.constant 16 : index
      %125 = vector.load %arg28[%c0_62, %c16] : memref<8x32xbf16, #tpu.memory_space<vmem>>, vector<8x8xbf16>
      tpu.vector_store %arg28[%c0_62, %c16], %124 {strides = array<i32>} : memref<8x32xbf16, #tpu.memory_space<vmem>>, vector<8x8xbf16>,
      %126 = vector.extract_strided_slice %51 {offsets = [0, 24], sizes = [8, 8], strides = [1, 1]} : vector<8x32xbf16> to vector<8x8xbf16>
      %127 = vector.extract_strided_slice %52 {offsets = [0, 24], sizes = [8, 8], strides = [1, 1]} : vector<8x32xbf16> to vector<8x8xbf16>
      %cst_63 = arith.constant dense<0.000000e+00> : vector<8x8xf32>
      %128 = tpu.matmul %126, %127, %cst_63 {dimension_numbers = #tpu.dot_dimension_numbers<[1], [1], [0], [0], [0, 0, 1, 0], [], []>} : vector<8x8xbf16>, vector<8x8xbf16>, vector<8x8xf32> -> vector<8x8xf32>
      %129 = vector.broadcast %43 : vector<1x8xf32> to vector<8x8xf32>
      %130 = arith.addf %128, %129 : vector<8x8xf32>
      %cst_64 = arith.constant dense<0xFF800000> : vector<8xf32>
      %131 = vector.multi_reduction <maximumf>, %130, %cst_64 [1] : vector<8x8xf32> to vector<8xf32>
      %132 = vector.shape_cast %131 : vector<8xf32> to vector<8x1xf32>
      %133 = vector.broadcast %132 : vector<8x1xf32> to vector<8x8xf32>
      %134 = arith.subf %130, %133 : vector<8x8xf32>
      %135 = math.exp %134 : vector<8x8xf32>
      %cst_65 = arith.constant dense<0.000000e+00> : vector<8xf32>
      %136 = vector.multi_reduction <add>, %135, %cst_65 [1] : vector<8x8xf32> to vector<8xf32>
      %137 = vector.shape_cast %136 : vector<8xf32> to vector<8x1xf32>
      %138 = tpu.reciprocal %137 {approx = true} : vector<8x1xf32> -> vector<8x1xf32>
      %139 = vector.broadcast %138 : vector<8x1xf32> to vector<8x8xf32>
      %140 = arith.mulf %135, %139 : vector<8x8xf32>
      %141 = arith.truncf %140 : vector<8x8xf32> to vector<8x8xbf16>
      %c0_66 = arith.constant 0 : index
      %c3 = arith.constant 3 : index
      %c0_67 = arith.constant 0 : index
      %c0_68 = arith.constant 0 : index
      %142 = vector.load %arg22[%c0_66, %c3, %c0_67, %c0_68] : memref<1x4x8x8xbf16, #tpu.memory_space<vmem>>, vector<1x1x8x8xbf16>
      %143 = vector.shape_cast %142 : vector<1x1x8x8xbf16> to vector<8x8xbf16>
      %144 = vector.shape_cast %141 : vector<8x8xbf16> to vector<1x1x8x8xbf16>
      tpu.vector_store %arg22[%c0_66, %c3, %c0_67, %c0_68], %144 {strides = array<i32>} : memref<1x4x8x8xbf16, #tpu.memory_space<vmem>>, vector<1x1x8x8xbf16>,
      %145 = arith.truncf %140 : vector<8x8xf32> to vector<8x8xbf16>
      %146 = vector.extract_strided_slice %53 {offsets = [0, 24], sizes = [8, 8], strides = [1, 1]} : vector<8x32xbf16> to vector<8x8xbf16>
      %cst_69 = arith.constant dense<0.000000e+00> : vector<8x8xf32>
      %147 = tpu.matmul %145, %146, %cst_69 {dimension_numbers = #tpu.dot_dimension_numbers<[1], [0], [0], [1], [0, 0, 1, 1], [], []>} : vector<8x8xbf16>, vector<8x8xbf16>, vector<8x8xf32> -> vector<8x8xf32>
      %148 = arith.truncf %147 : vector<8x8xf32> to vector<8x8xbf16>
      %c0_70 = arith.constant 0 : index
      %c24 = arith.constant 24 : index
      %149 = vector.load %arg28[%c0_70, %c24] : memref<8x32xbf16, #tpu.memory_space<vmem>>, vector<8x8xbf16>
      tpu.vector_store %arg28[%c0_70, %c24], %148 {strides = array<i32>} : memref<8x32xbf16, #tpu.memory_space<vmem>>, vector<8x8xbf16>,
      %c0_71 = arith.constant 0 : index
      %c0_72 = arith.constant 0 : index
      %150 = vector.load %arg28[%c0_71, %c0_72] : memref<8x32xbf16, #tpu.memory_space<vmem>>, vector<8x32xbf16>
      %c0_73 = arith.constant 0 : index
      %c0_74 = arith.constant 0 : index
      %151 = vector.load %arg11[%c0_73, %c0_74] : memref<32x32xbf16, #tpu.memory_space<vmem>>, vector<32x32xbf16>
      %cst_75 = arith.constant dense<0.000000e+00> : vector<8x32xf32>
      %152 = tpu.matmul %150, %151, %cst_75 {dimension_numbers = #tpu.dot_dimension_numbers<[1], [0], [0], [1], [0, 0, 1, 1], [], []>} : vector<8x32xbf16>, vector<32x32xbf16>, vector<8x32xf32> -> vector<8x32xf32>
      %c0_76 = arith.constant 0 : index
      %c0_77 = arith.constant 0 : index
      %153 = vector.load %arg12[%c0_76, %c0_77] : memref<1x32xf32, #tpu.memory_space<vmem>>, vector<1x32xf32>
      %154 = vector.broadcast %153 : vector<1x32xf32> to vector<8x32xf32>
      %155 = arith.addf %152, %154 : vector<8x32xf32>
      %156 = arith.addf %40, %155 : vector<8x32xf32>
      %c0_78 = arith.constant 0 : index
      %c0_79 = arith.constant 0 : index
      %157 = vector.load %arg13[%c0_78, %c0_79] : memref<1x32xf32, #tpu.memory_space<vmem>>, vector<1x32xf32>
      %c0_80 = arith.constant 0 : index
      %c0_81 = arith.constant 0 : index
      %158 = vector.load %arg14[%c0_80, %c0_81] : memref<1x32xf32, #tpu.memory_space<vmem>>, vector<1x32xf32>
      %cst_82 = arith.constant dense<0.000000e+00> : vector<8xf32>
      %159 = vector.multi_reduction <add>, %156, %cst_82 [1] : vector<8x32xf32> to vector<8xf32>
      %160 = vector.shape_cast %159 : vector<8xf32> to vector<8x1xf32>
      %cst_83 = arith.constant 3.200000e+01 : f32
      %161 = vector.broadcast %cst_83 : f32 to vector<8x1xf32>
      %162 = arith.divf %160, %161 : vector<8x1xf32>
      %163 = vector.broadcast %162 : vector<8x1xf32> to vector<8x32xf32>
      %164 = arith.subf %156, %163 : vector<8x32xf32>
      %165 = arith.mulf %164, %164 : vector<8x32xf32>
      %cst_84 = arith.constant dense<0.000000e+00> : vector<8xf32>
      %166 = vector.multi_reduction <add>, %165, %cst_84 [1] : vector<8x32xf32> to vector<8xf32>
      %167 = vector.shape_cast %166 : vector<8xf32> to vector<8x1xf32>
      %cst_85 = arith.constant 3.200000e+01 : f32
      %168 = vector.broadcast %cst_85 : f32 to vector<8x1xf32>
      %169 = arith.divf %167, %168 : vector<8x1xf32>
      %170 = vector.broadcast %162 : vector<8x1xf32> to vector<8x32xf32>
      %171 = arith.subf %156, %170 : vector<8x32xf32>
      %cst_86 = arith.constant 9.99999996E-13 : f32
      %172 = vector.broadcast %cst_86 : f32 to vector<8x1xf32>
      %173 = arith.addf %169, %172 : vector<8x1xf32>
      %174 = math.rsqrt %173 : vector<8x1xf32>
      %175 = vector.broadcast %174 : vector<8x1xf32> to vector<8x32xf32>
      %176 = arith.mulf %171, %175 : vector<8x32xf32>
      %177 = vector.broadcast %157 : vector<1x32xf32> to vector<8x32xf32>
      %178 = arith.mulf %176, %177 : vector<8x32xf32>
      %179 = vector.broadcast %158 : vector<1x32xf32> to vector<8x32xf32>
      %180 = arith.addf %178, %179 : vector<8x32xf32>
      %c0_87 = arith.constant 0 : index
      %c0_88 = arith.constant 0 : index
      %181 = vector.load %arg25[%c0_87, %c0_88] : memref<8x32xf32, #tpu.memory_space<vmem>>, vector<8x32xf32>
      tpu.vector_store %arg25[%c0_87, %c0_88], %180 {strides = array<i32>} : memref<8x32xf32, #tpu.memory_space<vmem>>, vector<8x32xf32>,
      %182 = arith.truncf %180 : vector<8x32xf32> to vector<8x32xbf16>
      %c0_89 = arith.constant 0 : index
      %c0_90 = arith.constant 0 : index
      %183 = vector.load %arg26[%c0_89, %c0_90] : memref<8x32xbf16, #tpu.memory_space<vmem>>, vector<8x32xbf16>
      tpu.vector_store %arg26[%c0_89, %c0_90], %182 {strides = array<i32>} : memref<8x32xbf16, #tpu.memory_space<vmem>>, vector<8x32xbf16>,
      %cst_91 = arith.constant 0.000000e+00 : f32
      %184 = vector.broadcast %cst_91 : f32 to vector<8x32xf32>
      %c0_92 = arith.constant 0 : index
      %c0_93 = arith.constant 0 : index
      %185 = vector.load %arg27[%c0_92, %c0_93] : memref<8x32xf32, #tpu.memory_space<vmem>>, vector<8x32xf32>
      tpu.vector_store %arg27[%c0_92, %c0_93], %184 {strides = array<i32>} : memref<8x32xf32, #tpu.memory_space<vmem>>, vector<8x32xf32>,
    } else {
    }
    %c0 = arith.constant 0 : index
    %c0_4 = arith.constant 0 : index
    %8 = vector.load %arg26[%c0, %c0_4] : memref<8x32xbf16, #tpu.memory_space<vmem>>, vector<8x32xbf16>
    %c0_5 = arith.constant 0 : index
    %c0_6 = arith.constant 0 : index
    %9 = vector.load %arg15[%c0_5, %c0_6] : memref<32x64xbf16, #tpu.memory_space<vmem>>, vector<32x64xbf16>
    %cst = arith.constant dense<0.000000e+00> : vector<8x64xf32>
    %10 = tpu.matmul %8, %9, %cst {dimension_numbers = #tpu.dot_dimension_numbers<[1], [0], [0], [1], [0, 0, 1, 1], [], []>} : vector<8x32xbf16>, vector<32x64xbf16>, vector<8x64xf32> -> vector<8x64xf32>
    %c0_7 = arith.constant 0 : index
    %c0_8 = arith.constant 0 : index
    %11 = vector.load %arg16[%c0_7, %c0_8] : memref<1x64xf32, #tpu.memory_space<vmem>>, vector<1x64xf32>
    %12 = vector.broadcast %11 : vector<1x64xf32> to vector<8x64xf32>
    %13 = arith.addf %10, %12 : vector<8x64xf32>
    %14 = arith.mulf %13, %13 : vector<8x64xf32>
    %15 = arith.mulf %13, %14 : vector<8x64xf32>
    %cst_9 = arith.constant 4.471500e-02 : f32
    %16 = vector.broadcast %cst_9 : f32 to vector<8x64xf32>
    %17 = arith.mulf %16, %15 : vector<8x64xf32>
    %18 = arith.addf %13, %17 : vector<8x64xf32>
    %cst_10 = arith.constant 0.797884583 : f32
    %19 = vector.broadcast %cst_10 : f32 to vector<8x64xf32>
    %20 = arith.mulf %19, %18 : vector<8x64xf32>
    %21 = math.tanh %20 : vector<8x64xf32>
    %cst_11 = arith.constant 1.000000e+00 : f32
    %22 = vector.broadcast %cst_11 : f32 to vector<8x64xf32>
    %23 = arith.addf %22, %21 : vector<8x64xf32>
    %cst_12 = arith.constant 5.000000e-01 : f32
    %24 = vector.broadcast %cst_12 : f32 to vector<8x64xf32>
    %25 = arith.mulf %24, %23 : vector<8x64xf32>
    %26 = arith.mulf %13, %25 : vector<8x64xf32>
    %c0_13 = arith.constant 0 : index
    %c0_14 = arith.constant 0 : index
    %27 = vector.load %arg27[%c0_13, %c0_14] : memref<8x32xf32, #tpu.memory_space<vmem>>, vector<8x32xf32>
    %28 = arith.truncf %26 : vector<8x64xf32> to vector<8x64xbf16>
    %c0_15 = arith.constant 0 : index
    %c0_16 = arith.constant 0 : index
    %29 = vector.load %arg17[%c0_15, %c0_16] : memref<64x32xbf16, #tpu.memory_space<vmem>>, vector<64x32xbf16>
    %cst_17 = arith.constant dense<0.000000e+00> : vector<8x32xf32>
    %30 = tpu.matmul %28, %29, %cst_17 {dimension_numbers = #tpu.dot_dimension_numbers<[1], [0], [0], [1], [0, 0, 1, 1], [], []>} : vector<8x64xbf16>, vector<64x32xbf16>, vector<8x32xf32> -> vector<8x32xf32>
    %31 = arith.addf %27, %30 : vector<8x32xf32>
    %c0_18 = arith.constant 0 : index
    %c0_19 = arith.constant 0 : index
    %32 = vector.load %arg27[%c0_18, %c0_19] : memref<8x32xf32, #tpu.memory_space<vmem>>, vector<8x32xf32>
    tpu.vector_store %arg27[%c0_18, %c0_19], %31 {strides = array<i32>} : memref<8x32xf32, #tpu.memory_space<vmem>>, vector<8x32xf32>,
    %c0_i32_20 = arith.constant 0 : i32
    %33 = arith.cmpi eq, %arg2, %c0_i32_20 : i32
    %34 = arith.extui %33 : i1 to i32
    %c0_i32_21 = arith.constant 0 : i32
    %35 = arith.cmpi ne, %34, %c0_i32_21 : i32
    scf.if %35 {
      %c0_22 = arith.constant 0 : index
      %c0_23 = arith.constant 0 : index
      %36 = vector.load %arg25[%c0_22, %c0_23] : memref<8x32xf32, #tpu.memory_space<vmem>>, vector<8x32xf32>
      %c0_24 = arith.constant 0 : index
      %c0_25 = arith.constant 0 : index
      %37 = vector.load %arg27[%c0_24, %c0_25] : memref<8x32xf32, #tpu.memory_space<vmem>>, vector<8x32xf32>
      %38 = arith.addf %36, %37 : vector<8x32xf32>
      %c0_26 = arith.constant 0 : index
      %c0_27 = arith.constant 0 : index
      %39 = vector.load %arg18[%c0_26, %c0_27] : memref<1x32xf32, #tpu.memory_space<vmem>>, vector<1x32xf32>
      %40 = vector.broadcast %39 : vector<1x32xf32> to vector<8x32xf32>
      %41 = arith.addf %38, %40 : vector<8x32xf32>
      %c0_28 = arith.constant 0 : index
      %c0_29 = arith.constant 0 : index
      %42 = vector.load %arg19[%c0_28, %c0_29] : memref<1x32xf32, #tpu.memory_space<vmem>>, vector<1x32xf32>
      %c0_30 = arith.constant 0 : index
      %c0_31 = arith.constant 0 : index
      %43 = vector.load %arg20[%c0_30, %c0_31] : memref<1x32xf32, #tpu.memory_space<vmem>>, vector<1x32xf32>
      %cst_32 = arith.constant dense<0.000000e+00> : vector<8xf32>
      %44 = vector.multi_reduction <add>, %41, %cst_32 [1] : vector<8x32xf32> to vector<8xf32>
      %45 = vector.shape_cast %44 : vector<8xf32> to vector<8x1xf32>
      %cst_33 = arith.constant 3.200000e+01 : f32
      %46 = vector.broadcast %cst_33 : f32 to vector<8x1xf32>
      %47 = arith.divf %45, %46 : vector<8x1xf32>
      %48 = vector.broadcast %47 : vector<8x1xf32> to vector<8x32xf32>
      %49 = arith.subf %41, %48 : vector<8x32xf32>
      %50 = arith.mulf %49, %49 : vector<8x32xf32>
      %cst_34 = arith.constant dense<0.000000e+00> : vector<8xf32>
      %51 = vector.multi_reduction <add>, %50, %cst_34 [1] : vector<8x32xf32> to vector<8xf32>
      %52 = vector.shape_cast %51 : vector<8xf32> to vector<8x1xf32>
      %cst_35 = arith.constant 3.200000e+01 : f32
      %53 = vector.broadcast %cst_35 : f32 to vector<8x1xf32>
      %54 = arith.divf %52, %53 : vector<8x1xf32>
      %55 = vector.broadcast %47 : vector<8x1xf32> to vector<8x32xf32>
      %56 = arith.subf %41, %55 : vector<8x32xf32>
      %cst_36 = arith.constant 9.99999996E-13 : f32
      %57 = vector.broadcast %cst_36 : f32 to vector<8x1xf32>
      %58 = arith.addf %54, %57 : vector<8x1xf32>
      %59 = math.rsqrt %58 : vector<8x1xf32>
      %60 = vector.broadcast %59 : vector<8x1xf32> to vector<8x32xf32>
      %61 = arith.mulf %56, %60 : vector<8x32xf32>
      %62 = vector.broadcast %42 : vector<1x32xf32> to vector<8x32xf32>
      %63 = arith.mulf %61, %62 : vector<8x32xf32>
      %64 = vector.broadcast %43 : vector<1x32xf32> to vector<8x32xf32>
      %65 = arith.addf %63, %64 : vector<8x32xf32>
      %c0_37 = arith.constant 0 : index
      %c0_38 = arith.constant 0 : index
      %c0_39 = arith.constant 0 : index
      %66 = vector.load %arg21[%c0_37, %c0_38, %c0_39] : memref<1x8x32xf32, #tpu.memory_space<vmem>>, vector<1x8x32xf32>
      %67 = vector.shape_cast %66 : vector<1x8x32xf32> to vector<8x32xf32>
      %68 = vector.shape_cast %65 : vector<8x32xf32> to vector<1x8x32xf32>
      tpu.vector_store %arg21[%c0_37, %c0_38, %c0_39], %68 {strides = array<i32>} : memref<1x8x32xf32, #tpu.memory_space<vmem>>, vector<1x8x32xf32>,
    } else {
    }
    return
  }
  func.func @transform_0(%arg0: i32, %arg1: i32, %arg2: i32) -> (i32, i32, i32) {
    %c0_i32 = arith.constant 0 : i32
    %c0_i32_0 = arith.constant 0 : i32
    %c0_i32_1 = arith.constant 0 : i32
    return %arg0, %c0_i32, %c0_i32_0 : i32, i32, i32
  }
  func.func @transform_1(%arg0: i32, %arg1: i32, %arg2: i32) -> (i32, i32, i32) {
    %c0_i32 = arith.constant 0 : i32
    %c0_i32_0 = arith.constant 0 : i32
    %c0_i32_1 = arith.constant 0 : i32
    return %arg0, %c0_i32, %c0_i32_0 : i32, i32, i32
  }
  func.func @transform_2(%arg0: i32, %arg1: i32, %arg2: i32) -> (i32, i32) {
    %c0_i32 = arith.constant 0 : i32
    %c0_i32_0 = arith.constant 0 : i32
    %c0_i32_1 = arith.constant 0 : i32
    return %c0_i32, %c0_i32_0 : i32, i32
  }
  func.func @transform_3(%arg0: i32, %arg1: i32, %arg2: i32) -> (i32, i32) {
    %c0_i32 = arith.constant 0 : i32
    %c0_i32_0 = arith.constant 0 : i32
    %c0_i32_1 = arith.constant 0 : i32
    return %c0_i32, %c0_i32_0 : i32, i32
  }
  func.func @transform_4(%arg0: i32, %arg1: i32, %arg2: i32) -> (i32, i32) {
    %c0_i32 = arith.constant 0 : i32
    %c0_i32_0 = arith.constant 0 : i32
    %c0_i32_1 = arith.constant 0 : i32
    return %c0_i32, %c0_i32_0 : i32, i32
  }
  func.func @transform_5(%arg0: i32, %arg1: i32, %arg2: i32) -> (i32, i32) {
    %c0_i32 = arith.constant 0 : i32
    %c0_i32_0 = arith.constant 0 : i32
    %c0_i32_1 = arith.constant 0 : i32
    return %c0_i32, %c0_i32_0 : i32, i32
  }
  func.func @transform_6(%arg0: i32, %arg1: i32, %arg2: i32) -> (i32, i32) {
    %c0_i32 = arith.constant 0 : i32
    %c0_i32_0 = arith.constant 0 : i32
    %c0_i32_1 = arith.constant 0 : i32
    return %c0_i32, %c0_i32_0 : i32, i32
  }
  func.func @transform_7(%arg0: i32, %arg1: i32, %arg2: i32) -> (i32, i32) {
    %c0_i32 = arith.constant 0 : i32
    %c0_i32_0 = arith.constant 0 : i32
    %c0_i32_1 = arith.constant 0 : i32
    return %c0_i32, %c0_i32_0 : i32, i32
  }
  func.func @transform_8(%arg0: i32, %arg1: i32, %arg2: i32) -> (i32, i32) {
    %c0_i32 = arith.constant 0 : i32
    %c0_i32_0 = arith.constant 0 : i32
    %c0_i32_1 = arith.constant 0 : i32
    return %c0_i32, %c0_i32_0 : i32, i32
  }
  func.func @transform_9(%arg0: i32, %arg1: i32, %arg2: i32) -> (i32, i32) {
    %c0_i32 = arith.constant 0 : i32
    %c0_i32_0 = arith.constant 0 : i32
    %c0_i32_1 = arith.constant 0 : i32
    return %c0_i32, %c0_i32_0 : i32, i32
  }
  func.func @transform_10(%arg0: i32, %arg1: i32, %arg2: i32) -> (i32, i32) {
    %c0_i32 = arith.constant 0 : i32
    %c0_i32_0 = arith.constant 0 : i32
    %c0_i32_1 = arith.constant 0 : i32
    return %c0_i32, %c0_i32_0 : i32, i32
  }
  func.func @transform_11(%arg0: i32, %arg1: i32, %arg2: i32) -> (i32, i32) {
    %c0_i32 = arith.constant 0 : i32
    %c0_i32_0 = arith.constant 0 : i32
    %c0_i32_1 = arith.constant 0 : i32
    return %c0_i32, %c0_i32_0 : i32, i32
  }
  func.func @transform_12(%arg0: i32, %arg1: i32, %arg2: i32) -> (i32, i32) {
    %c0_i32 = arith.constant 0 : i32
    %c0_i32_0 = arith.constant 0 : i32
    %c0_i32_1 = arith.constant 0 : i32
    return %c0_i32, %c0_i32_0 : i32, i32
  }
  func.func @transform_13(%arg0: i32, %arg1: i32, %arg2: i32) -> (i32, i32) {
    %c0_i32 = arith.constant 0 : i32
    %c0_i32_0 = arith.constant 0 : i32
    %c0_i32_1 = arith.constant 0 : i32
    return %c0_i32, %c0_i32_0 : i32, i32
  }
  func.func @transform_14(%arg0: i32, %arg1: i32, %arg2: i32) -> (i32, i32) {
    %c0_i32 = arith.constant 0 : i32
    %c0_i32_0 = arith.constant 0 : i32
    %c0_i32_1 = arith.constant 0 : i32
    return %c0_i32, %c0_i32_0 : i32, i32
  }
  func.func @transform_15(%arg0: i32, %arg1: i32, %arg2: i32) -> (i32, i32) {
    %c0_i32 = arith.constant 0 : i32
    %c0_i32_0 = arith.constant 0 : i32
    %c0_i32_1 = arith.constant 0 : i32
    return %c0_i32, %c0_i32_0 : i32, i32
  }
  func.func @transform_16(%arg0: i32, %arg1: i32, %arg2: i32) -> (i32, i32) {
    %c0_i32 = arith.constant 0 : i32
    %c0_i32_0 = arith.constant 0 : i32
    %c0_i32_1 = arith.constant 0 : i32
    return %c0_i32, %c0_i32_0 : i32, i32
  }
  func.func @transform_17(%arg0: i32, %arg1: i32, %arg2: i32) -> (i32, i32) {
    %c0_i32 = arith.constant 0 : i32
    %c0_i32_0 = arith.constant 0 : i32
    %c0_i32_1 = arith.constant 0 : i32
    return %c0_i32, %c0_i32_0 : i32, i32
  }
  func.func @transform_18(%arg0: i32, %arg1: i32, %arg2: i32) -> (i32, i32, i32) {
    %c0_i32 = arith.constant 0 : i32
    %c0_i32_0 = arith.constant 0 : i32
    return %arg0, %arg1, %c0_i32 : i32, i32, i32
  }
  func.func @transform_19(%arg0: i32, %arg1: i32, %arg2: i32) -> (i32, i32, i32, i32) {
    %c0_i32 = arith.constant 0 : i32
    %c0_i32_0 = arith.constant 0 : i32
    %c0_i32_1 = arith.constant 0 : i32
    return %arg0, %c0_i32, %arg1, %c0_i32_0 : i32, i32, i32, i32
  }
}

</mosaic_0001>

<llo_original>
// kernel: tpu_custom_call.1
$region0: #{tpu_custom_call.1}
  #allocation0 [shape = 'u32[]', space=smem, size = 0x4, offset = 0x4, fixed_abs, tag = 'smem constant byte address 0x4 - core index']
  #allocation1 [shape = 'u32[72,128]{1,0:T(1,128)}', space=vmem, size = 0x9000, scoped, tag = 'internal scratch']
  #allocation2 [shape = 'bf16[8,32]{1,0:T(8,128)(2,1)}', space=vmem, size = 0x800, scoped, tag = 'scratch operand']
  #allocation3 [shape = 'bf16[8,32]{1,0:T(8,128)(2,1)}', space=vmem, size = 0x800, scoped, tag = 'scratch operand']
  #allocation4 [shape = 'f32[8,32]{1,0:T(8,128)}', space=vmem, size = 0x1000, scoped, tag = 'scratch operand']
  #allocation5 [shape = 'bf16[8,32]{1,0:T(8,128)(2,1)}', space=vmem, size = 0x800, scoped, tag = 'scratch operand']
  #allocation6 [shape = 'f32[8,32]{1,0:T(8,128)}', space=vmem, size = 0x1000, scoped, tag = 'scratch operand']
  #allocation7 [shape = 'bf16[8,32]{1,0:T(8,128)(2,1)}', space=vmem, size = 0x800, scoped, tag = 'scratch operand']
  %s0 = inlined_call_operand.vmem [shape: f32[2,8,32], index: 0, kind: input, shape index: {}]
  %s1 = inlined_call_operand.hbm [shape: f32[2,1,8], index: 1, kind: input, shape index: {}]
  %s2 = inlined_call_operand.vmem [shape: bf16[32,32], index: 2, kind: input, shape index: {}]
  %s3 = inlined_call_operand.vmem [shape: f32[1,32], index: 3, kind: input, shape index: {}]
  %s4 = inlined_call_operand.vmem [shape: bf16[32,32], index: 4, kind: input, shape index: {}]
  %s5 = inlined_call_operand.vmem [shape: f32[1,32], index: 5, kind: input, shape index: {}]
  %s6 = inlined_call_operand.hbm [shape: bf16[32,32], index: 6, kind: input, shape index: {}]
  %s7 = inlined_call_operand.vmem [shape: f32[1,32], index: 7, kind: input, shape index: {}]
  %s8 = inlined_call_operand.hbm [shape: bf16[32,32], index: 8, kind: input, shape index: {}]
  %s9 = inlined_call_operand.vmem [shape: f32[1,32], index: 9, kind: input, shape index: {}]
  %s10 = inlined_call_operand.vmem [shape: f32[1,32], index: 10, kind: input, shape index: {}]
  %s11 = inlined_call_operand.vmem [shape: f32[1,32], index: 11, kind: input, shape index: {}]
  %s12 = inlined_call_operand.hbm [shape: bf16[32,64], index: 12, kind: input, shape index: {}]
  %s13 = inlined_call_operand.vmem [shape: f32[1,64], index: 13, kind: input, shape index: {}]
  %s14 = inlined_call_operand.vmem [shape: bf16[64,32], index: 14, kind: input, shape index: {}]
  %s15 = inlined_call_operand.vmem [shape: f32[1,32], index: 15, kind: input, shape index: {}]
  %s16 = inlined_call_operand.vmem [shape: f32[1,32], index: 16, kind: input, shape index: {}]
  %s17 = inlined_call_operand.vmem [shape: f32[1,32], index: 17, kind: input, shape index: {}]
  %s18 = inlined_call_operand.hbm [shape: f32[2,8,32], index: 18, kind: output, shape index: {0}]
  %s19 = inlined_call_operand.hbm [shape: bf16[2,4,8,8], index: 19, kind: output, shape index: {1}]
  %20 = xla_tuple %s18, %s19
  %s21 = sld [smem:[#allocation0]]
  $region141: #{tpu_custom_call.1} parent=0
    _
  %s23 = ssub.s32 1, %s21
  %s24 = scalar_select 0, %s23, %s21
  $region1: #{tpu_custom_call.1} parent=0
    #allocation8 [shape = 'u8[1024]{0}', space=vmem, size = 0x400, scoped, tag = 'input window, operand 1']
    #allocation9 [shape = 's32[2]{0}', space=sflag, size = 0x8, scoped, tag = 'scoped memory for tpu_custom_call.1']
    #allocation10 [shape = 's32[2]{0}', space=sflag, size = 0x8, scoped, tag = 'scoped memory for tpu_custom_call.1']
    #allocation11 [shape = 'u8[8192]{0}', space=vmem, size = 0x2000, scoped, tag = 'input window, operand 6, single buffered']
    #allocation12 [shape = 's32[1]{0}', space=sflag, size = 0x4, scoped, tag = 'scoped memory for tpu_custom_call.1']
    #allocation13 [shape = 'u8[8192]{0}', space=vmem, size = 0x2000, scoped, tag = 'input window, operand 8, single buffered']
    #allocation14 [shape = 'u8[8192]{0}', space=vmem, size = 0x2000, scoped, tag = 'input window, operand 12, single buffered']
    #allocation15 [shape = 's32[1]{0}', space=sflag, size = 0x4, scoped, tag = 'scoped memory for tpu_custom_call.1']
    #allocation16 [shape = 'u8[8192]{0}', space=vmem, size = 0x2000, scoped, tag = 'output window, operand 0']
    #allocation17 [shape = 'u8[16384]{0}', space=vmem, size = 0x4000, scoped, tag = 'output window, operand 1']
    #allocation18 [shape = 's32[2]{0}', space=sflag, size = 0x8, scoped, tag = 'scoped memory for tpu_custom_call.1']
    %25 = vsyncpa [#allocation9], 0
    %s26 = scalar_lea.sflag [#allocation9], 1
    %27 = vsyncpa %s26, 0
    %28 = vsyncpa [#allocation12], 0
    %29 = vsyncpa [#allocation15], 0
    %30 = vsyncpa [#allocation10], 0
    %s31 = scalar_lea.sflag [#allocation10], 1
    %32 = vsyncpa %s31, 0
    %33 = vsyncpa [#allocation18], 0
    %s34 = scalar_lea.sflag [#allocation18], 1
    %35 = vsyncpa %s34, 0
    loop: start=0, step=1, limit=4
    $region2: #{tpu_custom_call.1} parent=1 // loop_pre_header
      _
    $region3: #{tpu_custom_call.1} parent=1 // loop_header
      %s37 = sphi 0, %s41
      %p38 = scmp.ge.s32.totalorder %s37, 4
      %s44 = sphi 0, %s63
      %s45 = sphi 0, %s59
      %s46 = sphi 0, %s55
      %s47 = sphi 0, %s44
      %s48 = sphi 0, %s45
      %s49 = sphi 0, %s46
      %s50 = sphi 0, %s47
      %s51 = sphi 0, %s48
      %s52 = sphi 0, %s49
      %s66 = sphi 0, %s68
      %s69 = sphi 0, %s66
      %s70 = sphi 0, %s69
      %s86 = sphi 0, %s70
      %s92 = sphi 0, %s94
      %s95 = sphi 0, %s92
      %s96 = sphi 0, %s95
      %s112 = sphi 0, %s96
      %s116 = sphi 0, %s116
      %s118 = sphi 0, %s116
      %s119 = sphi 0, %s118
      %s133 = sphi 0, %s119
      %s137 = sphi 0, %s137
      %s139 = sphi 0, %s137
      %s140 = sphi 0, %s139
      %s154 = sphi 0, %s140
      %s158 = sphi 0, %s158
      %s160 = sphi 0, %s158
      %s161 = sphi 0, %s160
      %s175 = sphi 0, %s161
      %s179 = sphi 0, %s179
      %s181 = sphi 0, %s179
      %s182 = sphi 0, %s181
      %s196 = sphi 0, %s182
      %s200 = sphi 0, %s200
      %s202 = sphi 0, %s200
      %s203 = sphi 0, %s202
      %s217 = sphi 0, %s203
      %s221 = sphi 0, %s221
      %s223 = sphi 0, %s221
      %s224 = sphi 0, %s223
      %s238 = sphi 0, %s224
      %s242 = sphi 0, %s242
      %s244 = sphi 0, %s242
      %s245 = sphi 0, %s244
      %s259 = sphi 0, %s245
      %s263 = sphi 0, %s263
      %s265 = sphi 0, %s263
      %s266 = sphi 0, %s265
      %s280 = sphi 0, %s266
      %s284 = sphi 0, %s284
      %s286 = sphi 0, %s284
      %s287 = sphi 0, %s286
      %s301 = sphi 0, %s287
      %s305 = sphi 0, %s305
      %s307 = sphi 0, %s305
      %s308 = sphi 0, %s307
      %s322 = sphi 0, %s308
      %s326 = sphi 0, %s326
      %s328 = sphi 0, %s326
      %s329 = sphi 0, %s328
      %s343 = sphi 0, %s329
      %s347 = sphi 0, %s347
      %s349 = sphi 0, %s347
      %s350 = sphi 0, %s349
      %s364 = sphi 0, %s350
      %s368 = sphi 0, %s368
      %s370 = sphi 0, %s368
      %s371 = sphi 0, %s370
      %s385 = sphi 0, %s371
      %s389 = sphi 0, %s389
      %s391 = sphi 0, %s389
      %s392 = sphi 0, %s391
      %s406 = sphi 0, %s392
      %s410 = sphi 0, %s410
      %s412 = sphi 0, %s410
      %s413 = sphi 0, %s412
      %s427 = sphi 0, %s413
      %s431 = sphi 0, %s431
      %s433 = sphi 0, %s431
      %s434 = sphi 0, %s433
      %s448 = sphi 0, %s434
      %s456 = sphi 0, %s458
      %s459 = sphi 0, %s456
      %s460 = sphi 0, %s459
      %s476 = sphi 0, %s460
      %s484 = sphi 0, %s486
      %s487 = sphi 0, %s484
      %s488 = sphi 0, %s487
      %s504 = sphi 0, %s488
    $region4: #{tpu_custom_call.1} parent=1 // loop_header_branch
      %40 = sbr.rel (%p38) target = $region8
    $region5: #{tpu_custom_call.1} parent=1 // loop_body
      %s42 = ssub.s32 %s37, 1
      %s43 = ssub.s32 %s37, 2
      %s53 = sadd.s32 1, %s46
      %p54 = scmp.ge.s32.totalorder %s53, 1
      %s55 = scalar_select %p54, 0, %s53
      %s56 = sadd.s32 1, %s45
      %s57 = scalar_select %p54, %s56, %s45
      %p58 = scmp.ge.s32.totalorder %s57, 1
      %s59 = scalar_select %p58, 0, %s57
      %s60 = sadd.s32 1, %s44
      %s61 = scalar_select %p58, %s60, %s44
      %p62 = scmp.ge.s32.totalorder %s61, 2
      %s63 = scalar_select %p62, 0, %s61
      %s64 = ssub.s32 %s44, %s63
      %p65 = scmp.eq.s32.totalorder %s64, 0
      %s67 = sadd.s32 %s66, 1
      %s68 = scalar_select %p65, %s66, %s67
      %p71 = pneg %p65
      %p72 = scmp.eq.s32.totalorder %s37, 1
      %p73 = por %p71, %p72
      %p74 = scmp.ne.s32.totalorder %s66, %s69
      %p75 = scmp.eq.s32.totalorder %s37, 0
      %p76 = por %p74, %p75
      %p77 = scmp.ne.s32.totalorder %s66, %s69
      %p78 = scmp.eq.s32.totalorder %s42, 1
      %p79 = por %p77, %p78
      %p80 = scmp.ne.s32.totalorder %s69, %s70
      %p81 = scmp.eq.s32.totalorder %s42, 0
      %p82 = por %p80, %p81
      %p83 = scmp.ne.s32.totalorder %s69, %s70
      %p84 = scmp.eq.s32.totalorder %s43, 1
      %p85 = por %p83, %p84
      %p87 = scmp.ne.s32.totalorder %s70, %s86
      %p88 = scmp.eq.s32.totalorder %s43, 0
      %p89 = por %p87, %p88
      %s90 = ssub.s32 %s44, %s63
      %p91 = scmp.eq.s32.totalorder %s90, 0
      %s93 = sadd.s32 %s92, 1
      %s94 = scalar_select %p91, %s92, %s93
      %p97 = pneg %p91
      %p98 = scmp.eq.s32.totalorder %s37, 1
      %p99 = por %p97, %p98
      %p100 = scmp.ne.s32.totalorder %s92, %s95
      %p101 = scmp.eq.s32.totalorder %s37, 0
      %p102 = por %p100, %p101
      %p103 = scmp.ne.s32.totalorder %s92, %s95
      %p104 = scmp.eq.s32.totalorder %s42, 1
      %p105 = por %p103, %p104
      %p106 = scmp.ne.s32.totalorder %s95, %s96
      %p107 = scmp.eq.s32.totalorder %s42, 0
      %p108 = por %p106, %p107
      %p109 = scmp.ne.s32.totalorder %s95, %s96
      %p110 = scmp.eq.s32.totalorder %s43, 1
      %p111 = por %p109, %p110
      %p113 = scmp.ne.s32.totalorder %s96, %s112
      %p114 = scmp.eq.s32.totalorder %s43, 0
      %p115 = por %p113, %p114
      %s117 = sadd.s32 %s116, 1
      %p120 = scmp.eq.s32.totalorder %s37, 1
      %p121 = scmp.ne.s32.totalorder %s116, %s118
      %p122 = scmp.eq.s32.totalorder %s37, 0
      %p123 = por %p121, %p122
      %p124 = scmp.ne.s32.totalorder %s116, %s118
      %p125 = scmp.eq.s32.totalorder %s42, 1
      %p126 = por %p124, %p125
      %p127 = scmp.ne.s32.totalorder %s118, %s119
      %p128 = scmp.eq.s32.totalorder %s42, 0
      %p129 = por %p127, %p128
      %p130 = scmp.ne.s32.totalorder %s118, %s119
      %p131 = scmp.eq.s32.totalorder %s43, 1
      %p132 = por %p130, %p131
      %p134 = scmp.ne.s32.totalorder %s119, %s133
      %p135 = scmp.eq.s32.totalorder %s43, 0
      %p136 = por %p134, %p135
      %s138 = sadd.s32 %s137, 1
      %p141 = scmp.eq.s32.totalorder %s37, 1
      %p142 = scmp.ne.s32.totalorder %s137, %s139
      %p143 = scmp.eq.s32.totalorder %s37, 0
      %p144 = por %p142, %p143
      %p145 = scmp.ne.s32.totalorder %s137, %s139
      %p146 = scmp.eq.s32.totalorder %s42, 1
      %p147 = por %p145, %p146
      %p148 = scmp.ne.s32.totalorder %s139, %s140
      %p149 = scmp.eq.s32.totalorder %s42, 0
      %p150 = por %p148, %p149
      %p151 = scmp.ne.s32.totalorder %s139, %s140
      %p152 = scmp.eq.s32.totalorder %s43, 1
      %p153 = por %p151, %p152
      %p155 = scmp.ne.s32.totalorder %s140, %s154
      %p156 = scmp.eq.s32.totalorder %s43, 0
      %p157 = por %p155, %p156
      %s159 = sadd.s32 %s158, 1
      %p162 = scmp.eq.s32.totalorder %s37, 1
      %p163 = scmp.ne.s32.totalorder %s158, %s160
      %p164 = scmp.eq.s32.totalorder %s37, 0
      %p165 = por %p163, %p164
      %p166 = scmp.ne.s32.totalorder %s158, %s160
      %p167 = scmp.eq.s32.totalorder %s42, 1
      %p168 = por %p166, %p167
      %p169 = scmp.ne.s32.totalorder %s160, %s161
      %p170 = scmp.eq.s32.totalorder %s42, 0
      %p171 = por %p169, %p170
      %p172 = scmp.ne.s32.totalorder %s160, %s161
      %p173 = scmp.eq.s32.totalorder %s43, 1
      %p174 = por %p172, %p173
      %p176 = scmp.ne.s32.totalorder %s161, %s175
      %p177 = scmp.eq.s32.totalorder %s43, 0
      %p178 = por %p176, %p177
      %s180 = sadd.s32 %s179, 1
      %p183 = scmp.eq.s32.totalorder %s37, 1
      %p184 = scmp.ne.s32.totalorder %s179, %s181
      %p185 = scmp.eq.s32.totalorder %s37, 0
      %p186 = por %p184, %p185
      %p187 = scmp.ne.s32.totalorder %s179, %s181
      %p188 = scmp.eq.s32.totalorder %s42, 1
      %p189 = por %p187, %p188
      %p190 = scmp.ne.s32.totalorder %s181, %s182
      %p191 = scmp.eq.s32.totalorder %s42, 0
      %p192 = por %p190, %p191
      %p193 = scmp.ne.s32.totalorder %s181, %s182
      %p194 = scmp.eq.s32.totalorder %s43, 1
      %p195 = por %p193, %p194
      %p197 = scmp.ne.s32.totalorder %s182, %s196
      %p198 = scmp.eq.s32.totalorder %s43, 0
      %p199 = por %p197, %p198
      %s201 = sadd.s32 %s200, 1
      %p204 = scmp.eq.s32.totalorder %s37, 1
      %p205 = scmp.ne.s32.totalorder %s200, %s202
      %p206 = scmp.eq.s32.totalorder %s37, 0
      %p207 = por %p205, %p206
      %p208 = scmp.ne.s32.totalorder %s200, %s202
      %p209 = scmp.eq.s32.totalorder %s42, 1
      %p210 = por %p208, %p209
      %p211 = scmp.ne.s32.totalorder %s202, %s203
      %p212 = scmp.eq.s32.totalorder %s42, 0
      %p213 = por %p211, %p212
      %p214 = scmp.ne.s32.totalorder %s202, %s203
      %p215 = scmp.eq.s32.totalorder %s43, 1
      %p216 = por %p214, %p215
      %p218 = scmp.ne.s32.totalorder %s203, %s217
      %p219 = scmp.eq.s32.totalorder %s43, 0
      %p220 = por %p218, %p219
      %s222 = sadd.s32 %s221, 1
      %p225 = scmp.eq.s32.totalorder %s37, 1
      %p226 = scmp.ne.s32.totalorder %s221, %s223
      %p227 = scmp.eq.s32.totalorder %s37, 0
      %p228 = por %p226, %p227
      %p229 = scmp.ne.s32.totalorder %s221, %s223
      %p230 = scmp.eq.s32.totalorder %s42, 1
      %p231 = por %p229, %p230
      %p232 = scmp.ne.s32.totalorder %s223, %s224
      %p233 = scmp.eq.s32.totalorder %s42, 0
      %p234 = por %p232, %p233
      %p235 = scmp.ne.s32.totalorder %s223, %s224
      %p236 = scmp.eq.s32.totalorder %s43, 1
      %p237 = por %p235, %p236
      %p239 = scmp.ne.s32.totalorder %s224, %s238
      %p240 = scmp.eq.s32.totalorder %s43, 0
      %p241 = por %p239, %p240
      %s243 = sadd.s32 %s242, 1
      %p246 = scmp.eq.s32.totalorder %s37, 1
      %p247 = scmp.ne.s32.totalorder %s242, %s244
      %p248 = scmp.eq.s32.totalorder %s37, 0
      %p249 = por %p247, %p248
      %p250 = scmp.ne.s32.totalorder %s242, %s244
      %p251 = scmp.eq.s32.totalorder %s42, 1
      %p252 = por %p250, %p251
      %p253 = scmp.ne.s32.totalorder %s244, %s245
      %p254 = scmp.eq.s32.totalorder %s42, 0
      %p255 = por %p253, %p254
      %p256 = scmp.ne.s32.totalorder %s244, %s245
      %p257 = scmp.eq.s32.totalorder %s43, 1
      %p258 = por %p256, %p257
      %p260 = scmp.ne.s32.totalorder %s245, %s259
      %p261 = scmp.eq.s32.totalorder %s43, 0
      %p262 = por %p260, %p261
      %s264 = sadd.s32 %s263, 1
      %p267 = scmp.eq.s32.totalorder %s37, 1
      %p268 = scmp.ne.s32.totalorder %s263, %s265
      %p269 = scmp.eq.s32.totalorder %s37, 0
      %p270 = por %p268, %p269
      %p271 = scmp.ne.s32.totalorder %s263, %s265
      %p272 = scmp.eq.s32.totalorder %s42, 1
      %p273 = por %p271, %p272
      %p274 = scmp.ne.s32.totalorder %s265, %s266
      %p275 = scmp.eq.s32.totalorder %s42, 0
      %p276 = por %p274, %p275
      %p277 = scmp.ne.s32.totalorder %s265, %s266
      %p278 = scmp.eq.s32.totalorder %s43, 1
      %p279 = por %p277, %p278
      %p281 = scmp.ne.s32.totalorder %s266, %s280
      %p282 = scmp.eq.s32.totalorder %s43, 0
      %p283 = por %p281, %p282
      %s285 = sadd.s32 %s284, 1
      %p288 = scmp.eq.s32.totalorder %s37, 1
      %p289 = scmp.ne.s32.totalorder %s284, %s286
      %p290 = scmp.eq.s32.totalorder %s37, 0
      %p291 = por %p289, %p290
      %p292 = scmp.ne.s32.totalorder %s284, %s286
      %p293 = scmp.eq.s32.totalorder %s42, 1
      %p294 = por %p292, %p293
      %p295 = scmp.ne.s32.totalorder %s286, %s287
      %p296 = scmp.eq.s32.totalorder %s42, 0
      %p297 = por %p295, %p296
      %p298 = scmp.ne.s32.totalorder %s286, %s287
      %p299 = scmp.eq.s32.totalorder %s43, 1
      %p300 = por %p298, %p299
      %p302 = scmp.ne.s32.totalorder %s287, %s301
      %p303 = scmp.eq.s32.totalorder %s43, 0
      %p304 = por %p302, %p303
      %s306 = sadd.s32 %s305, 1
      %p309 = scmp.eq.s32.totalorder %s37, 1
      %p310 = scmp.ne.s32.totalorder %s305, %s307
      %p311 = scmp.eq.s32.totalorder %s37, 0
      %p312 = por %p310, %p311
      %p313 = scmp.ne.s32.totalorder %s305, %s307
      %p314 = scmp.eq.s32.totalorder %s42, 1
      %p315 = por %p313, %p314
      %p316 = scmp.ne.s32.totalorder %s307, %s308
      %p317 = scmp.eq.s32.totalorder %s42, 0
      %p318 = por %p316, %p317
      %p319 = scmp.ne.s32.totalorder %s307, %s308
      %p320 = scmp.eq.s32.totalorder %s43, 1
      %p321 = por %p319, %p320
      %p323 = scmp.ne.s32.totalorder %s308, %s322
      %p324 = scmp.eq.s32.totalorder %s43, 0
      %p325 = por %p323, %p324
      %s327 = sadd.s32 %s326, 1
      %p330 = scmp.eq.s32.totalorder %s37, 1
      %p331 = scmp.ne.s32.totalorder %s326, %s328
      %p332 = scmp.eq.s32.totalorder %s37, 0
      %p333 = por %p331, %p332
      %p334 = scmp.ne.s32.totalorder %s326, %s328
      %p335 = scmp.eq.s32.totalorder %s42, 1
      %p336 = por %p334, %p335
      %p337 = scmp.ne.s32.totalorder %s328, %s329
      %p338 = scmp.eq.s32.totalorder %s42, 0
      %p339 = por %p337, %p338
      %p340 = scmp.ne.s32.totalorder %s328, %s329
      %p341 = scmp.eq.s32.totalorder %s43, 1
      %p342 = por %p340, %p341
      %p344 = scmp.ne.s32.totalorder %s329, %s343
      %p345 = scmp.eq.s32.totalorder %s43, 0
      %p346 = por %p344, %p345
      %s348 = sadd.s32 %s347, 1
      %p351 = scmp.eq.s32.totalorder %s37, 1
      %p352 = scmp.ne.s32.totalorder %s347, %s349
      %p353 = scmp.eq.s32.totalorder %s37, 0
      %p354 = por %p352, %p353
      %p355 = scmp.ne.s32.totalorder %s347, %s349
      %p356 = scmp.eq.s32.totalorder %s42, 1
      %p357 = por %p355, %p356
      %p358 = scmp.ne.s32.totalorder %s349, %s350
      %p359 = scmp.eq.s32.totalorder %s42, 0
      %p360 = por %p358, %p359
      %p361 = scmp.ne.s32.totalorder %s349, %s350
      %p362 = scmp.eq.s32.totalorder %s43, 1
      %p363 = por %p361, %p362
      %p365 = scmp.ne.s32.totalorder %s350, %s364
      %p366 = scmp.eq.s32.totalorder %s43, 0
      %p367 = por %p365, %p366
      %s369 = sadd.s32 %s368, 1
      %p372 = scmp.eq.s32.totalorder %s37, 1
      %p373 = scmp.ne.s32.totalorder %s368, %s370
      %p374 = scmp.eq.s32.totalorder %s37, 0
      %p375 = por %p373, %p374
      %p376 = scmp.ne.s32.totalorder %s368, %s370
      %p377 = scmp.eq.s32.totalorder %s42, 1
      %p378 = por %p376, %p377
      %p379 = scmp.ne.s32.totalorder %s370, %s371
      %p380 = scmp.eq.s32.totalorder %s42, 0
      %p381 = por %p379, %p380
      %p382 = scmp.ne.s32.totalorder %s370, %s371
      %p383 = scmp.eq.s32.totalorder %s43, 1
      %p384 = por %p382, %p383
      %p386 = scmp.ne.s32.totalorder %s371, %s385
      %p387 = scmp.eq.s32.totalorder %s43, 0
      %p388 = por %p386, %p387
      %s390 = sadd.s32 %s389, 1
      %p393 = scmp.eq.s32.totalorder %s37, 1
      %p394 = scmp.ne.s32.totalorder %s389, %s391
      %p395 = scmp.eq.s32.totalorder %s37, 0
      %p396 = por %p394, %p395
      %p397 = scmp.ne.s32.totalorder %s389, %s391
      %p398 = scmp.eq.s32.totalorder %s42, 1
      %p399 = por %p397, %p398
      %p400 = scmp.ne.s32.totalorder %s391, %s392
      %p401 = scmp.eq.s32.totalorder %s42, 0
      %p402 = por %p400, %p401
      %p403 = scmp.ne.s32.totalorder %s391, %s392
      %p404 = scmp.eq.s32.totalorder %s43, 1
      %p405 = por %p403, %p404
      %p407 = scmp.ne.s32.totalorder %s392, %s406
      %p408 = scmp.eq.s32.totalorder %s43, 0
      %p409 = por %p407, %p408
      %s411 = sadd.s32 %s410, 1
      %p414 = scmp.eq.s32.totalorder %s37, 1
      %p415 = scmp.ne.s32.totalorder %s410, %s412
      %p416 = scmp.eq.s32.totalorder %s37, 0
      %p417 = por %p415, %p416
      %p418 = scmp.ne.s32.totalorder %s410, %s412
      %p419 = scmp.eq.s32.totalorder %s42, 1
      %p420 = por %p418, %p419
      %p421 = scmp.ne.s32.totalorder %s412, %s413
      %p422 = scmp.eq.s32.totalorder %s42, 0
      %p423 = por %p421, %p422
      %p424 = scmp.ne.s32.totalorder %s412, %s413
      %p425 = scmp.eq.s32.totalorder %s43, 1
      %p426 = por %p424, %p425
      %p428 = scmp.ne.s32.totalorder %s413, %s427
      %p429 = scmp.eq.s32.totalorder %s43, 0
      %p430 = por %p428, %p429
      %s432 = sadd.s32 %s431, 1
      %p435 = scmp.eq.s32.totalorder %s37, 1
      %p436 = scmp.ne.s32.totalorder %s431, %s433
      %p437 = scmp.eq.s32.totalorder %s37, 0
      %p438 = por %p436, %p437
      %p439 = scmp.ne.s32.totalorder %s431, %s433
      %p440 = scmp.eq.s32.totalorder %s42, 1
      %p441 = por %p439, %p440
      %p442 = scmp.ne.s32.totalorder %s433, %s434
      %p443 = scmp.eq.s32.totalorder %s42, 0
      %p444 = por %p442, %p443
      %p445 = scmp.ne.s32.totalorder %s433, %s434
      %p446 = scmp.eq.s32.totalorder %s43, 1
      %p447 = por %p445, %p446
      %p449 = scmp.ne.s32.totalorder %s434, %s448
      %p450 = scmp.eq.s32.totalorder %s43, 0
      %p451 = por %p449, %p450
      %s452 = ssub.s32 %s44, %s63
      %s453 = ssub.s32 %s45, %s59
      %s454 = sor.u32 %s452, %s453
      %p455 = scmp.eq.s32.totalorder %s454, 0
      %s457 = sadd.s32 %s456, 1
      %s458 = scalar_select %p455, %s456, %s457
      %p461 = pneg %p455
      %p462 = scmp.eq.s32.totalorder %s37, 1
      %p463 = por %p461, %p462
      %p464 = scmp.ne.s32.totalorder %s456, %s459
      %p465 = scmp.eq.s32.totalorder %s37, 0
      %p466 = por %p464, %p465
      %p467 = scmp.ne.s32.totalorder %s456, %s459
      %p468 = scmp.eq.s32.totalorder %s42, 1
      %p469 = por %p467, %p468
      %p470 = scmp.ne.s32.totalorder %s459, %s460
      %p471 = scmp.eq.s32.totalorder %s42, 0
      %p472 = por %p470, %p471
      %p473 = scmp.ne.s32.totalorder %s459, %s460
      %p474 = scmp.eq.s32.totalorder %s43, 1
      %p475 = por %p473, %p474
      %p477 = scmp.ne.s32.totalorder %s460, %s476
      %p478 = scmp.eq.s32.totalorder %s43, 0
      %p479 = por %p477, %p478
      %s480 = ssub.s32 %s44, %s63
      %s481 = ssub.s32 %s45, %s59
      %s482 = sor.u32 %s480, %s481
      %p483 = scmp.eq.s32.totalorder %s482, 0
      %s485 = sadd.s32 %s484, 1
      %s486 = scalar_select %p483, %s484, %s485
      %p489 = pneg %p483
      %p490 = scmp.eq.s32.totalorder %s37, 1
      %p491 = por %p489, %p490
      %p492 = scmp.ne.s32.totalorder %s484, %s487
      %p493 = scmp.eq.s32.totalorder %s37, 0
      %p494 = por %p492, %p493
      %p495 = scmp.ne.s32.totalorder %s484, %s487
      %p496 = scmp.eq.s32.totalorder %s42, 1
      %p497 = por %p495, %p496
      %p498 = scmp.ne.s32.totalorder %s487, %s488
      %p499 = scmp.eq.s32.totalorder %s42, 0
      %p500 = por %p498, %p499
      %p501 = scmp.ne.s32.totalorder %s487, %s488
      %p502 = scmp.eq.s32.totalorder %s43, 1
      %p503 = por %p501, %p502
      %p505 = scmp.ne.s32.totalorder %s488, %s504
      %p506 = scmp.eq.s32.totalorder %s43, 0
      %p507 = por %p505, %p506
      %p508 = scmp.le.s32.totalorder 1, %s37
      %p509 = scmp.lt.s32.totalorder %s37, 3
      %p510 = pnand %p508, %p509
      %p511 = pneg %p510
      // Predicated region
      $region9: #{tpu_custom_call.1} parent=5 // pred_check
        _
      $region10: #{tpu_custom_call.1} parent=5 // pred_check_branch
        %513 = sbr.rel (%p510) target = $region12
      $region11: #{tpu_custom_call.1} parent=5 // pred_region
        %s514 = ssub.s32 %s37, 1
        // Predicated region
        $region13: #{tpu_custom_call.1} parent=11 // pred_check
          %p515 = pneg %p129
        $region14: #{tpu_custom_call.1} parent=11 // pred_check_branch
          %517 = sbr.rel (%p515) target = $region16
        $region15: #{tpu_custom_call.1} parent=11 // pred_region
          _
        $region16: #{tpu_custom_call.1} parent=11 // pred_fallthru
          _
        // Predicated region
        $region17: #{tpu_custom_call.1} parent=11 // pred_check
          %p518 = pneg %p150
        $region18: #{tpu_custom_call.1} parent=11 // pred_check_branch
          %520 = sbr.rel (%p518) target = $region20
        $region19: #{tpu_custom_call.1} parent=11 // pred_region
          _
        $region20: #{tpu_custom_call.1} parent=11 // pred_fallthru
          _
        // Predicated region
        $region21: #{tpu_custom_call.1} parent=11 // pred_check
          %p521 = pneg %p171
        $region22: #{tpu_custom_call.1} parent=11 // pred_check_branch
          %523 = sbr.rel (%p521) target = $region24
        $region23: #{tpu_custom_call.1} parent=11 // pred_region
          _
        $region24: #{tpu_custom_call.1} parent=11 // pred_fallthru
          _
        // Predicated region
        $region25: #{tpu_custom_call.1} parent=11 // pred_check
          %p524 = pneg %p192
        $region26: #{tpu_custom_call.1} parent=11 // pred_check_branch
          %526 = sbr.rel (%p524) target = $region28
        $region27: #{tpu_custom_call.1} parent=11 // pred_region
          _
        $region28: #{tpu_custom_call.1} parent=11 // pred_fallthru
          _
        // Predicated region
        $region29: #{tpu_custom_call.1} parent=11 // pred_check
          %p527 = pneg %p213
        $region30: #{tpu_custom_call.1} parent=11 // pred_check_branch
          %529 = sbr.rel (%p527) target = $region32
        $region31: #{tpu_custom_call.1} parent=11 // pred_region
          %531 = vsyncadd [#allocation12], 0
          %s532 = sshll.u32 %s6, 4
          %s533 = int_to_ptr.hbm [resolvable:$true] %s532
          %s534 = sshll.u32 [#allocation11], 4
          %s535 = int_to_ptr.vmem [resolvable:$true] %s534
          %540 = dma.hbm_to_vmem [thread:$0]  %s533, 256, %s535, [#allocation12], 64, 64, 4
        $region32: #{tpu_custom_call.1} parent=11 // pred_fallthru
          _
        // Predicated region
        $region33: #{tpu_custom_call.1} parent=11 // pred_check
          %p541 = pneg %p234
        $region34: #{tpu_custom_call.1} parent=11 // pred_check_branch
          %543 = sbr.rel (%p541) target = $region36
        $region35: #{tpu_custom_call.1} parent=11 // pred_region
          _
        $region36: #{tpu_custom_call.1} parent=11 // pred_fallthru
          _
        // Predicated region
        $region37: #{tpu_custom_call.1} parent=11 // pred_check
          %p544 = pneg %p255
        $region38: #{tpu_custom_call.1} parent=11 // pred_check_branch
          %546 = sbr.rel (%p544) target = $region40
        $region39: #{tpu_custom_call.1} parent=11 // pred_region
          %548 = vsyncadd [#allocation12], 0
          %s549 = sshll.u32 %s8, 4
          %s550 = int_to_ptr.hbm [resolvable:$true] %s549
          %s551 = sshll.u32 [#allocation13], 4
          %s552 = int_to_ptr.vmem [resolvable:$true] %s551
          %557 = dma.hbm_to_vmem [thread:$0]  %s550, 256, %s552, [#allocation12], 64, 64, 4
        $region40: #{tpu_custom_call.1} parent=11 // pred_fallthru
          _
        // Predicated region
        $region41: #{tpu_custom_call.1} parent=11 // pred_check
          %p558 = pneg %p276
        $region42: #{tpu_custom_call.1} parent=11 // pred_check_branch
          %560 = sbr.rel (%p558) target = $region44
        $region43: #{tpu_custom_call.1} parent=11 // pred_region
          _
        $region44: #{tpu_custom_call.1} parent=11 // pred_fallthru
          _
        // Predicated region
        $region45: #{tpu_custom_call.1} parent=11 // pred_check
          %p561 = pneg %p297
        $region46: #{tpu_custom_call.1} parent=11 // pred_check_branch
          %563 = sbr.rel (%p561) target = $region48
        $region47: #{tpu_custom_call.1} parent=11 // pred_region
          _
        $region48: #{tpu_custom_call.1} parent=11 // pred_fallthru
          _
        // Predicated region
        $region49: #{tpu_custom_call.1} parent=11 // pred_check
          %p564 = pneg %p318
        $region50: #{tpu_custom_call.1} parent=11 // pred_check_branch
          %566 = sbr.rel (%p564) target = $region52
        $region51: #{tpu_custom_call.1} parent=11 // pred_region
          _
        $region52: #{tpu_custom_call.1} parent=11 // pred_fallthru
          _
        // Predicated region
        $region53: #{tpu_custom_call.1} parent=11 // pred_check
          %p567 = pneg %p339
        $region54: #{tpu_custom_call.1} parent=11 // pred_check_branch
          %569 = sbr.rel (%p567) target = $region56
        $region55: #{tpu_custom_call.1} parent=11 // pred_region
          %571 = vsyncadd [#allocation15], 0
          %s572 = sshll.u32 %s12, 4
          %s573 = int_to_ptr.hbm [resolvable:$true] %s572
          %s574 = sshll.u32 [#allocation14], 4
          %s575 = int_to_ptr.vmem [resolvable:$true] %s574
          %580 = dma.hbm_to_vmem [thread:$0]  %s573, 256, %s575, [#allocation15], 64, 64, 4
        $region56: #{tpu_custom_call.1} parent=11 // pred_fallthru
          _
        // Predicated region
        $region57: #{tpu_custom_call.1} parent=11 // pred_check
          %p581 = pneg %p360
        $region58: #{tpu_custom_call.1} parent=11 // pred_check_branch
          %583 = sbr.rel (%p581) target = $region60
        $region59: #{tpu_custom_call.1} parent=11 // pred_region
          _
        $region60: #{tpu_custom_call.1} parent=11 // pred_fallthru
          _
        // Predicated region
        $region61: #{tpu_custom_call.1} parent=11 // pred_check
          %p584 = pneg %p381
        $region62: #{tpu_custom_call.1} parent=11 // pred_check_branch
          %586 = sbr.rel (%p584) target = $region64
        $region63: #{tpu_custom_call.1} parent=11 // pred_region
          _
        $region64: #{tpu_custom_call.1} parent=11 // pred_fallthru
          _
        // Predicated region
        $region65: #{tpu_custom_call.1} parent=11 // pred_check
          %p587 = pneg %p402
        $region66: #{tpu_custom_call.1} parent=11 // pred_check_branch
          %589 = sbr.rel (%p587) target = $region68
        $region67: #{tpu_custom_call.1} parent=11 // pred_region
          _
        $region68: #{tpu_custom_call.1} parent=11 // pred_fallthru
          _
        // Predicated region
        $region69: #{tpu_custom_call.1} parent=11 // pred_check
          %p590 = pneg %p423
        $region70: #{tpu_custom_call.1} parent=11 // pred_check_branch
          %592 = sbr.rel (%p590) target = $region72
        $region71: #{tpu_custom_call.1} parent=11 // pred_region
          _
        $region72: #{tpu_custom_call.1} parent=11 // pred_fallthru
          _
        // Predicated region
        $region73: #{tpu_custom_call.1} parent=11 // pred_check
          %p593 = pneg %p444
        $region74: #{tpu_custom_call.1} parent=11 // pred_check_branch
          %595 = sbr.rel (%p593) target = $region76
        $region75: #{tpu_custom_call.1} parent=11 // pred_region
          _
        $region76: #{tpu_custom_call.1} parent=11 // pred_fallthru
          _
      $region12: #{tpu_custom_call.1} parent=5 // pred_fallthru
        _
      %p596 = scmp.lt.s32.totalorder %s37, 2
      // Predicated region
      $region77: #{tpu_custom_call.1} parent=5 // pred_check
        %p597 = pneg %p596
      $region78: #{tpu_custom_call.1} parent=5 // pred_check_branch
        %599 = sbr.rel (%p597) target = $region80
      $region79: #{tpu_custom_call.1} parent=5 // pred_region
        // Predicated region
        $region81: #{tpu_custom_call.1} parent=79 // pred_check
          %p600 = pneg %p76
        $region82: #{tpu_custom_call.1} parent=79 // pred_check_branch
          %602 = sbr.rel (%p600) target = $region84
        $region83: #{tpu_custom_call.1} parent=79 // pred_region
          %p603 = scmp.lt.s32.totalorder %s44, 1
          %s604 = scalar_select %p603, %s44, 1
          %s605 = smul.addr %s604, 8
          %s606 = scalar_lea.vmem %s0, %s605
        $region84: #{tpu_custom_call.1} parent=79 // pred_fallthru
          _
        // Predicated region
        $region85: #{tpu_custom_call.1} parent=79 // pred_check
          %p607 = pneg %p102
        $region86: #{tpu_custom_call.1} parent=79 // pred_check_branch
          %609 = sbr.rel (%p607) target = $region88
        $region87: #{tpu_custom_call.1} parent=79 // pred_region
          %s610 = sand.u32 %s92, 1
          %s611 = scalar_lea.sflag [#allocation9], %s610
          %s612 = sand.u32 %s92, 1
          %s613 = scalar_lea.vmem [#allocation8], %s612
          %615 = vsyncadd %s611, 0
          %s616 = scalar_lea.hbm %s1, %s44
          %s618 = sshll.u32 %s616, 4
          %s619 = int_to_ptr.hbm [resolvable:$true] %s618
          %s620 = sshll.u32 %s613, 4
          %s621 = int_to_ptr.vmem [resolvable:$true] %s620
          %623 = dma.hbm_to_vmem [thread:$0]  %s619, 16, %s621, %s611
        $region88: #{tpu_custom_call.1} parent=79 // pred_fallthru
          _
      $region80: #{tpu_custom_call.1} parent=5 // pred_fallthru
        _
      %p624 = scmp.le.s32.totalorder 1, %s37
      %p625 = scmp.lt.s32.totalorder %s37, 3
      %p626 = pnand %p624, %p625
      %p627 = pneg %p626
      // Predicated region
      $region89: #{tpu_custom_call.1} parent=5 // pred_check
        _
      $region90: #{tpu_custom_call.1} parent=5 // pred_check_branch
        %629 = sbr.rel (%p626) target = $region92
      $region91: #{tpu_custom_call.1} parent=5 // pred_region
        %s630 = ssub.s32 %s37, 1
        %s631 = sand.u32 %s95, 1
        %s632 = scalar_lea.sflag [#allocation9], %s631
        %s633 = sand.u32 %s95, 1
        %s634 = scalar_lea.vmem [#allocation8], %s633
        // Predicated region
        $region93: #{tpu_custom_call.1} parent=91 // pred_check
          %p635 = pneg %p108
        $region94: #{tpu_custom_call.1} parent=91 // pred_check_branch
          %637 = sbr.rel (%p635) target = $region96
        $region95: #{tpu_custom_call.1} parent=91 // pred_region
          %639 = dma.done %s632, 16
        $region96: #{tpu_custom_call.1} parent=91 // pred_fallthru
          _
        // Predicated region
        $region97: #{tpu_custom_call.1} parent=91 // pred_check
          %p640 = pneg %p213
        $region98: #{tpu_custom_call.1} parent=91 // pred_check_branch
          %642 = sbr.rel (%p640) target = $region100
        $region99: #{tpu_custom_call.1} parent=91 // pred_region
          %644 = dma.done [#allocation12], 256
        $region100: #{tpu_custom_call.1} parent=91 // pred_fallthru
          _
        // Predicated region
        $region101: #{tpu_custom_call.1} parent=91 // pred_check
          %p645 = pneg %p255
        $region102: #{tpu_custom_call.1} parent=91 // pred_check_branch
          %647 = sbr.rel (%p645) target = $region104
        $region103: #{tpu_custom_call.1} parent=91 // pred_region
          %649 = dma.done [#allocation12], 256
        $region104: #{tpu_custom_call.1} parent=91 // pred_fallthru
          _
        // Predicated region
        $region105: #{tpu_custom_call.1} parent=91 // pred_check
          %p650 = pneg %p339
        $region106: #{tpu_custom_call.1} parent=91 // pred_check_branch
          %652 = sbr.rel (%p650) target = $region108
        $region107: #{tpu_custom_call.1} parent=91 // pred_region
          %654 = dma.done [#allocation15], 256
        $region108: #{tpu_custom_call.1} parent=91 // pred_fallthru
          _
        %p655 = scmp.lt.s32.totalorder %s47, 1
        %s656 = scalar_select %p655, %s47, 1
        %s657 = smul.addr %s656, 8
        %s658 = scalar_lea.vmem %s0, %s657
        %p659 = pneg %p82
        %p660 = pneg %p79
        %s661 = sand.u32 %s95, 1
        %s662 = scalar_lea.sflag [#allocation9], %s661
        %s663 = sand.u32 %s95, 1
        %s664 = scalar_lea.vmem [#allocation8], %s663
        %p665 = pneg %p108
        %p666 = pneg %p105
        %p667 = pneg %p129
        %p668 = pneg %p126
        %p669 = pneg %p150
        %p670 = pneg %p147
        %p671 = pneg %p171
        %p672 = pneg %p168
        %p673 = pneg %p192
        %p674 = pneg %p189
        %p675 = pneg %p213
        %p676 = pneg %p210
        %p677 = pneg %p234
        %p678 = pneg %p231
        %p679 = pneg %p255
        %p680 = pneg %p252
        %p681 = pneg %p276
        %p682 = pneg %p273
        %p683 = pneg %p297
        %p684 = pneg %p294
        %p685 = pneg %p318
        %p686 = pneg %p315
        %p687 = pneg %p339
        %p688 = pneg %p336
        %p689 = pneg %p360
        %p690 = pneg %p357
        %p691 = pneg %p381
        %p692 = pneg %p378
        %p693 = pneg %p402
        %p694 = pneg %p399
        %p695 = pneg %p423
        %p696 = pneg %p420
        %p697 = pneg %p444
        %p698 = pneg %p441
        %p699 = pneg %p472
        %p700 = pneg %p469
        %s701 = sand.u32 %s459, 1
        %s702 = scalar_lea.sflag [#allocation10], %s701
        %s703 = sand.u32 %s459, 1
        %s704 = smul.addr %s703, 8
        %s705 = scalar_lea.vmem [#allocation16], %s704
        %p706 = pneg %p500
        %p707 = pneg %p497
        %s708 = sand.u32 %s487, 1
        %s709 = scalar_lea.sflag [#allocation18], %s708
        %s710 = sand.u32 %s487, 1
        %s711 = smul.addr %s710, 16
        %s712 = scalar_lea.vmem [#allocation17], %s711
        %p713 = scmp.lt.s32.totalorder %s47, 1
        %s714 = scalar_select %p713, %s47, 1
        %s715 = smul.addr %s714, 8
        %s716 = scalar_lea.vmem %s0, %s715
        %p718 = scmp.eq.s32.totalorder %s48, 0
        %p719 = scmp.eq.s32.totalorder %s49, 0
        %p720 = pnand %p718, %p719
        %p721 = pneg %p720
        // Predicated region
        $region109: #{tpu_custom_call.1} parent=91 // pred_check
          _
        $region110: #{tpu_custom_call.1} parent=91 // pred_check_branch
          %723 = sbr.rel (%p720) target = $region112
        $region111: #{tpu_custom_call.1} parent=91 // pred_region
          %v724 = vld [vmem:[%s716] sm:$0xff]
          %v725 = vpack.c.bf16 %v724, %v724
          %v726 = vld [vmem:[%s4] sm:$0xf]
          %v727 = vld [vmem:[%s4 + $0x4] sm:$0xf]
          %v728 = vld [vmem:[%s4 + $0x8] sm:$0xf]
          %v729 = vld [vmem:[%s4 + $0xc] sm:$0xf]
          %v730 = vld [vmem:[%s5] sm:$0x1]
          %v732 = vperm.slane %v730, 0
          %v738 = vunpack.c.l.b16 %v726
          %v739 = vunpack.c.l.b16 %v727
          %v740 = vunpack.c.l.b16 %v728
          %v741 = vunpack.c.l.b16 %v729
          %v742 = vpack.c.b16 %v739, %v738
          %v743 = vpack.c.b16 %v741, %v740
          %vm746 = vcmask 261120
          %v748 = vsel %vm746, %v725, 0
          %750 = vmatpush.bf16.msra.mxu0 0
          %751 = vmatpush.bf16.msra.mxu0 0
          %752 = vmatpush.bf16.msra.mxu0 0
          %753 = vmatpush.bf16.msra.mxu0 0
          %754 = vmatpush.bf16.msra.mxu0 0
          %755 = vmatpush.bf16.msra.mxu0 0
          %756 = vmatpush.bf16.msra.mxu0 %v743
          %757 = vmatpush.bf16.msra.mxu0 %v742
          %758 = vmatmul.bf16.gmra.mxu0 %v748
          %v759 = vpop.f32.mrf.mxu0
          %v760 = vadd.f32 %v732, %v759
          %v761 = vpop.f32.mrf.mxu0
          %762 = vdwg.mxu0
          %v763 = vld [vmem:[#allocation11] sm:$0xf]
          %v764 = vld [vmem:[#allocation11 + $0x4] sm:$0xf]
          %v765 = vld [vmem:[#allocation11 + $0x8] sm:$0xf]
          %v766 = vld [vmem:[#allocation11 + $0xc] sm:$0xf]
          %v767 = vld [vmem:[%s7] sm:$0x1]
          %v769 = vperm.slane %v767, 0
          %v775 = vunpack.c.l.b16 %v763
          %v776 = vunpack.c.l.b16 %v764
          %v777 = vunpack.c.l.b16 %v765
          %v778 = vunpack.c.l.b16 %v766
          %v779 = vpack.c.b16 %v776, %v775
          %v780 = vpack.c.b16 %v778, %v777
          %783 = vmatpush.bf16.msra.mxu0 0
          %784 = vmatpush.bf16.msra.mxu0 0
          %785 = vmatpush.bf16.msra.mxu0 0
          %786 = vmatpush.bf16.msra.mxu0 0
          %787 = vmatpush.bf16.msra.mxu0 0
          %788 = vmatpush.bf16.msra.mxu0 0
          %789 = vmatpush.bf16.msra.mxu0 %v780
          %790 = vmatpush.bf16.msra.mxu0 %v779
          %791 = vmatmul.bf16.gmra.mxu0 %v748
          %v792 = vpop.f32.mrf.mxu0
          %v793 = vadd.f32 %v769, %v792
          %v794 = vpop.f32.mrf.mxu0
          %795 = vdwg.mxu0
          %v796 = vpack.c.bf16 %v760, %v760
          %vm797 = vcmask 257024
          %798 = vst.msk [vmem:[#allocation2] sm:$0xf] %vm797, %v796
          %v799 = vpack.c.bf16 %v793, %v793
          %800 = vst.msk [vmem:[#allocation3] sm:$0xf] %vm797, %v799
        $region112: #{tpu_custom_call.1} parent=91 // pred_fallthru
          _
        // Predicated region
        $region113: #{tpu_custom_call.1} parent=91 // pred_check
          %p801 = pneg %p719
        $region114: #{tpu_custom_call.1} parent=91 // pred_check_branch
          %803 = sbr.rel (%p801) target = $region116
        $region115: #{tpu_custom_call.1} parent=91 // pred_region
          %s804 = smul.u32 %s48, 8
          %s805 = scalar_lea.vmem %s716, %s804
          %v806 = vld [vmem:[%s805] sm:$0xff]
          %v807 = vpack.c.bf16 %v806, %v806
          %v808 = vld [vmem:[%s634] sm:$0x1]
          %v809 = vld [vmem:[%s2] sm:$0xf]
          %v810 = vld [vmem:[%s2 + $0x4] sm:$0xf]
          %v811 = vld [vmem:[%s2 + $0x8] sm:$0xf]
          %v812 = vld [vmem:[%s2 + $0xc] sm:$0xf]
          %v813 = vld [vmem:[%s3] sm:$0x1]
          %v815 = vperm.slane %v813, 0
          %v821 = vunpack.c.l.b16 %v809
          %v822 = vunpack.c.l.b16 %v810
          %v823 = vunpack.c.l.b16 %v811
          %v824 = vunpack.c.l.b16 %v812
          %v825 = vpack.c.b16 %v822, %v821
          %v826 = vpack.c.b16 %v824, %v823
          %vm829 = vcmask 261120
          %v831 = vsel %vm829, %v807, 0
          %833 = vmatpush.bf16.msra.mxu0 0
          %834 = vmatpush.bf16.msra.mxu0 0
          %835 = vmatpush.bf16.msra.mxu0 0
          %836 = vmatpush.bf16.msra.mxu0 0
          %837 = vmatpush.bf16.msra.mxu0 0
          %838 = vmatpush.bf16.msra.mxu0 0
          %839 = vmatpush.bf16.msra.mxu0 %v826
          %840 = vmatpush.bf16.msra.mxu0 %v825
          %841 = vmatmul.bf16.gmra.mxu0 %v831
          %v842 = vpop.f32.mrf.mxu0
          %v843 = vadd.f32 %v815, %v842
          %v844 = vpop.f32.mrf.mxu0
          %845 = vdwg.mxu0
          %v846 = vmul.f32 %v843, 0.35355338
          %v847 = vpack.c.bf16 %v846, %v846
          %v848 = vld [vmem:[#allocation2] sm:$0xf]
          %v849 = vld [vmem:[#allocation3] sm:$0xf]
          %v851 = vperm.slane %v808, 0
          %vm853 = vcmask 64512
          %v855 = vsel %vm853, %v847, 0
          %v858 = vsel %vm853, %v848, 0
          %860 = vmatpush.bf16.xpose.msra.mxu0 0
          %861 = vmatpush.bf16.xpose.msra.mxu0 0
          %862 = vmatpush.bf16.xpose.msra.mxu0 0
          %863 = vmatpush.bf16.xpose.msra.mxu0 0
          %864 = vmatpush.bf16.xpose.msra.mxu0 0
          %865 = vmatpush.bf16.xpose.msra.mxu0 0
          %866 = vmatpush.bf16.xpose.msra.mxu0 0
          %867 = vmatpush.bf16.xpose.msra.mxu0 %v858
          %868 = vmatmul.bf16.gmra.mxu0 %v855
          %v869 = vpop.f32.mrf.mxu0
          %v870 = vadd.f32 %v851, %v869
          %v871 = vpop.f32.mrf.mxu0
          %872 = vdwg.mxu0
          %v873 = vsel %vm853, %v870, -inf
          %874 = vmax.xlane.f32.xlu0 %v873
          %v875 = vpop.xlane.xlu0 %874
          %v876 = vsub.f32 %v870, %v875
          %v877 = vmul.f32 %v876, 1.442695
          %v878 = vpow.pop %v877
          %v879 = vsel %vm853, %v878, 0.0
          %880 = vadd.xlane.f32.xlu0 %v879
          %v881 = vpop.xlane.xlu0 %880
          %v882 = vrcp.pop %v881
          %v883 = vmul.f32 %v878, %v882
          %v884 = vpack.c.bf16 %v883, %v883
          %vm885 = vcmask 60416
          %886 = vst.msk [vmem:[%s712] sm:$0xf] %vm885, %v884
          %v888 = vsel %vm853, %v884, 0
          %vm890 = vcmask 1043456
          %v892 = vsel %vm890, %v849, 0
          %894 = vmatpush.bf16.msra.mxu0 0
          %895 = vmatpush.bf16.msra.mxu0 0
          %896 = vmatpush.bf16.msra.mxu0 0
          %897 = vmatpush.bf16.msra.mxu0 0
          %898 = vmatpush.bf16.msra.mxu0 0
          %899 = vmatpush.bf16.msra.mxu0 0
          %900 = vmatpush.bf16.msra.mxu0 0
          %901 = vmatpush.bf16.msra.mxu0 %v892
          %902 = vmatmul.bf16.gmra.mxu0 %v888
          %v903 = vpop.f32.mrf.mxu0
          %v904 = vadd.f32 0.0, %v903
          %v905 = vpop.f32.mrf.mxu0
          %906 = vdwg.mxu0
          %v907 = vpack.c.bf16 %v904, %v904
          %908 = vst.msk [vmem:[#allocation7] sm:$0xf] %vm885, %v907
          %v910 = vunpack.c.l.b16 %v847
          %v911 = vpack.c.b16 %v910, %v910
          %912 = vrot.lane.b32.xlu0 %v911, 120
          %v913 = vpop.permute.xlu0 %912
          %v915 = vunpack.c.l.b16 %v848
          %v916 = vpack.c.b16 %v915, %v915
          %917 = vrot.lane.b32.xlu0 %v916, 120
          %v918 = vpop.permute.xlu0 %917
          %v920 = vsel %vm853, %v913, 0
          %v923 = vsel %vm853, %v918, 0
          %925 = vmatpush.bf16.xpose.msra.mxu0 0
          %926 = vmatpush.bf16.xpose.msra.mxu0 0
          %927 = vmatpush.bf16.xpose.msra.mxu0 0
          %928 = vmatpush.bf16.xpose.msra.mxu0 0
          %929 = vmatpush.bf16.xpose.msra.mxu0 0
          %930 = vmatpush.bf16.xpose.msra.mxu0 0
          %931 = vmatpush.bf16.xpose.msra.mxu0 0
          %932 = vmatpush.bf16.xpose.msra.mxu0 %v923
          %933 = vmatmul.bf16.gmra.mxu0 %v920
          %v934 = vpop.f32.mrf.mxu0
          %v935 = vadd.f32 %v851, %v934
          %v936 = vpop.f32.mrf.mxu0
          %937 = vdwg.mxu0
          %v938 = vsel %vm853, %v935, -inf
          %939 = vmax.xlane.f32.xlu0 %v938
          %v940 = vpop.xlane.xlu0 %939
          %v941 = vsub.f32 %v935, %v940
          %v942 = vmul.f32 %v941, 1.442695
          %v943 = vpow.pop %v942
          %v944 = vsel %vm853, %v943, 0.0
          %945 = vadd.xlane.f32.xlu0 %v944
          %v946 = vpop.xlane.xlu0 %945
          %v947 = vrcp.pop %v946
          %v948 = vmul.f32 %v943, %v947
          %v949 = vpack.c.bf16 %v948, %v948
          %s950 = scalar_lea.vmem %s712, 4 [#allocation17]
          %951 = vst.msk [vmem:[%s950] sm:$0xf] %vm885, %v949
          %v953 = vunpack.c.l.b16 %v849
          %v954 = vpack.c.b16 %v953, %v953
          %955 = vrot.lane.b32.xlu0 %v954, 120
          %v956 = vpop.permute.xlu0 %955
          %v958 = vsel %vm853, %v949, 0
          %v961 = vsel %vm890, %v956, 0
          %963 = vmatpush.bf16.msra.mxu0 0
          %964 = vmatpush.bf16.msra.mxu0 0
          %965 = vmatpush.bf16.msra.mxu0 0
          %966 = vmatpush.bf16.msra.mxu0 0
          %967 = vmatpush.bf16.msra.mxu0 0
          %968 = vmatpush.bf16.msra.mxu0 0
          %969 = vmatpush.bf16.msra.mxu0 0
          %970 = vmatpush.bf16.msra.mxu0 %v961
          %971 = vmatmul.bf16.gmra.mxu0 %v958
          %v972 = vpop.f32.mrf.mxu0
          %v973 = vadd.f32 0.0, %v972
          %v974 = vpop.f32.mrf.mxu0
          %975 = vdwg.mxu0
          %v976 = vpack.c.bf16 %v973, %v973
          %978 = vrot.lane.b32.xlu0 %v976, 8
          %v979 = vpop.permute.xlu0 %978
          %vm981 = vcmask 126016
          %982 = vst.msk [vmem:[#allocation7] sm:$0xf] %vm981, %v979
          %983 = vrot.lane.b32.xlu0 %v911, 112
          %v984 = vpop.permute.xlu0 %983
          %985 = vrot.lane.b32.xlu0 %v916, 112
          %v986 = vpop.permute.xlu0 %985
          %v988 = vsel %vm853, %v984, 0
          %v991 = vsel %vm853, %v986, 0
          %993 = vmatpush.bf16.xpose.msra.mxu0 0
          %994 = vmatpush.bf16.xpose.msra.mxu0 0
          %995 = vmatpush.bf16.xpose.msra.mxu0 0
          %996 = vmatpush.bf16.xpose.msra.mxu0 0
          %997 = vmatpush.bf16.xpose.msra.mxu0 0
          %998 = vmatpush.bf16.xpose.msra.mxu0 0
          %999 = vmatpush.bf16.xpose.msra.mxu0 0
          %1000 = vmatpush.bf16.xpose.msra.mxu0 %v991
          %1001 = vmatmul.bf16.gmra.mxu0 %v988
          %v1002 = vpop.f32.mrf.mxu0
          %v1003 = vadd.f32 %v851, %v1002
          %v1004 = vpop.f32.mrf.mxu0
          %1005 = vdwg.mxu0
          %v1006 = vsel %vm853, %v1003, -inf
          %1007 = vmax.xlane.f32.xlu0 %v1006
          %v1008 = vpop.xlane.xlu0 %1007
          %v1009 = vsub.f32 %v1003, %v1008
          %v1010 = vmul.f32 %v1009, 1.442695
          %v1011 = vpow.pop %v1010
          %v1012 = vsel %vm853, %v1011, 0.0
          %1013 = vadd.xlane.f32.xlu0 %v1012
          %v1014 = vpop.xlane.xlu0 %1013
          %v1015 = vrcp.pop %v1014
          %v1016 = vmul.f32 %v1011, %v1015
          %v1017 = vpack.c.bf16 %v1016, %v1016
          %s1018 = scalar_lea.vmem %s712, 8 [#allocation17]
          %1019 = vst.msk [vmem:[%s1018] sm:$0xf] %vm885, %v1017
          %1020 = vrot.lane.b32.xlu0 %v954, 112
          %v1021 = vpop.permute.xlu0 %1020
          %v1023 = vsel %vm853, %v1017, 0
          %v1026 = vsel %vm890, %v1021, 0
          %1028 = vmatpush.bf16.msra.mxu0 0
          %1029 = vmatpush.bf16.msra.mxu0 0
          %1030 = vmatpush.bf16.msra.mxu0 0
          %1031 = vmatpush.bf16.msra.mxu0 0
          %1032 = vmatpush.bf16.msra.mxu0 0
          %1033 = vmatpush.bf16.msra.mxu0 0
          %1034 = vmatpush.bf16.msra.mxu0 0
          %1035 = vmatpush.bf16.msra.mxu0 %v1026
          %1036 = vmatmul.bf16.gmra.mxu0 %v1023
          %v1037 = vpop.f32.mrf.mxu0
          %v1038 = vadd.f32 0.0, %v1037
          %v1039 = vpop.f32.mrf.mxu0
          %1040 = vdwg.mxu0
          %v1041 = vpack.c.bf16 %v1038, %v1038
          %1043 = vrot.lane.b32.xlu0 %v1041, 16
          %v1044 = vpop.permute.xlu0 %1043
          %vm1046 = vcmask 191616
          %1047 = vst.msk [vmem:[#allocation7] sm:$0xf] %vm1046, %v1044
          %1048 = vrot.lane.b32.xlu0 %v911, 104
          %v1049 = vpop.permute.xlu0 %1048
          %1050 = vrot.lane.b32.xlu0 %v916, 104
          %v1051 = vpop.permute.xlu0 %1050
          %v1053 = vsel %vm853, %v1049, 0
          %v1056 = vsel %vm853, %v1051, 0
          %1058 = vmatpush.bf16.xpose.msra.mxu0 0
          %1059 = vmatpush.bf16.xpose.msra.mxu0 0
          %1060 = vmatpush.bf16.xpose.msra.mxu0 0
          %1061 = vmatpush.bf16.xpose.msra.mxu0 0
          %1062 = vmatpush.bf16.xpose.msra.mxu0 0
          %1063 = vmatpush.bf16.xpose.msra.mxu0 0
          %1064 = vmatpush.bf16.xpose.msra.mxu0 0
          %1065 = vmatpush.bf16.xpose.msra.mxu0 %v1056
          %1066 = vmatmul.bf16.gmra.mxu0 %v1053
          %v1067 = vpop.f32.mrf.mxu0
          %v1068 = vadd.f32 %v851, %v1067
          %v1069 = vpop.f32.mrf.mxu0
          %1070 = vdwg.mxu0
          %v1071 = vsel %vm853, %v1068, -inf
          %1072 = vmax.xlane.f32.xlu0 %v1071
          %v1073 = vpop.xlane.xlu0 %1072
          %v1074 = vsub.f32 %v1068, %v1073
          %v1075 = vmul.f32 %v1074, 1.442695
          %v1076 = vpow.pop %v1075
          %v1077 = vsel %vm853, %v1076, 0.0
          %1078 = vadd.xlane.f32.xlu0 %v1077
          %v1079 = vpop.xlane.xlu0 %1078
          %v1080 = vrcp.pop %v1079
          %v1081 = vmul.f32 %v1076, %v1080
          %v1082 = vpack.c.bf16 %v1081, %v1081
          %s1083 = scalar_lea.vmem %s712, 12 [#allocation17]
          %1084 = vst.msk [vmem:[%s1083] sm:$0xf] %vm885, %v1082
          %1085 = vrot.lane.b32.xlu0 %v954, 104
          %v1086 = vpop.permute.xlu0 %1085
          %v1088 = vsel %vm853, %v1082, 0
          %v1091 = vsel %vm890, %v1086, 0
          %1093 = vmatpush.bf16.msra.mxu0 0
          %1094 = vmatpush.bf16.msra.mxu0 0
          %1095 = vmatpush.bf16.msra.mxu0 0
          %1096 = vmatpush.bf16.msra.mxu0 0
          %1097 = vmatpush.bf16.msra.mxu0 0
          %1098 = vmatpush.bf16.msra.mxu0 0
          %1099 = vmatpush.bf16.msra.mxu0 0
          %1100 = vmatpush.bf16.msra.mxu0 %v1091
          %1101 = vmatmul.bf16.gmra.mxu0 %v1088
          %v1102 = vpop.f32.mrf.mxu0
          %v1103 = vadd.f32 0.0, %v1102
          %v1104 = vpop.f32.mrf.mxu0
          %1105 = vdwg.mxu0
          %v1106 = vpack.c.bf16 %v1103, %v1103
          %1108 = vrot.lane.b32.xlu0 %v1106, 24
          %v1109 = vpop.permute.xlu0 %1108
          %vm1111 = vcmask 257216
          %1112 = vst.msk [vmem:[#allocation7] sm:$0xf] %vm1111, %v1109
          %v1113 = vld [vmem:[#allocation7] sm:$0xf]
          %v1114 = vld [vmem:[#allocation13] sm:$0xf]
          %v1115 = vld [vmem:[#allocation13 + $0x4] sm:$0xf]
          %v1116 = vld [vmem:[#allocation13 + $0x8] sm:$0xf]
          %v1117 = vld [vmem:[#allocation13 + $0xc] sm:$0xf]
          %v1118 = vld [vmem:[%s9] sm:$0x1]
          %v1120 = vperm.slane %v1118, 0
          %v1126 = vunpack.c.l.b16 %v1114
          %v1127 = vunpack.c.l.b16 %v1115
          %v1128 = vunpack.c.l.b16 %v1116
          %v1129 = vunpack.c.l.b16 %v1117
          %v1130 = vpack.c.b16 %v1127, %v1126
          %v1131 = vpack.c.b16 %v1129, %v1128
          %v1135 = vsel %vm829, %v1113, 0
          %1137 = vmatpush.bf16.msra.mxu0 0
          %1138 = vmatpush.bf16.msra.mxu0 0
          %1139 = vmatpush.bf16.msra.mxu0 0
          %1140 = vmatpush.bf16.msra.mxu0 0
          %1141 = vmatpush.bf16.msra.mxu0 0
          %1142 = vmatpush.bf16.msra.mxu0 0
          %1143 = vmatpush.bf16.msra.mxu0 %v1131
          %1144 = vmatpush.bf16.msra.mxu0 %v1130
          %1145 = vmatmul.bf16.gmra.mxu0 %v1135
          %v1146 = vpop.f32.mrf.mxu0
          %v1147 = vadd.f32 %v1120, %v1146
          %v1148 = vpop.f32.mrf.mxu0
          %1149 = vdwg.mxu0
          %v1150 = vadd.f32 %v806, %v1147
          %v1151 = vld [vmem:[%s10] sm:$0x1]
          %v1152 = vld [vmem:[%s11] sm:$0x1]
          %v1153 = vsel %vm829, %v1150, 0.0
          %1154 = vadd.xlane.f32.xlu0 %v1153
          %v1155 = vpop.xlane.xlu0 %1154
          %v1156 = vrcp.pop 32.0
          %v1157 = vmul.f32 32.0, %v1156
          %v1158 = vsub.f32 1.0, %v1157
          %v1159 = vmul.f32 %v1156, %v1158
          %v1160 = vadd.f32 %v1156, %v1159
          %vm1161 = vweird.f32 %v1156
          %v1162 = vsel %vm1161, %v1156, %v1160
          %v1163 = vmul.f32 %v1155, %v1162
          %v1164 = vsub.f32 %v1150, %v1163
          %v1165 = vmul.f32 %v1164, %v1164
          %v1166 = vsel %vm829, %v1165, 0.0
          %1167 = vadd.xlane.f32.xlu0 %v1166
          %v1168 = vpop.xlane.xlu0 %1167
          %v1169 = vmul.f32 %v1168, %v1162
          %v1170 = vadd.f32 %v1169, 1e-12
          %v1171 = vrsqrt.pop %v1170
          %v1172 = vmul.f32 %v1171, %v1170
          %v1173 = vmul.f32 %v1172, %v1171
          %v1174 = vmul.f32 0.5, %v1173
          %v1175 = vsub.f32 1.5, %v1174
          %v1176 = vmul.f32 %v1171, %v1175
          %vm1177 = vweird.f32 %v1170
          %vm1178 = vweird.f32 %v1171
          %vm1179 = vmor %vm1177, %vm1178
          %v1180 = vsel %vm1179, %v1171, %v1176
          %v1181 = vmul.f32 %v1164, %v1180
          %v1183 = vperm.slane %v1151, 0
          %v1185 = vmul.f32 %v1181, %v1183
          %v1187 = vperm.slane %v1152, 0
          %v1189 = vadd.f32 %v1185, %v1187
          %1190 = vst.msk [vmem:[#allocation4] sm:$0xff] %vm829, %v1189
          %v1191 = vpack.c.bf16 %v1189, %v1189
          %vm1192 = vcmask 257024
          %1193 = vst.msk [vmem:[#allocation5] sm:$0xf] %vm1192, %v1191
          %1194 = vst.msk [vmem:[#allocation6] sm:$0xff] %vm829, 0.0
        $region116: #{tpu_custom_call.1} parent=91 // pred_fallthru
          _
        %v1195 = vld [vmem:[#allocation5] sm:$0xf]
        %v1196 = vld [vmem:[#allocation14] sm:$0xf]
        %v1197 = vld [vmem:[#allocation14 + $0x4] sm:$0xf]
        %v1198 = vld [vmem:[#allocation14 + $0x8] sm:$0xf]
        %v1199 = vld [vmem:[#allocation14 + $0xc] sm:$0xf]
        %v1200 = vld [vmem:[%s13] sm:$0x1]
        %v1202 = vperm.slane %v1200, 0
        %v1208 = vunpack.c.l.b16 %v1196
        %v1209 = vunpack.c.l.b16 %v1197
        %v1210 = vunpack.c.l.b16 %v1198
        %v1211 = vunpack.c.l.b16 %v1199
        %v1212 = vpack.c.b16 %v1209, %v1208
        %v1213 = vpack.c.b16 %v1211, %v1210
        %vm1216 = vcmask 261120
        %v1218 = vsel %vm1216, %v1195, 0
        %1220 = vmatpush.bf16.msra.mxu0 0
        %1221 = vmatpush.bf16.msra.mxu0 0
        %1222 = vmatpush.bf16.msra.mxu0 0
        %1223 = vmatpush.bf16.msra.mxu0 0
        %1224 = vmatpush.bf16.msra.mxu0 0
        %1225 = vmatpush.bf16.msra.mxu0 0
        %1226 = vmatpush.bf16.msra.mxu0 %v1213
        %1227 = vmatpush.bf16.msra.mxu0 %v1212
        %1228 = vmatmul.bf16.gmra.mxu0 %v1218
        %v1229 = vpop.f32.mrf.mxu0
        %v1230 = vadd.f32 %v1202, %v1229
        %v1231 = vpop.f32.mrf.mxu0
        %1232 = vdwg.mxu0
        %v1233 = vmul.f32 %v1230, %v1230
        %v1234 = vmul.f32 %v1230, %v1233
        %v1235 = vmul.f32 %v1234, 0.044715
        %v1236 = vadd.f32 %v1230, %v1235
        %v1237 = vmul.f32 %v1236, 0.7978846
        %v1238 = vtanh.pop %v1237
        %v1239 = vadd.f32 %v1238, 1.0
        %v1240 = vmul.f32 %v1239, 0.5
        %v1241 = vmul.f32 %v1230, %v1240
        %v1242 = vld [vmem:[#allocation6] sm:$0xff]
        %v1243 = vpack.c.bf16 %v1241, %v1241
        %v1244 = vld [vmem:[%s14] sm:$0xf]
        %v1245 = vld [vmem:[%s14 + $0x4] sm:$0xf]
        %v1246 = vld [vmem:[%s14 + $0x8] sm:$0xf]
        %v1247 = vld [vmem:[%s14 + $0xc] sm:$0xf]
        %v1248 = vld [vmem:[%s14 + $0x10] sm:$0xf]
        %v1249 = vld [vmem:[%s14 + $0x14] sm:$0xf]
        %v1250 = vld [vmem:[%s14 + $0x18] sm:$0xf]
        %v1251 = vld [vmem:[%s14 + $0x1c] sm:$0xf]
        %v1260 = vunpack.c.l.b16 %v1244
        %v1261 = vunpack.c.l.b16 %v1245
        %v1262 = vunpack.c.l.b16 %v1246
        %v1263 = vunpack.c.l.b16 %v1247
        %v1264 = vunpack.c.l.b16 %v1248
        %v1265 = vunpack.c.l.b16 %v1249
        %v1266 = vunpack.c.l.b16 %v1250
        %v1267 = vunpack.c.l.b16 %v1251
        %v1268 = vpack.c.b16 %v1261, %v1260
        %v1269 = vpack.c.b16 %v1263, %v1262
        %v1270 = vpack.c.b16 %v1265, %v1264
        %v1271 = vpack.c.b16 %v1267, %v1266
        %vm1276 = vcmask 523264
        %v1278 = vsel %vm1276, %v1243, 0
        %1280 = vmatpush.bf16.msra.mxu0 0
        %1281 = vmatpush.bf16.msra.mxu0 0
        %1282 = vmatpush.bf16.msra.mxu0 0
        %1283 = vmatpush.bf16.msra.mxu0 0
        %1284 = vmatpush.bf16.msra.mxu0 %v1271
        %1285 = vmatpush.bf16.msra.mxu0 %v1270
        %1286 = vmatpush.bf16.msra.mxu0 %v1269
        %1287 = vmatpush.bf16.msra.mxu0 %v1268
        %1288 = vmatmul.bf16.gmra.mxu0 %v1278
        %v1289 = vpop.f32.mrf.mxu0
        %v1290 = vadd.f32 0.0, %v1289
        %v1291 = vpop.f32.mrf.mxu0
        %1292 = vdwg.mxu0
        %v1293 = vadd.f32 %v1242, %v1290
        %1294 = vst.msk [vmem:[#allocation6] sm:$0xff] %vm1216, %v1293
        // Predicated region
        $region117: #{tpu_custom_call.1} parent=91 // pred_check
          %p1295 = pneg %p719
        $region118: #{tpu_custom_call.1} parent=91 // pred_check_branch
          %1297 = sbr.rel (%p1295) target = $region120
        $region119: #{tpu_custom_call.1} parent=91 // pred_region
          %v1298 = vld [vmem:[#allocation4] sm:$0xff]
          %v1299 = vld [vmem:[#allocation6] sm:$0xff]
          %v1300 = vadd.f32 %v1298, %v1299
          %v1301 = vld [vmem:[%s15] sm:$0x1]
          %v1303 = vperm.slane %v1301, 0
          %v1305 = vadd.f32 %v1300, %v1303
          %v1306 = vld [vmem:[%s16] sm:$0x1]
          %v1307 = vld [vmem:[%s17] sm:$0x1]
          %v1308 = vsel %vm1216, %v1305, 0.0
          %1309 = vadd.xlane.f32.xlu0 %v1308
          %v1310 = vpop.xlane.xlu0 %1309
          %v1311 = vrcp.pop 32.0
          %v1312 = vmul.f32 32.0, %v1311
          %v1313 = vsub.f32 1.0, %v1312
          %v1314 = vmul.f32 %v1311, %v1313
          %v1315 = vadd.f32 %v1311, %v1314
          %vm1316 = vweird.f32 %v1311
          %v1317 = vsel %vm1316, %v1311, %v1315
          %v1318 = vmul.f32 %v1310, %v1317
          %v1319 = vsub.f32 %v1305, %v1318
          %v1320 = vmul.f32 %v1319, %v1319
          %v1321 = vsel %vm1216, %v1320, 0.0
          %1322 = vadd.xlane.f32.xlu0 %v1321
          %v1323 = vpop.xlane.xlu0 %1322
          %v1324 = vmul.f32 %v1323, %v1317
          %v1325 = vadd.f32 %v1324, 1e-12
          %v1326 = vrsqrt.pop %v1325
          %v1327 = vmul.f32 %v1326, %v1325
          %v1328 = vmul.f32 %v1327, %v1326
          %v1329 = vmul.f32 0.5, %v1328
          %v1330 = vsub.f32 1.5, %v1329
          %v1331 = vmul.f32 %v1326, %v1330
          %vm1332 = vweird.f32 %v1325
          %vm1333 = vweird.f32 %v1326
          %vm1334 = vmor %vm1332, %vm1333
          %v1335 = vsel %vm1334, %v1326, %v1331
          %v1336 = vmul.f32 %v1319, %v1335
          %v1338 = vperm.slane %v1306, 0
          %v1340 = vmul.f32 %v1336, %v1338
          %v1342 = vperm.slane %v1307, 0
          %v1344 = vadd.f32 %v1340, %v1342
          %1345 = vst.msk [vmem:[%s705] sm:$0xff] %vm1216, %v1344
        $region120: #{tpu_custom_call.1} parent=91 // pred_fallthru
          _
        %s1346 = sand.u32 %s459, 1
        %s1347 = scalar_lea.sflag [#allocation10], %s1346
        %s1348 = sand.u32 %s459, 1
        %s1349 = smul.addr %s1348, 8
        %s1350 = scalar_lea.vmem [#allocation16], %s1349
        %s1351 = sand.u32 %s487, 1
        %s1352 = scalar_lea.sflag [#allocation18], %s1351
        %s1353 = sand.u32 %s487, 1
        %s1354 = smul.addr %s1353, 16
        %s1355 = scalar_lea.vmem [#allocation17], %s1354
        // Predicated region
        $region121: #{tpu_custom_call.1} parent=91 // pred_check
          %p1356 = pneg %p469
        $region122: #{tpu_custom_call.1} parent=91 // pred_check_branch
          %1358 = sbr.rel (%p1356) target = $region124
        $region123: #{tpu_custom_call.1} parent=91 // pred_region
          %1360 = vsyncadd %s1347, 0
          %s1361 = sadd.s32 %s48, %s47
          %s1362 = smul.addr %s1361, 8
          %s1363 = scalar_lea.hbm %s18, %s1362
          %s1365 = sshll.u32 %s1350, 4
          %s1366 = int_to_ptr.vmem [resolvable:$true] %s1365
          %s1367 = sshll.u32 %s1363, 4
          %s1368 = int_to_ptr.hbm [resolvable:$true] %s1367
          %1370 = dma.vmem_to_hbm [thread:$0]  %s1366, 128, %s1368, %s1347
        $region124: #{tpu_custom_call.1} parent=91 // pred_fallthru
          _
        // Predicated region
        $region125: #{tpu_custom_call.1} parent=91 // pred_check
          %p1371 = pneg %p497
        $region126: #{tpu_custom_call.1} parent=91 // pred_check_branch
          %1373 = sbr.rel (%p1371) target = $region128
        $region127: #{tpu_custom_call.1} parent=91 // pred_region
          %1375 = vsyncadd %s1352, 0
          %s1376 = smul.addr %s47, 4
          %s1377 = sadd.s32 %s48, %s1376
          %s1378 = smul.addr %s1377, 4
          %s1379 = scalar_lea.hbm %s19, %s1378
          %s1380 = sshll.u32 %s1355, 4
          %s1381 = int_to_ptr.vmem [resolvable:$true] %s1380
          %s1382 = sshll.u32 %s1379, 4
          %s1383 = int_to_ptr.hbm [resolvable:$true] %s1382
          %1388 = dma.vmem_to_hbm [thread:$0]  %s1381, 256, %s1383, %s1352, 64, 64, 4
        $region128: #{tpu_custom_call.1} parent=91 // pred_fallthru
          _
      $region92: #{tpu_custom_call.1} parent=5 // pred_fallthru
        _
      %p1389 = scmp.le.s32.totalorder 2, %s37
      // Predicated region
      $region129: #{tpu_custom_call.1} parent=5 // pred_check
        %p1390 = pneg %p1389
      $region130: #{tpu_custom_call.1} parent=5 // pred_check_branch
        %1392 = sbr.rel (%p1390) target = $region132
      $region131: #{tpu_custom_call.1} parent=5 // pred_region
        %s1393 = ssub.s32 %s37, 2
        // Predicated region
        $region133: #{tpu_custom_call.1} parent=131 // pred_check
          %p1394 = pneg %p475
        $region134: #{tpu_custom_call.1} parent=131 // pred_check_branch
          %1396 = sbr.rel (%p1394) target = $region136
        $region135: #{tpu_custom_call.1} parent=131 // pred_region
          %s1397 = sand.u32 %s460, 1
          %s1398 = scalar_lea.sflag [#allocation10], %s1397
          %s1399 = sand.u32 %s460, 1
          %s1400 = smul.addr %s1399, 8
          %s1401 = scalar_lea.vmem [#allocation16], %s1400
          %1403 = dma.done %s1398, 128
        $region136: #{tpu_custom_call.1} parent=131 // pred_fallthru
          _
        // Predicated region
        $region137: #{tpu_custom_call.1} parent=131 // pred_check
          %p1404 = pneg %p503
        $region138: #{tpu_custom_call.1} parent=131 // pred_check_branch
          %1406 = sbr.rel (%p1404) target = $region140
        $region139: #{tpu_custom_call.1} parent=131 // pred_region
          %s1407 = sand.u32 %s488, 1
          %s1408 = scalar_lea.sflag [#allocation18], %s1407
          %s1409 = sand.u32 %s488, 1
          %s1410 = smul.addr %s1409, 16
          %s1411 = scalar_lea.vmem [#allocation17], %s1410
          %1413 = dma.done %s1408, 256
        $region140: #{tpu_custom_call.1} parent=131 // pred_fallthru
          _
      $region132: #{tpu_custom_call.1} parent=5 // pred_fallthru
        _
    $region6: #{tpu_custom_call.1} parent=1 // loop_footer
      %s41 = sadd.s32 1, %s37
    $region7: #{tpu_custom_call.1} parent=1 // loop_footer_branch
      %36 = sbr.rel target = $region3
    $region8: #{tpu_custom_call.1} parent=1 // loop_exit
      _
    %1414 = vsyncpa [#allocation9], 1
    %s1415 = scalar_lea.sflag [#allocation9], 1
    %1416 = vsyncpa %s1415, 1
    %1417 = vsyncpa [#allocation12], 1
    %1418 = vsyncpa [#allocation15], 1
    %1419 = vsyncpa [#allocation10], 1
    %s1420 = scalar_lea.sflag [#allocation10], 1
    %1421 = vsyncpa %s1420, 1
    %1422 = vsyncpa [#allocation18], 1
    %s1423 = scalar_lea.sflag [#allocation18], 1
    %1424 = vsyncpa %s1423, 1

// kernel: tpu_custom_call.1
$region0: #{tpu_custom_call.1}
  #allocation0 [shape = 'u32[]', space=smem, size = 0x4, offset = 0x4, fixed_abs, tag = 'smem constant byte address 0x4 - core index']
  #allocation1 [shape = 'u32[72,128]{1,0:T(1,128)}', space=vmem, size = 0x9000, scoped, tag = 'internal scratch']
  #allocation2 [shape = 'bf16[8,32]{1,0:T(8,128)(2,1)}', space=vmem, size = 0x800, scoped, tag = 'scratch operand']
  #allocation3 [shape = 'bf16[8,32]{1,0:T(8,128)(2,1)}', space=vmem, size = 0x800, scoped, tag = 'scratch operand']
  #allocation4 [shape = 'f32[8,32]{1,0:T(8,128)}', space=vmem, size = 0x1000, scoped, tag = 'scratch operand']
  #allocation5 [shape = 'bf16[8,32]{1,0:T(8,128)(2,1)}', space=vmem, size = 0x800, scoped, tag = 'scratch operand']
  #allocation6 [shape = 'f32[8,32]{1,0:T(8,128)}', space=vmem, size = 0x1000, scoped, tag = 'scratch operand']
  #allocation7 [shape = 'bf16[8,32]{1,0:T(8,128)(2,1)}', space=vmem, size = 0x800, scoped, tag = 'scratch operand']
  %s0 = inlined_call_operand.vmem [shape: f32[2,8,32], index: 0, kind: input, shape index: {}]
  %s1 = inlined_call_operand.hbm [shape: f32[2,1,8], index: 1, kind: input, shape index: {}]
  %s2 = inlined_call_operand.vmem [shape: bf16[32,32], index: 2, kind: input, shape index: {}]
  %s3 = inlined_call_operand.vmem [shape: f32[1,32], index: 3, kind: input, shape index: {}]
  %s4 = inlined_call_operand.vmem [shape: bf16[32,32], index: 4, kind: input, shape index: {}]
  %s5 = inlined_call_operand.vmem [shape: f32[1,32], index: 5, kind: input, shape index: {}]
  %s6 = inlined_call_operand.hbm [shape: bf16[32,32], index: 6, kind: input, shape index: {}]
  %s7 = inlined_call_operand.vmem [shape: f32[1,32], index: 7, kind: input, shape index: {}]
  %s8 = inlined_call_operand.hbm [shape: bf16[32,32], index: 8, kind: input, shape index: {}]
  %s9 = inlined_call_operand.vmem [shape: f32[1,32], index: 9, kind: input, shape index: {}]
  %s10 = inlined_call_operand.vmem [shape: f32[1,32], index: 10, kind: input, shape index: {}]
  %s11 = inlined_call_operand.vmem [shape: f32[1,32], index: 11, kind: input, shape index: {}]
  %s12 = inlined_call_operand.hbm [shape: bf16[32,64], index: 12, kind: input, shape index: {}]
  %s13 = inlined_call_operand.vmem [shape: f32[1,64], index: 13, kind: input, shape index: {}]
  %s14 = inlined_call_operand.vmem [shape: bf16[64,32], index: 14, kind: input, shape index: {}]
  %s15 = inlined_call_operand.vmem [shape: f32[1,32], index: 15, kind: input, shape index: {}]
  %s16 = inlined_call_operand.vmem [shape: f32[1,32], index: 16, kind: input, shape index: {}]
  %s17 = inlined_call_operand.vmem [shape: f32[1,32], index: 17, kind: input, shape index: {}]
  %s18 = inlined_call_operand.hbm [shape: f32[2,8,32], index: 18, kind: output, shape index: {0}]
  %s19 = inlined_call_operand.hbm [shape: bf16[2,4,8,8], index: 19, kind: output, shape index: {1}]
  %20 = xla_tuple %s18, %s19
  %s21 = sld [smem:[#allocation0]]
  $region141: #{tpu_custom_call.1} parent=0
    _
  %s23 = ssub.s32 1, %s21
  %s24 = scalar_select 0, %s23, %s21
  $region1: #{tpu_custom_call.1} parent=0
    #allocation8 [shape = 'u8[1024]{0}', space=vmem, size = 0x400, scoped, tag = 'input window, operand 1']
    #allocation9 [shape = 's32[2]{0}', space=sflag, size = 0x8, scoped, tag = 'scoped memory for tpu_custom_call.1']
    #allocation10 [shape = 's32[2]{0}', space=sflag, size = 0x8, scoped, tag = 'scoped memory for tpu_custom_call.1']
    #allocation11 [shape = 'u8[8192]{0}', space=vmem, size = 0x2000, scoped, tag = 'input window, operand 6, single buffered']
    #allocation12 [shape = 's32[1]{0}', space=sflag, size = 0x4, scoped, tag = 'scoped memory for tpu_custom_call.1']
    #allocation13 [shape = 'u8[8192]{0}', space=vmem, size = 0x2000, scoped, tag = 'input window, operand 8, single buffered']
    #allocation14 [shape = 'u8[8192]{0}', space=vmem, size = 0x2000, scoped, tag = 'input window, operand 12, single buffered']
    #allocation15 [shape = 's32[1]{0}', space=sflag, size = 0x4, scoped, tag = 'scoped memory for tpu_custom_call.1']
    #allocation16 [shape = 'u8[8192]{0}', space=vmem, size = 0x2000, scoped, tag = 'output window, operand 0']
    #allocation17 [shape = 'u8[16384]{0}', space=vmem, size = 0x4000, scoped, tag = 'output window, operand 1']
    #allocation18 [shape = 's32[2]{0}', space=sflag, size = 0x8, scoped, tag = 'scoped memory for tpu_custom_call.1']
    %25 = vsyncpa [#allocation9], 0
    %s26 = scalar_lea.sflag [#allocation9], 1
    %27 = vsyncpa %s26, 0
    %28 = vsyncpa [#allocation12], 0
    %29 = vsyncpa [#allocation15], 0
    %30 = vsyncpa [#allocation10], 0
    %s31 = scalar_lea.sflag [#allocation10], 1
    %32 = vsyncpa %s31, 0
    %33 = vsyncpa [#allocation18], 0
    %s34 = scalar_lea.sflag [#allocation18], 1
    %35 = vsyncpa %s34, 0
    loop: start=0, step=1, limit=4
    $region2: #{tpu_custom_call.1} parent=1 // loop_pre_header
      _
    $region3: #{tpu_custom_call.1} parent=1 // loop_header
      %s37 = sphi 0, %s41
      %p38 = scmp.ge.s32.totalorder %s37, 4
      %s44 = sphi 0, %s63
      %s45 = sphi 0, %s59
      %s46 = sphi 0, %s55
      %s47 = sphi 0, %s44
      %s48 = sphi 0, %s45
      %s49 = sphi 0, %s46
      %s50 = sphi 0, %s47
      %s51 = sphi 0, %s48
      %s52 = sphi 0, %s49
      %s66 = sphi 0, %s68
      %s69 = sphi 0, %s66
      %s70 = sphi 0, %s69
      %s86 = sphi 0, %s70
      %s92 = sphi 0, %s94
      %s95 = sphi 0, %s92
      %s96 = sphi 0, %s95
      %s112 = sphi 0, %s96
      %s116 = sphi 0, %s116
      %s118 = sphi 0, %s116
      %s119 = sphi 0, %s118
      %s133 = sphi 0, %s119
      %s137 = sphi 0, %s137
      %s139 = sphi 0, %s137
      %s140 = sphi 0, %s139
      %s154 = sphi 0, %s140
      %s158 = sphi 0, %s158
      %s160 = sphi 0, %s158
      %s161 = sphi 0, %s160
      %s175 = sphi 0, %s161
      %s179 = sphi 0, %s179
      %s181 = sphi 0, %s179
      %s182 = sphi 0, %s181
      %s196 = sphi 0, %s182
      %s200 = sphi 0, %s200
      %s202 = sphi 0, %s200
      %s203 = sphi 0, %s202
      %s217 = sphi 0, %s203
      %s221 = sphi 0, %s221
      %s223 = sphi 0, %s221
      %s224 = sphi 0, %s223
      %s238 = sphi 0, %s224
      %s242 = sphi 0, %s242
      %s244 = sphi 0, %s242
      %s245 = sphi 0, %s244
      %s259 = sphi 0, %s245
      %s263 = sphi 0, %s263
      %s265 = sphi 0, %s263
      %s266 = sphi 0, %s265
      %s280 = sphi 0, %s266
      %s284 = sphi 0, %s284
      %s286 = sphi 0, %s284
      %s287 = sphi 0, %s286
      %s301 = sphi 0, %s287
      %s305 = sphi 0, %s305
      %s307 = sphi 0, %s305
      %s308 = sphi 0, %s307
      %s322 = sphi 0, %s308
      %s326 = sphi 0, %s326
      %s328 = sphi 0, %s326
      %s329 = sphi 0, %s328
      %s343 = sphi 0, %s329
      %s347 = sphi 0, %s347
      %s349 = sphi 0, %s347
      %s350 = sphi 0, %s349
      %s364 = sphi 0, %s350
      %s368 = sphi 0, %s368
      %s370 = sphi 0, %s368
      %s371 = sphi 0, %s370
      %s385 = sphi 0, %s371
      %s389 = sphi 0, %s389
      %s391 = sphi 0, %s389
      %s392 = sphi 0, %s391
      %s406 = sphi 0, %s392
      %s410 = sphi 0, %s410
      %s412 = sphi 0, %s410
      %s413 = sphi 0, %s412
      %s427 = sphi 0, %s413
      %s431 = sphi 0, %s431
      %s433 = sphi 0, %s431
      %s434 = sphi 0, %s433
      %s448 = sphi 0, %s434
      %s456 = sphi 0, %s458
      %s459 = sphi 0, %s456
      %s460 = sphi 0, %s459
      %s476 = sphi 0, %s460
      %s484 = sphi 0, %s486
      %s487 = sphi 0, %s484
      %s488 = sphi 0, %s487
      %s504 = sphi 0, %s488
    $region4: #{tpu_custom_call.1} parent=1 // loop_header_branch
      %40 = sbr.rel (%p38) target = $region8
    $region5: #{tpu_custom_call.1} parent=1 // loop_body
      %s42 = ssub.s32 %s37, 1
      %s43 = ssub.s32 %s37, 2
      %s53 = sadd.s32 1, %s46
      %p54 = scmp.ge.s32.totalorder %s53, 1
      %s55 = scalar_select %p54, 0, %s53
      %s56 = sadd.s32 1, %s45
      %s57 = scalar_select %p54, %s56, %s45
      %p58 = scmp.ge.s32.totalorder %s57, 1
      %s59 = scalar_select %p58, 0, %s57
      %s60 = sadd.s32 1, %s44
      %s61 = scalar_select %p58, %s60, %s44
      %p62 = scmp.ge.s32.totalorder %s61, 2
      %s63 = scalar_select %p62, 0, %s61
      %s64 = ssub.s32 %s44, %s63
      %p65 = scmp.eq.s32.totalorder %s64, 0
      %s67 = sadd.s32 %s66, 1
      %s68 = scalar_select %p65, %s66, %s67
      %p71 = pneg %p65
      %p72 = scmp.eq.s32.totalorder %s37, 1
      %p73 = por %p71, %p72
      %p74 = scmp.ne.s32.totalorder %s66, %s69
      %p75 = scmp.eq.s32.totalorder %s37, 0
      %p76 = por %p74, %p75
      %p77 = scmp.ne.s32.totalorder %s66, %s69
      %p78 = scmp.eq.s32.totalorder %s42, 1
      %p79 = por %p77, %p78
      %p80 = scmp.ne.s32.totalorder %s69, %s70
      %p81 = scmp.eq.s32.totalorder %s42, 0
      %p82 = por %p80, %p81
      %p83 = scmp.ne.s32.totalorder %s69, %s70
      %p84 = scmp.eq.s32.totalorder %s43, 1
      %p85 = por %p83, %p84
      %p87 = scmp.ne.s32.totalorder %s70, %s86
      %p88 = scmp.eq.s32.totalorder %s43, 0
      %p89 = por %p87, %p88
      %s90 = ssub.s32 %s44, %s63
      %p91 = scmp.eq.s32.totalorder %s90, 0
      %s93 = sadd.s32 %s92, 1
      %s94 = scalar_select %p91, %s92, %s93
      %p97 = pneg %p91
      %p98 = scmp.eq.s32.totalorder %s37, 1
      %p99 = por %p97, %p98
      %p100 = scmp.ne.s32.totalorder %s92, %s95
      %p101 = scmp.eq.s32.totalorder %s37, 0
      %p102 = por %p100, %p101
      %p103 = scmp.ne.s32.totalorder %s92, %s95
      %p104 = scmp.eq.s32.totalorder %s42, 1
      %p105 = por %p103, %p104
      %p106 = scmp.ne.s32.totalorder %s95, %s96
      %p107 = scmp.eq.s32.totalorder %s42, 0
      %p108 = por %p106, %p107
      %p109 = scmp.ne.s32.totalorder %s95, %s96
      %p110 = scmp.eq.s32.totalorder %s43, 1
      %p111 = por %p109, %p110
      %p113 = scmp.ne.s32.totalorder %s96, %s112
      %p114 = scmp.eq.s32.totalorder %s43, 0
      %p115 = por %p113, %p114
      %s117 = sadd.s32 %s116, 1
      %p120 = scmp.eq.s32.totalorder %s37, 1
      %p121 = scmp.ne.s32.totalorder %s116, %s118
      %p122 = scmp.eq.s32.totalorder %s37, 0
      %p123 = por %p121, %p122
      %p124 = scmp.ne.s32.totalorder %s116, %s118
      %p125 = scmp.eq.s32.totalorder %s42, 1
      %p126 = por %p124, %p125
      %p127 = scmp.ne.s32.totalorder %s118, %s119
      %p128 = scmp.eq.s32.totalorder %s42, 0
      %p129 = por %p127, %p128
      %p130 = scmp.ne.s32.totalorder %s118, %s119
      %p131 = scmp.eq.s32.totalorder %s43, 1
      %p132 = por %p130, %p131
      %p134 = scmp.ne.s32.totalorder %s119, %s133
      %p135 = scmp.eq.s32.totalorder %s43, 0
      %p136 = por %p134, %p135
      %s138 = sadd.s32 %s137, 1
      %p141 = scmp.eq.s32.totalorder %s37, 1
      %p142 = scmp.ne.s32.totalorder %s137, %s139
      %p143 = scmp.eq.s32.totalorder %s37, 0
      %p144 = por %p142, %p143
      %p145 = scmp.ne.s32.totalorder %s137, %s139
      %p146 = scmp.eq.s32.totalorder %s42, 1
      %p147 = por %p145, %p146
      %p148 = scmp.ne.s32.totalorder %s139, %s140
      %p149 = scmp.eq.s32.totalorder %s42, 0
      %p150 = por %p148, %p149
      %p151 = scmp.ne.s32.totalorder %s139, %s140
      %p152 = scmp.eq.s32.totalorder %s43, 1
      %p153 = por %p151, %p152
      %p155 = scmp.ne.s32.totalorder %s140, %s154
      %p156 = scmp.eq.s32.totalorder %s43, 0
      %p157 = por %p155, %p156
      %s159 = sadd.s32 %s158, 1
      %p162 = scmp.eq.s32.totalorder %s37, 1
      %p163 = scmp.ne.s32.totalorder %s158, %s160
      %p164 = scmp.eq.s32.totalorder %s37, 0
      %p165 = por %p163, %p164
      %p166 = scmp.ne.s32.totalorder %s158, %s160
      %p167 = scmp.eq.s32.totalorder %s42, 1
      %p168 = por %p166, %p167
      %p169 = scmp.ne.s32.totalorder %s160, %s161
      %p170 = scmp.eq.s32.totalorder %s42, 0
      %p171 = por %p169, %p170
      %p172 = scmp.ne.s32.totalorder %s160, %s161
      %p173 = scmp.eq.s32.totalorder %s43, 1
      %p174 = por %p172, %p173
      %p176 = scmp.ne.s32.totalorder %s161, %s175
      %p177 = scmp.eq.s32.totalorder %s43, 0
      %p178 = por %p176, %p177
      %s180 = sadd.s32 %s179, 1
      %p183 = scmp.eq.s32.totalorder %s37, 1
      %p184 = scmp.ne.s32.totalorder %s179, %s181
      %p185 = scmp.eq.s32.totalorder %s37, 0
      %p186 = por %p184, %p185
      %p187 = scmp.ne.s32.totalorder %s179, %s181
      %p188 = scmp.eq.s32.totalorder %s42, 1
      %p189 = por %p187, %p188
      %p190 = scmp.ne.s32.totalorder %s181, %s182
      %p191 = scmp.eq.s32.totalorder %s42, 0
      %p192 = por %p190, %p191
      %p193 = scmp.ne.s32.totalorder %s181, %s182
      %p194 = scmp.eq.s32.totalorder %s43, 1
      %p195 = por %p193, %p194
      %p197 = scmp.ne.s32.totalorder %s182, %s196
      %p198 = scmp.eq.s32.totalorder %s43, 0
      %p199 = por %p197, %p198
      %s201 = sadd.s32 %s200, 1
      %p204 = scmp.eq.s32.totalorder %s37, 1
      %p205 = scmp.ne.s32.totalorder %s200, %s202
      %p206 = scmp.eq.s32.totalorder %s37, 0
      %p207 = por %p205, %p206
      %p208 = scmp.ne.s32.totalorder %s200, %s202
      %p209 = scmp.eq.s32.totalorder %s42, 1
      %p210 = por %p208, %p209
      %p211 = scmp.ne.s32.totalorder %s202, %s203
      %p212 = scmp.eq.s32.totalorder %s42, 0
      %p213 = por %p211, %p212
      %p214 = scmp.ne.s32.totalorder %s202, %s203
      %p215 = scmp.eq.s32.totalorder %s43, 1
      %p216 = por %p214, %p215
      %p218 = scmp.ne.s32.totalorder %s203, %s217
      %p219 = scmp.eq.s32.totalorder %s43, 0
      %p220 = por %p218, %p219
      %s222 = sadd.s32 %s221, 1
      %p225 = scmp.eq.s32.totalorder %s37, 1
      %p226 = scmp.ne.s32.totalorder %s221, %s223
      %p227 = scmp.eq.s32.totalorder %s37, 0
      %p228 = por %p226, %p227
      %p229 = scmp.ne.s32.totalorder %s221, %s223
      %p230 = scmp.eq.s32.totalorder %s42, 1
      %p231 = por %p229, %p230
      %p232 = scmp.ne.s32.totalorder %s223, %s224
      %p233 = scmp.eq.s32.totalorder %s42, 0
      %p234 = por %p232, %p233
      %p235 = scmp.ne.s32.totalorder %s223, %s224
      %p236 = scmp.eq.s32.totalorder %s43, 1
      %p237 = por %p235, %p236
      %p239 = scmp.ne.s32.totalorder %s224, %s238
      %p240 = scmp.eq.s32.totalorder %s43, 0
      %p241 = por %p239, %p240
      %s243 = sadd.s32 %s242, 1
      %p246 = scmp.eq.s32.totalorder %s37, 1
      %p247 = scmp.ne.s32.totalorder %s242, %s244
      %p248 = scmp.eq.s32.totalorder %s37, 0
      %p249 = por %p247, %p248
      %p250 = scmp.ne.s32.totalorder %s242, %s244
      %p251 = scmp.eq.s32.totalorder %s42, 1
      %p252 = por %p250, %p251
      %p253 = scmp.ne.s32.totalorder %s244, %s245
      %p254 = scmp.eq.s32.totalorder %s42, 0
      %p255 = por %p253, %p254
      %p256 = scmp.ne.s32.totalorder %s244, %s245
      %p257 = scmp.eq.s32.totalorder %s43, 1
      %p258 = por %p256, %p257
      %p260 = scmp.ne.s32.totalorder %s245, %s259
      %p261 = scmp.eq.s32.totalorder %s43, 0
      %p262 = por %p260, %p261
      %s264 = sadd.s32 %s263, 1
      %p267 = scmp.eq.s32.totalorder %s37, 1
      %p268 = scmp.ne.s32.totalorder %s263, %s265
      %p269 = scmp.eq.s32.totalorder %s37, 0
      %p270 = por %p268, %p269
      %p271 = scmp.ne.s32.totalorder %s263, %s265
      %p272 = scmp.eq.s32.totalorder %s42, 1
      %p273 = por %p271, %p272
      %p274 = scmp.ne.s32.totalorder %s265, %s266
      %p275 = scmp.eq.s32.totalorder %s42, 0
      %p276 = por %p274, %p275
      %p277 = scmp.ne.s32.totalorder %s265, %s266
      %p278 = scmp.eq.s32.totalorder %s43, 1
      %p279 = por %p277, %p278
      %p281 = scmp.ne.s32.totalorder %s266, %s280
      %p282 = scmp.eq.s32.totalorder %s43, 0
      %p283 = por %p281, %p282
      %s285 = sadd.s32 %s284, 1
      %p288 = scmp.eq.s32.totalorder %s37, 1
      %p289 = scmp.ne.s32.totalorder %s284, %s286
      %p290 = scmp.eq.s32.totalorder %s37, 0
      %p291 = por %p289, %p290
      %p292 = scmp.ne.s32.totalorder %s284, %s286
      %p293 = scmp.eq.s32.totalorder %s42, 1
      %p294 = por %p292, %p293
      %p295 = scmp.ne.s32.totalorder %s286, %s287
      %p296 = scmp.eq.s32.totalorder %s42, 0
      %p297 = por %p295, %p296
      %p298 = scmp.ne.s32.totalorder %s286, %s287
      %p299 = scmp.eq.s32.totalorder %s43, 1
      %p300 = por %p298, %p299
      %p302 = scmp.ne.s32.totalorder %s287, %s301
      %p303 = scmp.eq.s32.totalorder %s43, 0
      %p304 = por %p302, %p303
      %s306 = sadd.s32 %s305, 1
      %p309 = scmp.eq.s32.totalorder %s37, 1
      %p310 = scmp.ne.s32.totalorder %s305, %s307
      %p311 = scmp.eq.s32.totalorder %s37, 0
      %p312 = por %p310, %p311
      %p313 = scmp.ne.s32.totalorder %s305, %s307
      %p314 = scmp.eq.s32.totalorder %s42, 1
      %p315 = por %p313, %p314
      %p316 = scmp.ne.s32.totalorder %s307, %s308
      %p317 = scmp.eq.s32.totalorder %s42, 0
      %p318 = por %p316, %p317
      %p319 = scmp.ne.s32.totalorder %s307, %s308
      %p320 = scmp.eq.s32.totalorder %s43, 1
      %p321 = por %p319, %p320
      %p323 = scmp.ne.s32.totalorder %s308, %s322
      %p324 = scmp.eq.s32.totalorder %s43, 0
      %p325 = por %p323, %p324
      %s327 = sadd.s32 %s326, 1
      %p330 = scmp.eq.s32.totalorder %s37, 1
      %p331 = scmp.ne.s32.totalorder %s326, %s328
      %p332 = scmp.eq.s32.totalorder %s37, 0
      %p333 = por %p331, %p332
      %p334 = scmp.ne.s32.totalorder %s326, %s328
      %p335 = scmp.eq.s32.totalorder %s42, 1
      %p336 = por %p334, %p335
      %p337 = scmp.ne.s32.totalorder %s328, %s329
      %p338 = scmp.eq.s32.totalorder %s42, 0
      %p339 = por %p337, %p338
      %p340 = scmp.ne.s32.totalorder %s328, %s329
      %p341 = scmp.eq.s32.totalorder %s43, 1
      %p342 = por %p340, %p341
      %p344 = scmp.ne.s32.totalorder %s329, %s343
      %p345 = scmp.eq.s32.totalorder %s43, 0
      %p346 = por %p344, %p345
      %s348 = sadd.s32 %s347, 1
      %p351 = scmp.eq.s32.totalorder %s37, 1
      %p352 = scmp.ne.s32.totalorder %s347, %s349
      %p353 = scmp.eq.s32.totalorder %s37, 0
      %p354 = por %p352, %p353
      %p355 = scmp.ne.s32.totalorder %s347, %s349
      %p356 = scmp.eq.s32.totalorder %s42, 1
      %p357 = por %p355, %p356
      %p358 = scmp.ne.s32.totalorder %s349, %s350
      %p359 = scmp.eq.s32.totalorder %s42, 0
      %p360 = por %p358, %p359
      %p361 = scmp.ne.s32.totalorder %s349, %s350
      %p362 = scmp.eq.s32.totalorder %s43, 1
      %p363 = por %p361, %p362
      %p365 = scmp.ne.s32.totalorder %s350, %s364
      %p366 = scmp.eq.s32.totalorder %s43, 0
      %p367 = por %p365, %p366
      %s369 = sadd.s32 %s368, 1
      %p372 = scmp.eq.s32.totalorder %s37, 1
      %p373 = scmp.ne.s32.totalorder %s368, %s370
      %p374 = scmp.eq.s32.totalorder %s37, 0
      %p375 = por %p373, %p374
      %p376 = scmp.ne.s32.totalorder %s368, %s370
      %p377 = scmp.eq.s32.totalorder %s42, 1
      %p378 = por %p376, %p377
      %p379 = scmp.ne.s32.totalorder %s370, %s371
      %p380 = scmp.eq.s32.totalorder %s42, 0
      %p381 = por %p379, %p380
      %p382 = scmp.ne.s32.totalorder %s370, %s371
      %p383 = scmp.eq.s32.totalorder %s43, 1
      %p384 = por %p382, %p383
      %p386 = scmp.ne.s32.totalorder %s371, %s385
      %p387 = scmp.eq.s32.totalorder %s43, 0
      %p388 = por %p386, %p387
      %s390 = sadd.s32 %s389, 1
      %p393 = scmp.eq.s32.totalorder %s37, 1
      %p394 = scmp.ne.s32.totalorder %s389, %s391
      %p395 = scmp.eq.s32.totalorder %s37, 0
      %p396 = por %p394, %p395
      %p397 = scmp.ne.s32.totalorder %s389, %s391
      %p398 = scmp.eq.s32.totalorder %s42, 1
      %p399 = por %p397, %p398
      %p400 = scmp.ne.s32.totalorder %s391, %s392
      %p401 = scmp.eq.s32.totalorder %s42, 0
      %p402 = por %p400, %p401
      %p403 = scmp.ne.s32.totalorder %s391, %s392
      %p404 = scmp.eq.s32.totalorder %s43, 1
      %p405 = por %p403, %p404
      %p407 = scmp.ne.s32.totalorder %s392, %s406
      %p408 = scmp.eq.s32.totalorder %s43, 0
      %p409 = por %p407, %p408
      %s411 = sadd.s32 %s410, 1
      %p414 = scmp.eq.s32.totalorder %s37, 1
      %p415 = scmp.ne.s32.totalorder %s410, %s412
      %p416 = scmp.eq.s32.totalorder %s37, 0
      %p417 = por %p415, %p416
      %p418 = scmp.ne.s32.totalorder %s410, %s412
      %p419 = scmp.eq.s32.totalorder %s42, 1
      %p420 = por %p418, %p419
      %p421 = scmp.ne.s32.totalorder %s412, %s413
      %p422 = scmp.eq.s32.totalorder %s42, 0
      %p423 = por %p421, %p422
      %p424 = scmp.ne.s32.totalorder %s412, %s413
      %p425 = scmp.eq.s32.totalorder %s43, 1
      %p426 = por %p424, %p425
      %p428 = scmp.ne.s32.totalorder %s413, %s427
      %p429 = scmp.eq.s32.totalorder %s43, 0
      %p430 = por %p428, %p429
      %s432 = sadd.s32 %s431, 1
      %p435 = scmp.eq.s32.totalorder %s37, 1
      %p436 = scmp.ne.s32.totalorder %s431, %s433
      %p437 = scmp.eq.s32.totalorder %s37, 0
      %p438 = por %p436, %p437
      %p439 = scmp.ne.s32.totalorder %s431, %s433
      %p440 = scmp.eq.s32.totalorder %s42, 1
      %p441 = por %p439, %p440
      %p442 = scmp.ne.s32.totalorder %s433, %s434
      %p443 = scmp.eq.s32.totalorder %s42, 0
      %p444 = por %p442, %p443
      %p445 = scmp.ne.s32.totalorder %s433, %s434
      %p446 = scmp.eq.s32.totalorder %s43, 1
      %p447 = por %p445, %p446
      %p449 = scmp.ne.s32.totalorder %s434, %s448
      %p450 = scmp.eq.s32.totalorder %s43, 0
      %p451 = por %p449, %p450
      %s452 = ssub.s32 %s44, %s63
      %s453 = ssub.s32 %s45, %s59
      %s454 = sor.u32 %s452, %s453
      %p455 = scmp.eq.s32.totalorder %s454, 0
      %s457 = sadd.s32 %s456, 1
      %s458 = scalar_select %p455, %s456, %s457
      %p461 = pneg %p455
      %p462 = scmp.eq.s32.totalorder %s37, 1
      %p463 = por %p461, %p462
      %p464 = scmp.ne.s32.totalorder %s456, %s459
      %p465 = scmp.eq.s32.totalorder %s37, 0
      %p466 = por %p464, %p465
      %p467 = scmp.ne.s32.totalorder %s456, %s459
      %p468 = scmp.eq.s32.totalorder %s42, 1
      %p469 = por %p467, %p468
      %p470 = scmp.ne.s32.totalorder %s459, %s460
      %p471 = scmp.eq.s32.totalorder %s42, 0
      %p472 = por %p470, %p471
      %p473 = scmp.ne.s32.totalorder %s459, %s460
      %p474 = scmp.eq.s32.totalorder %s43, 1
      %p475 = por %p473, %p474
      %p477 = scmp.ne.s32.totalorder %s460, %s476
      %p478 = scmp.eq.s32.totalorder %s43, 0
      %p479 = por %p477, %p478
      %s480 = ssub.s32 %s44, %s63
      %s481 = ssub.s32 %s45, %s59
      %s482 = sor.u32 %s480, %s481
      %p483 = scmp.eq.s32.totalorder %s482, 0
      %s485 = sadd.s32 %s484, 1
      %s486 = scalar_select %p483, %s484, %s485
      %p489 = pneg %p483
      %p490 = scmp.eq.s32.totalorder %s37, 1
      %p491 = por %p489, %p490
      %p492 = scmp.ne.s32.totalorder %s484, %s487
      %p493 = scmp.eq.s32.totalorder %s37, 0
      %p494 = por %p492, %p493
      %p495 = scmp.ne.s32.totalorder %s484, %s487
      %p496 = scmp.eq.s32.totalorder %s42, 1
      %p497 = por %p495, %p496
      %p498 = scmp.ne.s32.totalorder %s487, %s488
      %p499 = scmp.eq.s32.totalorder %s42, 0
      %p500 = por %p498, %p499
      %p501 = scmp.ne.s32.totalorder %s487, %s488
      %p502 = scmp.eq.s32.totalorder %s43, 1
      %p503 = por %p501, %p502
      %p505 = scmp.ne.s32.totalorder %s488, %s504
      %p506 = scmp.eq.s32.totalorder %s43, 0
      %p507 = por %p505, %p506
      %p508 = scmp.le.s32.totalorder 1, %s37
      %p509 = scmp.lt.s32.totalorder %s37, 3
      %p510 = pnand %p508, %p509
      %p511 = pneg %p510
      // Predicated region
      $region9: #{tpu_custom_call.1} parent=5 // pred_check
        _
      $region10: #{tpu_custom_call.1} parent=5 // pred_check_branch
        %513 = sbr.rel (%p510) target = $region12
      $region11: #{tpu_custom_call.1} parent=5 // pred_region
        %s514 = ssub.s32 %s37, 1
        // Predicated region
        $region13: #{tpu_custom_call.1} parent=11 // pred_check
          %p515 = pneg %p129
        $region14: #{tpu_custom_call.1} parent=11 // pred_check_branch
          %517 = sbr.rel (%p515) target = $region16
        $region15: #{tpu_custom_call.1} parent=11 // pred_region
          _
        $region16: #{tpu_custom_call.1} parent=11 // pred_fallthru
          _
        // Predicated region
        $region17: #{tpu_custom_call.1} parent=11 // pred_check
          %p518 = pneg %p150
        $region18: #{tpu_custom_call.1} parent=11 // pred_check_branch
          %520 = sbr.rel (%p518) target = $region20
        $region19: #{tpu_custom_call.1} parent=11 // pred_region
          _
        $region20: #{tpu_custom_call.1} parent=11 // pred_fallthru
          _
        // Predicated region
        $region21: #{tpu_custom_call.1} parent=11 // pred_check
          %p521 = pneg %p171
        $region22: #{tpu_custom_call.1} parent=11 // pred_check_branch
          %523 = sbr.rel (%p521) target = $region24
        $region23: #{tpu_custom_call.1} parent=11 // pred_region
          _
        $region24: #{tpu_custom_call.1} parent=11 // pred_fallthru
          _
        // Predicated region
        $region25: #{tpu_custom_call.1} parent=11 // pred_check
          %p524 = pneg %p192
        $region26: #{tpu_custom_call.1} parent=11 // pred_check_branch
          %526 = sbr.rel (%p524) target = $region28
        $region27: #{tpu_custom_call.1} parent=11 // pred_region
          _
        $region28: #{tpu_custom_call.1} parent=11 // pred_fallthru
          _
        // Predicated region
        $region29: #{tpu_custom_call.1} parent=11 // pred_check
          %p527 = pneg %p213
        $region30: #{tpu_custom_call.1} parent=11 // pred_check_branch
          %529 = sbr.rel (%p527) target = $region32
        $region31: #{tpu_custom_call.1} parent=11 // pred_region
          %531 = vsyncadd [#allocation12], 0
          %s532 = sshll.u32 %s6, 4
          %s533 = int_to_ptr.hbm [resolvable:$true] %s532
          %s534 = sshll.u32 [#allocation11], 4
          %s535 = int_to_ptr.vmem [resolvable:$true] %s534
          %540 = dma.hbm_to_vmem [thread:$0]  %s533, 256, %s535, [#allocation12], 64, 64, 4
        $region32: #{tpu_custom_call.1} parent=11 // pred_fallthru
          _
        // Predicated region
        $region33: #{tpu_custom_call.1} parent=11 // pred_check
          %p541 = pneg %p234
        $region34: #{tpu_custom_call.1} parent=11 // pred_check_branch
          %543 = sbr.rel (%p541) target = $region36
        $region35: #{tpu_custom_call.1} parent=11 // pred_region
          _
        $region36: #{tpu_custom_call.1} parent=11 // pred_fallthru
          _
        // Predicated region
        $region37: #{tpu_custom_call.1} parent=11 // pred_check
          %p544 = pneg %p255
        $region38: #{tpu_custom_call.1} parent=11 // pred_check_branch
          %546 = sbr.rel (%p544) target = $region40
        $region39: #{tpu_custom_call.1} parent=11 // pred_region
          %548 = vsyncadd [#allocation12], 0
          %s549 = sshll.u32 %s8, 4
          %s550 = int_to_ptr.hbm [resolvable:$true] %s549
          %s551 = sshll.u32 [#allocation13], 4
          %s552 = int_to_ptr.vmem [resolvable:$true] %s551
          %557 = dma.hbm_to_vmem [thread:$0]  %s550, 256, %s552, [#allocation12], 64, 64, 4
        $region40: #{tpu_custom_call.1} parent=11 // pred_fallthru
          _
        // Predicated region
        $region41: #{tpu_custom_call.1} parent=11 // pred_check
          %p558 = pneg %p276
        $region42: #{tpu_custom_call.1} parent=11 // pred_check_branch
          %560 = sbr.rel (%p558) target = $region44
        $region43: #{tpu_custom_call.1} parent=11 // pred_region
          _
        $region44: #{tpu_custom_call.1} parent=11 // pred_fallthru
          _
        // Predicated region
        $region45: #{tpu_custom_call.1} parent=11 // pred_check
          %p561 = pneg %p297
        $region46: #{tpu_custom_call.1} parent=11 // pred_check_branch
          %563 = sbr.rel (%p561) target = $region48
        $region47: #{tpu_custom_call.1} parent=11 // pred_region
          _
        $region48: #{tpu_custom_call.1} parent=11 // pred_fallthru
          _
        // Predicated region
        $region49: #{tpu_custom_call.1} parent=11 // pred_check
          %p564 = pneg %p318
        $region50: #{tpu_custom_call.1} parent=11 // pred_check_branch
          %566 = sbr.rel (%p564) target = $region52
        $region51: #{tpu_custom_call.1} parent=11 // pred_region
          _
        $region52: #{tpu_custom_call.1} parent=11 // pred_fallthru
          _
        // Predicated region
        $region53: #{tpu_custom_call.1} parent=11 // pred_check
          %p567 = pneg %p339
        $region54: #{tpu_custom_call.1} parent=11 // pred_check_branch
          %569 = sbr.rel (%p567) target = $region56
        $region55: #{tpu_custom_call.1} parent=11 // pred_region
          %571 = vsyncadd [#allocation15], 0
          %s572 = sshll.u32 %s12, 4
          %s573 = int_to_ptr.hbm [resolvable:$true] %s572
          %s574 = sshll.u32 [#allocation14], 4
          %s575 = int_to_ptr.vmem [resolvable:$true] %s574
          %580 = dma.hbm_to_vmem [thread:$0]  %s573, 256, %s575, [#allocation15], 64, 64, 4
        $region56: #{tpu_custom_call.1} parent=11 // pred_fallthru
          _
        // Predicated region
        $region57: #{tpu_custom_call.1} parent=11 // pred_check
          %p581 = pneg %p360
        $region58: #{tpu_custom_call.1} parent=11 // pred_check_branch
          %583 = sbr.rel (%p581) target = $region60
        $region59: #{tpu_custom_call.1} parent=11 // pred_region
          _
        $region60: #{tpu_custom_call.1} parent=11 // pred_fallthru
          _
        // Predicated region
        $region61: #{tpu_custom_call.1} parent=11 // pred_check
          %p584 = pneg %p381
        $region62: #{tpu_custom_call.1} parent=11 // pred_check_branch
          %586 = sbr.rel (%p584) target = $region64
        $region63: #{tpu_custom_call.1} parent=11 // pred_region
          _
        $region64: #{tpu_custom_call.1} parent=11 // pred_fallthru
          _
        // Predicated region
        $region65: #{tpu_custom_call.1} parent=11 // pred_check
          %p587 = pneg %p402
        $region66: #{tpu_custom_call.1} parent=11 // pred_check_branch
          %589 = sbr.rel (%p587) target = $region68
        $region67: #{tpu_custom_call.1} parent=11 // pred_region
          _
        $region68: #{tpu_custom_call.1} parent=11 // pred_fallthru
          _
        // Predicated region
        $region69: #{tpu_custom_call.1} parent=11 // pred_check
          %p590 = pneg %p423
        $region70: #{tpu_custom_call.1} parent=11 // pred_check_branch
          %592 = sbr.rel (%p590) target = $region72
        $region71: #{tpu_custom_call.1} parent=11 // pred_region
          _
        $region72: #{tpu_custom_call.1} parent=11 // pred_fallthru
          _
        // Predicated region
        $region73: #{tpu_custom_call.1} parent=11 // pred_check
          %p593 = pneg %p444
        $region74: #{tpu_custom_call.1} parent=11 // pred_check_branch
          %595 = sbr.rel (%p593) target = $region76
        $region75: #{tpu_custom_call.1} parent=11 // pred_region
          _
        $region76: #{tpu_custom_call.1} parent=11 // pred_fallthru
          _
      $region12: #{tpu_custom_call.1} parent=5 // pred_fallthru
        _
      %p596 = scmp.lt.s32.totalorder %s37, 2
      // Predicated region
      $region77: #{tpu_custom_call.1} parent=5 // pred_check
        %p597 = pneg %p596
      $region78: #{tpu_custom_call.1} parent=5 // pred_check_branch
        %599 = sbr.rel (%p597) target = $region80
      $region79: #{tpu_custom_call.1} parent=5 // pred_region
        // Predicated region
        $region81: #{tpu_custom_call.1} parent=79 // pred_check
          %p600 = pneg %p76
        $region82: #{tpu_custom_call.1} parent=79 // pred_check_branch
          %602 = sbr.rel (%p600) target = $region84
        $region83: #{tpu_custom_call.1} parent=79 // pred_region
          %p603 = scmp.lt.s32.totalorder %s44, 1
          %s604 = scalar_select %p603, %s44, 1
          %s605 = smul.addr %s604, 8
          %s606 = scalar_lea.vmem %s0, %s605
        $region84: #{tpu_custom_call.1} parent=79 // pred_fallthru
          _
        // Predicated region
        $region85: #{tpu_custom_call.1} parent=79 // pred_check
          %p607 = pneg %p102
        $region86: #{tpu_custom_call.1} parent=79 // pred_check_branch
          %609 = sbr.rel (%p607) target = $region88
        $region87: #{tpu_custom_call.1} parent=79 // pred_region
          %s610 = sand.u32 %s92, 1
          %s611 = scalar_lea.sflag [#allocation9], %s610
          %s612 = sand.u32 %s92, 1
          %s613 = scalar_lea.vmem [#allocation8], %s612
          %615 = vsyncadd %s611, 0
          %s616 = scalar_lea.hbm %s1, %s44
          %s618 = sshll.u32 %s616, 4
          %s619 = int_to_ptr.hbm [resolvable:$true] %s618
          %s620 = sshll.u32 %s613, 4
          %s621 = int_to_ptr.vmem [resolvable:$true] %s620
          %623 = dma.hbm_to_vmem [thread:$0]  %s619, 16, %s621, %s611
        $region88: #{tpu_custom_call.1} parent=79 // pred_fallthru
          _
      $region80: #{tpu_custom_call.1} parent=5 // pred_fallthru
        _
      %p624 = scmp.le.s32.totalorder 1, %s37
      %p625 = scmp.lt.s32.totalorder %s37, 3
      %p626 = pnand %p624, %p625
      %p627 = pneg %p626
      // Predicated region
      $region89: #{tpu_custom_call.1} parent=5 // pred_check
        _
      $region90: #{tpu_custom_call.1} parent=5 // pred_check_branch
        %629 = sbr.rel (%p626) target = $region92
      $region91: #{tpu_custom_call.1} parent=5 // pred_region
        %s630 = ssub.s32 %s37, 1
        %s631 = sand.u32 %s95, 1
        %s632 = scalar_lea.sflag [#allocation9], %s631
        %s633 = sand.u32 %s95, 1
        %s634 = scalar_lea.vmem [#allocation8], %s633
        // Predicated region
        $region93: #{tpu_custom_call.1} parent=91 // pred_check
          %p635 = pneg %p108
        $region94: #{tpu_custom_call.1} parent=91 // pred_check_branch
          %637 = sbr.rel (%p635) target = $region96
        $region95: #{tpu_custom_call.1} parent=91 // pred_region
          %639 = dma.done %s632, 16
        $region96: #{tpu_custom_call.1} parent=91 // pred_fallthru
          _
        // Predicated region
        $region97: #{tpu_custom_call.1} parent=91 // pred_check
          %p640 = pneg %p213
        $region98: #{tpu_custom_call.1} parent=91 // pred_check_branch
          %642 = sbr.rel (%p640) target = $region100
        $region99: #{tpu_custom_call.1} parent=91 // pred_region
          %644 = dma.done [#allocation12], 256
        $region100: #{tpu_custom_call.1} parent=91 // pred_fallthru
          _
        // Predicated region
        $region101: #{tpu_custom_call.1} parent=91 // pred_check
          %p645 = pneg %p255
        $region102: #{tpu_custom_call.1} parent=91 // pred_check_branch
          %647 = sbr.rel (%p645) target = $region104
        $region103: #{tpu_custom_call.1} parent=91 // pred_region
          %649 = dma.done [#allocation12], 256
        $region104: #{tpu_custom_call.1} parent=91 // pred_fallthru
          _
        // Predicated region
        $region105: #{tpu_custom_call.1} parent=91 // pred_check
          %p650 = pneg %p339
        $region106: #{tpu_custom_call.1} parent=91 // pred_check_branch
          %652 = sbr.rel (%p650) target = $region108
        $region107: #{tpu_custom_call.1} parent=91 // pred_region
          %654 = dma.done [#allocation15], 256
        $region108: #{tpu_custom_call.1} parent=91 // pred_fallthru
          _
        %p655 = scmp.lt.s32.totalorder %s47, 1
        %s656 = scalar_select %p655, %s47, 1
        %s657 = smul.addr %s656, 8
        %s658 = scalar_lea.vmem %s0, %s657
        %p659 = pneg %p82
        %p660 = pneg %p79
        %s661 = sand.u32 %s95, 1
        %s662 = scalar_lea.sflag [#allocation9], %s661
        %s663 = sand.u32 %s95, 1
        %s664 = scalar_lea.vmem [#allocation8], %s663
        %p665 = pneg %p108
        %p666 = pneg %p105
        %p667 = pneg %p129
        %p668 = pneg %p126
        %p669 = pneg %p150
        %p670 = pneg %p147
        %p671 = pneg %p171
        %p672 = pneg %p168
        %p673 = pneg %p192
        %p674 = pneg %p189
        %p675 = pneg %p213
        %p676 = pneg %p210
        %p677 = pneg %p234
        %p678 = pneg %p231
        %p679 = pneg %p255
        %p680 = pneg %p252
        %p681 = pneg %p276
        %p682 = pneg %p273
        %p683 = pneg %p297
        %p684 = pneg %p294
        %p685 = pneg %p318
        %p686 = pneg %p315
        %p687 = pneg %p339
        %p688 = pneg %p336
        %p689 = pneg %p360
        %p690 = pneg %p357
        %p691 = pneg %p381
        %p692 = pneg %p378
        %p693 = pneg %p402
        %p694 = pneg %p399
        %p695 = pneg %p423
        %p696 = pneg %p420
        %p697 = pneg %p444
        %p698 = pneg %p441
        %p699 = pneg %p472
        %p700 = pneg %p469
        %s701 = sand.u32 %s459, 1
        %s702 = scalar_lea.sflag [#allocation10], %s701
        %s703 = sand.u32 %s459, 1
        %s704 = smul.addr %s703, 8
        %s705 = scalar_lea.vmem [#allocation16], %s704
        %p706 = pneg %p500
        %p707 = pneg %p497
        %s708 = sand.u32 %s487, 1
        %s709 = scalar_lea.sflag [#allocation18], %s708
        %s710 = sand.u32 %s487, 1
        %s711 = smul.addr %s710, 16
        %s712 = scalar_lea.vmem [#allocation17], %s711
        %p713 = scmp.lt.s32.totalorder %s47, 1
        %s714 = scalar_select %p713, %s47, 1
        %s715 = smul.addr %s714, 8
        %s716 = scalar_lea.vmem %s0, %s715
        %p718 = scmp.eq.s32.totalorder %s48, 0
        %p719 = scmp.eq.s32.totalorder %s49, 0
        %p720 = pnand %p718, %p719
        %p721 = pneg %p720
        // Predicated region
        $region109: #{tpu_custom_call.1} parent=91 // pred_check
          _
        $region110: #{tpu_custom_call.1} parent=91 // pred_check_branch
          %723 = sbr.rel (%p720) target = $region112
        $region111: #{tpu_custom_call.1} parent=91 // pred_region
          %v724 = vld [vmem:[%s716] sm:$0xff]
          %v725 = vpack.c.bf16 %v724, %v724
          %v726 = vld [vmem:[%s4] sm:$0xf]
          %v727 = vld [vmem:[%s4 + $0x4] sm:$0xf]
          %v728 = vld [vmem:[%s4 + $0x8] sm:$0xf]
          %v729 = vld [vmem:[%s4 + $0xc] sm:$0xf]
          %v730 = vld [vmem:[%s5] sm:$0x1]
          %v732 = vperm.slane %v730, 0
          %v738 = vunpack.c.l.b16 %v726
          %v739 = vunpack.c.l.b16 %v727
          %v740 = vunpack.c.l.b16 %v728
          %v741 = vunpack.c.l.b16 %v729
          %v742 = vpack.c.b16 %v739, %v738
          %v743 = vpack.c.b16 %v741, %v740
          %vm746 = vcmask 261120
          %v748 = vsel %vm746, %v725, 0
          %750 = vmatpush.bf16.msra.mxu0 0
          %751 = vmatpush.bf16.msra.mxu0 0
          %752 = vmatpush.bf16.msra.mxu0 0
          %753 = vmatpush.bf16.msra.mxu0 0
          %754 = vmatpush.bf16.msra.mxu0 0
          %755 = vmatpush.bf16.msra.mxu0 0
          %756 = vmatpush.bf16.msra.mxu0 %v743
          %757 = vmatpush.bf16.msra.mxu0 %v742
          %758 = vmatmul.bf16.gmra.mxu0 %v748
          %v759 = vpop.f32.mrf.mxu0
          %v760 = vadd.f32 %v732, %v759
          %v761 = vpop.f32.mrf.mxu0
          %762 = vdwg.mxu0
          %v763 = vld [vmem:[#allocation11] sm:$0xf]
          %v764 = vld [vmem:[#allocation11 + $0x4] sm:$0xf]
          %v765 = vld [vmem:[#allocation11 + $0x8] sm:$0xf]
          %v766 = vld [vmem:[#allocation11 + $0xc] sm:$0xf]
          %v767 = vld [vmem:[%s7] sm:$0x1]
          %v769 = vperm.slane %v767, 0
          %v775 = vunpack.c.l.b16 %v763
          %v776 = vunpack.c.l.b16 %v764
          %v777 = vunpack.c.l.b16 %v765
          %v778 = vunpack.c.l.b16 %v766
          %v779 = vpack.c.b16 %v776, %v775
          %v780 = vpack.c.b16 %v778, %v777
          %783 = vmatpush.bf16.msra.mxu0 0
          %784 = vmatpush.bf16.msra.mxu0 0
          %785 = vmatpush.bf16.msra.mxu0 0
          %786 = vmatpush.bf16.msra.mxu0 0
          %787 = vmatpush.bf16.msra.mxu0 0
          %788 = vmatpush.bf16.msra.mxu0 0
          %789 = vmatpush.bf16.msra.mxu0 %v780
          %790 = vmatpush.bf16.msra.mxu0 %v779
          %791 = vmatmul.bf16.gmra.mxu0 %v748
          %v792 = vpop.f32.mrf.mxu0
          %v793 = vadd.f32 %v769, %v792
          %v794 = vpop.f32.mrf.mxu0
          %795 = vdwg.mxu0
          %v796 = vpack.c.bf16 %v760, %v760
          %vm797 = vcmask 257024
          %798 = vst.msk [vmem:[#allocation2] sm:$0xf] %vm797, %v796
          %v799 = vpack.c.bf16 %v793, %v793
          %800 = vst.msk [vmem:[#allocation3] sm:$0xf] %vm797, %v799
        $region112: #{tpu_custom_call.1} parent=91 // pred_fallthru
          _
        // Predicated region
        $region113: #{tpu_custom_call.1} parent=91 // pred_check
          %p801 = pneg %p719
        $region114: #{tpu_custom_call.1} parent=91 // pred_check_branch
          %803 = sbr.rel (%p801) target = $region116
        $region115: #{tpu_custom_call.1} parent=91 // pred_region
          %s804 = smul.u32 %s48, 8
          %s805 = scalar_lea.vmem %s716, %s804
          %v806 = vld [vmem:[%s805] sm:$0xff]
          %v807 = vpack.c.bf16 %v806, %v806
          %v808 = vld [vmem:[%s634] sm:$0x1]
          %v809 = vld [vmem:[%s2] sm:$0xf]
          %v810 = vld [vmem:[%s2 + $0x4] sm:$0xf]
          %v811 = vld [vmem:[%s2 + $0x8] sm:$0xf]
          %v812 = vld [vmem:[%s2 + $0xc] sm:$0xf]
          %v813 = vld [vmem:[%s3] sm:$0x1]
          %v815 = vperm.slane %v813, 0
          %v821 = vunpack.c.l.b16 %v809
          %v822 = vunpack.c.l.b16 %v810
          %v823 = vunpack.c.l.b16 %v811
          %v824 = vunpack.c.l.b16 %v812
          %v825 = vpack.c.b16 %v822, %v821
          %v826 = vpack.c.b16 %v824, %v823
          %vm829 = vcmask 261120
          %v831 = vsel %vm829, %v807, 0
          %833 = vmatpush.bf16.msra.mxu0 0
          %834 = vmatpush.bf16.msra.mxu0 0
          %835 = vmatpush.bf16.msra.mxu0 0
          %836 = vmatpush.bf16.msra.mxu0 0
          %837 = vmatpush.bf16.msra.mxu0 0
          %838 = vmatpush.bf16.msra.mxu0 0
          %839 = vmatpush.bf16.msra.mxu0 %v826
          %840 = vmatpush.bf16.msra.mxu0 %v825
          %841 = vmatmul.bf16.gmra.mxu0 %v831
          %v842 = vpop.f32.mrf.mxu0
          %v843 = vadd.f32 %v815, %v842
          %v844 = vpop.f32.mrf.mxu0
          %845 = vdwg.mxu0
          %v846 = vmul.f32 %v843, 0.35355338
          %v847 = vpack.c.bf16 %v846, %v846
          %v848 = vld [vmem:[#allocation2] sm:$0xf]
          %v849 = vld [vmem:[#allocation3] sm:$0xf]
          %v851 = vperm.slane %v808, 0
          %vm853 = vcmask 64512
          %v855 = vsel %vm853, %v847, 0
          %v858 = vsel %vm853, %v848, 0
          %860 = vmatpush.bf16.xpose.msra.mxu0 0
          %861 = vmatpush.bf16.xpose.msra.mxu0 0
          %862 = vmatpush.bf16.xpose.msra.mxu0 0
          %863 = vmatpush.bf16.xpose.msra.mxu0 0
          %864 = vmatpush.bf16.xpose.msra.mxu0 0
          %865 = vmatpush.bf16.xpose.msra.mxu0 0
          %866 = vmatpush.bf16.xpose.msra.mxu0 0
          %867 = vmatpush.bf16.xpose.msra.mxu0 %v858
          %868 = vmatmul.bf16.gmra.mxu0 %v855
          %v869 = vpop.f32.mrf.mxu0
          %v870 = vadd.f32 %v851, %v869
          %v871 = vpop.f32.mrf.mxu0
          %872 = vdwg.mxu0
          %v873 = vsel %vm853, %v870, -inf
          %874 = vmax.xlane.f32.xlu0 %v873
          %v875 = vpop.xlane.xlu0 %874
          %v876 = vsub.f32 %v870, %v875
          %v877 = vmul.f32 %v876, 1.442695
          %v878 = vpow.pop %v877
          %v879 = vsel %vm853, %v878, 0.0
          %880 = vadd.xlane.f32.xlu0 %v879
          %v881 = vpop.xlane.xlu0 %880
          %v882 = vrcp.pop %v881
          %v883 = vmul.f32 %v878, %v882
          %v884 = vpack.c.bf16 %v883, %v883
          %vm885 = vcmask 60416
          %886 = vst.msk [vmem:[%s712] sm:$0xf] %vm885, %v884
          %v888 = vsel %vm853, %v884, 0
          %vm890 = vcmask 1043456
          %v892 = vsel %vm890, %v849, 0
          %894 = vmatpush.bf16.msra.mxu0 0
          %895 = vmatpush.bf16.msra.mxu0 0
          %896 = vmatpush.bf16.msra.mxu0 0
          %897 = vmatpush.bf16.msra.mxu0 0
          %898 = vmatpush.bf16.msra.mxu0 0
          %899 = vmatpush.bf16.msra.mxu0 0
          %900 = vmatpush.bf16.msra.mxu0 0
          %901 = vmatpush.bf16.msra.mxu0 %v892
          %902 = vmatmul.bf16.gmra.mxu0 %v888
          %v903 = vpop.f32.mrf.mxu0
          %v904 = vadd.f32 0.0, %v903
          %v905 = vpop.f32.mrf.mxu0
          %906 = vdwg.mxu0
          %v907 = vpack.c.bf16 %v904, %v904
          %908 = vst.msk [vmem:[#allocation7] sm:$0xf] %vm885, %v907
          %v910 = vunpack.c.l.b16 %v847
          %v911 = vpack.c.b16 %v910, %v910
          %912 = vrot.lane.b32.xlu0 %v911, 120
          %v913 = vpop.permute.xlu0 %912
          %v915 = vunpack.c.l.b16 %v848
          %v916 = vpack.c.b16 %v915, %v915
          %917 = vrot.lane.b32.xlu0 %v916, 120
          %v918 = vpop.permute.xlu0 %917
          %v920 = vsel %vm853, %v913, 0
          %v923 = vsel %vm853, %v918, 0
          %925 = vmatpush.bf16.xpose.msra.mxu0 0
          %926 = vmatpush.bf16.xpose.msra.mxu0 0
          %927 = vmatpush.bf16.xpose.msra.mxu0 0
          %928 = vmatpush.bf16.xpose.msra.mxu0 0
          %929 = vmatpush.bf16.xpose.msra.mxu0 0
          %930 = vmatpush.bf16.xpose.msra.mxu0 0
          %931 = vmatpush.bf16.xpose.msra.mxu0 0
          %932 = vmatpush.bf16.xpose.msra.mxu0 %v923
          %933 = vmatmul.bf16.gmra.mxu0 %v920
          %v934 = vpop.f32.mrf.mxu0
          %v935 = vadd.f32 %v851, %v934
          %v936 = vpop.f32.mrf.mxu0
          %937 = vdwg.mxu0
          %v938 = vsel %vm853, %v935, -inf
          %939 = vmax.xlane.f32.xlu0 %v938
          %v940 = vpop.xlane.xlu0 %939
          %v941 = vsub.f32 %v935, %v940
          %v942 = vmul.f32 %v941, 1.442695
          %v943 = vpow.pop %v942
          %v944 = vsel %vm853, %v943, 0.0
          %945 = vadd.xlane.f32.xlu0 %v944
          %v946 = vpop.xlane.xlu0 %945
          %v947 = vrcp.pop %v946
          %v948 = vmul.f32 %v943, %v947
          %v949 = vpack.c.bf16 %v948, %v948
          %s950 = scalar_lea.vmem %s712, 4 [#allocation17]
          %951 = vst.msk [vmem:[%s950] sm:$0xf] %vm885, %v949
          %v953 = vunpack.c.l.b16 %v849
          %v954 = vpack.c.b16 %v953, %v953
          %955 = vrot.lane.b32.xlu0 %v954, 120
          %v956 = vpop.permute.xlu0 %955
          %v958 = vsel %vm853, %v949, 0
          %v961 = vsel %vm890, %v956, 0
          %963 = vmatpush.bf16.msra.mxu0 0
          %964 = vmatpush.bf16.msra.mxu0 0
          %965 = vmatpush.bf16.msra.mxu0 0
          %966 = vmatpush.bf16.msra.mxu0 0
          %967 = vmatpush.bf16.msra.mxu0 0
          %968 = vmatpush.bf16.msra.mxu0 0
          %969 = vmatpush.bf16.msra.mxu0 0
          %970 = vmatpush.bf16.msra.mxu0 %v961
          %971 = vmatmul.bf16.gmra.mxu0 %v958
          %v972 = vpop.f32.mrf.mxu0
          %v973 = vadd.f32 0.0, %v972
          %v974 = vpop.f32.mrf.mxu0
          %975 = vdwg.mxu0
          %v976 = vpack.c.bf16 %v973, %v973
          %978 = vrot.lane.b32.xlu0 %v976, 8
          %v979 = vpop.permute.xlu0 %978
          %vm981 = vcmask 126016
          %982 = vst.msk [vmem:[#allocation7] sm:$0xf] %vm981, %v979
          %983 = vrot.lane.b32.xlu0 %v911, 112
          %v984 = vpop.permute.xlu0 %983
          %985 = vrot.lane.b32.xlu0 %v916, 112
          %v986 = vpop.permute.xlu0 %985
          %v988 = vsel %vm853, %v984, 0
          %v991 = vsel %vm853, %v986, 0
          %993 = vmatpush.bf16.xpose.msra.mxu0 0
          %994 = vmatpush.bf16.xpose.msra.mxu0 0
          %995 = vmatpush.bf16.xpose.msra.mxu0 0
          %996 = vmatpush.bf16.xpose.msra.mxu0 0
          %997 = vmatpush.bf16.xpose.msra.mxu0 0
          %998 = vmatpush.bf16.xpose.msra.mxu0 0
          %999 = vmatpush.bf16.xpose.msra.mxu0 0
          %1000 = vmatpush.bf16.xpose.msra.mxu0 %v991
          %1001 = vmatmul.bf16.gmra.mxu0 %v988
          %v1002 = vpop.f32.mrf.mxu0
          %v1003 = vadd.f32 %v851, %v1002
          %v1004 = vpop.f32.mrf.mxu0
          %1005 = vdwg.mxu0
          %v1006 = vsel %vm853, %v1003, -inf
          %1007 = vmax.xlane.f32.xlu0 %v1006
          %v1008 = vpop.xlane.xlu0 %1007
          %v1009 = vsub.f32 %v1003, %v1008
          %v1010 = vmul.f32 %v1009, 1.442695
          %v1011 = vpow.pop %v1010
          %v1012 = vsel %vm853, %v1011, 0.0
          %1013 = vadd.xlane.f32.xlu0 %v1012
          %v1014 = vpop.xlane.xlu0 %1013
          %v1015 = vrcp.pop %v1014
          %v1016 = vmul.f32 %v1011, %v1015
          %v1017 = vpack.c.bf16 %v1016, %v1016
          %s1018 = scalar_lea.vmem %s712, 8 [#allocation17]
          %1019 = vst.msk [vmem:[%s1018] sm:$0xf] %vm885, %v1017
          %1020 = vrot.lane.b32.xlu0 %v954, 112
          %v1021 = vpop.permute.xlu0 %1020
          %v1023 = vsel %vm853, %v1017, 0
          %v1026 = vsel %vm890, %v1021, 0
          %1028 = vmatpush.bf16.msra.mxu0 0
          %1029 = vmatpush.bf16.msra.mxu0 0
          %1030 = vmatpush.bf16.msra.mxu0 0
          %1031 = vmatpush.bf16.msra.mxu0 0
          %1032 = vmatpush.bf16.msra.mxu0 0
          %1033 = vmatpush.bf16.msra.mxu0 0
          %1034 = vmatpush.bf16.msra.mxu0 0
          %1035 = vmatpush.bf16.msra.mxu0 %v1026
          %1036 = vmatmul.bf16.gmra.mxu0 %v1023
          %v1037 = vpop.f32.mrf.mxu0
          %v1038 = vadd.f32 0.0, %v1037
          %v1039 = vpop.f32.mrf.mxu0
          %1040 = vdwg.mxu0
          %v1041 = vpack.c.bf16 %v1038, %v1038
          %1043 = vrot.lane.b32.xlu0 %v1041, 16
          %v1044 = vpop.permute.xlu0 %1043
          %vm1046 = vcmask 191616
          %1047 = vst.msk [vmem:[#allocation7] sm:$0xf] %vm1046, %v1044
          %1048 = vrot.lane.b32.xlu0 %v911, 104
          %v1049 = vpop.permute.xlu0 %1048
          %1050 = vrot.lane.b32.xlu0 %v916, 104
          %v1051 = vpop.permute.xlu0 %1050
          %v1053 = vsel %vm853, %v1049, 0
          %v1056 = vsel %vm853, %v1051, 0
          %1058 = vmatpush.bf16.xpose.msra.mxu0 0
          %1059 = vmatpush.bf16.xpose.msra.mxu0 0
          %1060 = vmatpush.bf16.xpose.msra.mxu0 0
          %1061 = vmatpush.bf16.xpose.msra.mxu0 0
          %1062 = vmatpush.bf16.xpose.msra.mxu0 0
          %1063 = vmatpush.bf16.xpose.msra.mxu0 0
          %1064 = vmatpush.bf16.xpose.msra.mxu0 0
          %1065 = vmatpush.bf16.xpose.msra.mxu0 %v1056
          %1066 = vmatmul.bf16.gmra.mxu0 %v1053
          %v1067 = vpop.f32.mrf.mxu0
          %v1068 = vadd.f32 %v851, %v1067
          %v1069 = vpop.f32.mrf.mxu0
          %1070 = vdwg.mxu0
          %v1071 = vsel %vm853, %v1068, -inf
          %1072 = vmax.xlane.f32.xlu0 %v1071
          %v1073 = vpop.xlane.xlu0 %1072
          %v1074 = vsub.f32 %v1068, %v1073
          %v1075 = vmul.f32 %v1074, 1.442695
          %v1076 = vpow.pop %v1075
          %v1077 = vsel %vm853, %v1076, 0.0
          %1078 = vadd.xlane.f32.xlu0 %v1077
          %v1079 = vpop.xlane.xlu0 %1078
          %v1080 = vrcp.pop %v1079
          %v1081 = vmul.f32 %v1076, %v1080
          %v1082 = vpack.c.bf16 %v1081, %v1081
          %s1083 = scalar_lea.vmem %s712, 12 [#allocation17]
          %1084 = vst.msk [vmem:[%s1083] sm:$0xf] %vm885, %v1082
          %1085 = vrot.lane.b32.xlu0 %v954, 104
          %v1086 = vpop.permute.xlu0 %1085
          %v1088 = vsel %vm853, %v1082, 0
          %v1091 = vsel %vm890, %v1086, 0
          %1093 = vmatpush.bf16.msra.mxu0 0
          %1094 = vmatpush.bf16.msra.mxu0 0
          %1095 = vmatpush.bf16.msra.mxu0 0
          %1096 = vmatpush.bf16.msra.mxu0 0
          %1097 = vmatpush.bf16.msra.mxu0 0
          %1098 = vmatpush.bf16.msra.mxu0 0
          %1099 = vmatpush.bf16.msra.mxu0 0
          %1100 = vmatpush.bf16.msra.mxu0 %v1091
          %1101 = vmatmul.bf16.gmra.mxu0 %v1088
          %v1102 = vpop.f32.mrf.mxu0
          %v1103 = vadd.f32 0.0, %v1102
          %v1104 = vpop.f32.mrf.mxu0
          %1105 = vdwg.mxu0
          %v1106 = vpack.c.bf16 %v1103, %v1103
          %1108 = vrot.lane.b32.xlu0 %v1106, 24
          %v1109 = vpop.permute.xlu0 %1108
          %vm1111 = vcmask 257216
          %1112 = vst.msk [vmem:[#allocation7] sm:$0xf] %vm1111, %v1109
          %v1113 = vld [vmem:[#allocation7] sm:$0xf]
          %v1114 = vld [vmem:[#allocation13] sm:$0xf]
          %v1115 = vld [vmem:[#allocation13 + $0x4] sm:$0xf]
          %v1116 = vld [vmem:[#allocation13 + $0x8] sm:$0xf]
          %v1117 = vld [vmem:[#allocation13 + $0xc] sm:$0xf]
          %v1118 = vld [vmem:[%s9] sm:$0x1]
          %v1120 = vperm.slane %v1118, 0
          %v1126 = vunpack.c.l.b16 %v1114
          %v1127 = vunpack.c.l.b16 %v1115
          %v1128 = vunpack.c.l.b16 %v1116
          %v1129 = vunpack.c.l.b16 %v1117
          %v1130 = vpack.c.b16 %v1127, %v1126
          %v1131 = vpack.c.b16 %v1129, %v1128
          %v1135 = vsel %vm829, %v1113, 0
          %1137 = vmatpush.bf16.msra.mxu0 0
          %1138 = vmatpush.bf16.msra.mxu0 0
          %1139 = vmatpush.bf16.msra.mxu0 0
          %1140 = vmatpush.bf16.msra.mxu0 0
          %1141 = vmatpush.bf16.msra.mxu0 0
          %1142 = vmatpush.bf16.msra.mxu0 0
          %1143 = vmatpush.bf16.msra.mxu0 %v1131
          %1144 = vmatpush.bf16.msra.mxu0 %v1130
          %1145 = vmatmul.bf16.gmra.mxu0 %v1135
          %v1146 = vpop.f32.mrf.mxu0
          %v1147 = vadd.f32 %v1120, %v1146
          %v1148 = vpop.f32.mrf.mxu0
          %1149 = vdwg.mxu0
          %v1150 = vadd.f32 %v806, %v1147
          %v1151 = vld [vmem:[%s10] sm:$0x1]
          %v1152 = vld [vmem:[%s11] sm:$0x1]
          %v1153 = vsel %vm829, %v1150, 0.0
          %1154 = vadd.xlane.f32.xlu0 %v1153
          %v1155 = vpop.xlane.xlu0 %1154
          %v1156 = vrcp.pop 32.0
          %v1157 = vmul.f32 32.0, %v1156
          %v1158 = vsub.f32 1.0, %v1157
          %v1159 = vmul.f32 %v1156, %v1158
          %v1160 = vadd.f32 %v1156, %v1159
          %vm1161 = vweird.f32 %v1156
          %v1162 = vsel %vm1161, %v1156, %v1160
          %v1163 = vmul.f32 %v1155, %v1162
          %v1164 = vsub.f32 %v1150, %v1163
          %v1165 = vmul.f32 %v1164, %v1164
          %v1166 = vsel %vm829, %v1165, 0.0
          %1167 = vadd.xlane.f32.xlu0 %v1166
          %v1168 = vpop.xlane.xlu0 %1167
          %v1169 = vmul.f32 %v1168, %v1162
          %v1170 = vadd.f32 %v1169, 1e-12
          %v1171 = vrsqrt.pop %v1170
          %v1172 = vmul.f32 %v1171, %v1170
          %v1173 = vmul.f32 %v1172, %v1171
          %v1174 = vmul.f32 0.5, %v1173
          %v1175 = vsub.f32 1.5, %v1174
          %v1176 = vmul.f32 %v1171, %v1175
          %vm1177 = vweird.f32 %v1170
          %vm1178 = vweird.f32 %v1171
          %vm1179 = vmor %vm1177, %vm1178
          %v1180 = vsel %vm1179, %v1171, %v1176
          %v1181 = vmul.f32 %v1164, %v1180
          %v1183 = vperm.slane %v1151, 0
          %v1185 = vmul.f32 %v1181, %v1183
          %v1187 = vperm.slane %v1152, 0
          %v1189 = vadd.f32 %v1185, %v1187
          %1190 = vst.msk [vmem:[#allocation4] sm:$0xff] %vm829, %v1189
          %v1191 = vpack.c.bf16 %v1189, %v1189
          %vm1192 = vcmask 257024
          %1193 = vst.msk [vmem:[#allocation5] sm:$0xf] %vm1192, %v1191
          %1194 = vst.msk [vmem:[#allocation6] sm:$0xff] %vm829, 0.0
        $region116: #{tpu_custom_call.1} parent=91 // pred_fallthru
          _
        %v1195 = vld [vmem:[#allocation5] sm:$0xf]
        %v1196 = vld [vmem:[#allocation14] sm:$0xf]
        %v1197 = vld [vmem:[#allocation14 + $0x4] sm:$0xf]
        %v1198 = vld [vmem:[#allocation14 + $0x8] sm:$0xf]
        %v1199 = vld [vmem:[#allocation14 + $0xc] sm:$0xf]
        %v1200 = vld [vmem:[%s13] sm:$0x1]
        %v1202 = vperm.slane %v1200, 0
        %v1208 = vunpack.c.l.b16 %v1196
        %v1209 = vunpack.c.l.b16 %v1197
        %v1210 = vunpack.c.l.b16 %v1198
        %v1211 = vunpack.c.l.b16 %v1199
        %v1212 = vpack.c.b16 %v1209, %v1208
        %v1213 = vpack.c.b16 %v1211, %v1210
        %vm1216 = vcmask 261120
        %v1218 = vsel %vm1216, %v1195, 0
        %1220 = vmatpush.bf16.msra.mxu0 0
        %1221 = vmatpush.bf16.msra.mxu0 0
        %1222 = vmatpush.bf16.msra.mxu0 0
        %1223 = vmatpush.bf16.msra.mxu0 0
        %1224 = vmatpush.bf16.msra.mxu0 0
        %1225 = vmatpush.bf16.msra.mxu0 0
        %1226 = vmatpush.bf16.msra.mxu0 %v1213
        %1227 = vmatpush.bf16.msra.mxu0 %v1212
        %1228 = vmatmul.bf16.gmra.mxu0 %v1218
        %v1229 = vpop.f32.mrf.mxu0
        %v1230 = vadd.f32 %v1202, %v1229
        %v1231 = vpop.f32.mrf.mxu0
        %1232 = vdwg.mxu0
        %v1233 = vmul.f32 %v1230, %v1230
        %v1234 = vmul.f32 %v1230, %v1233
        %v1235 = vmul.f32 %v1234, 0.044715
        %v1236 = vadd.f32 %v1230, %v1235
        %v1237 = vmul.f32 %v1236, 0.7978846
        %v1238 = vtanh.pop %v1237
        %v1239 = vadd.f32 %v1238, 1.0
        %v1240 = vmul.f32 %v1239, 0.5
        %v1241 = vmul.f32 %v1230, %v1240
        %v1242 = vld [vmem:[#allocation6] sm:$0xff]
        %v1243 = vpack.c.bf16 %v1241, %v1241
        %v1244 = vld [vmem:[%s14] sm:$0xf]
        %v1245 = vld [vmem:[%s14 + $0x4] sm:$0xf]
        %v1246 = vld [vmem:[%s14 + $0x8] sm:$0xf]
        %v1247 = vld [vmem:[%s14 + $0xc] sm:$0xf]
        %v1248 = vld [vmem:[%s14 + $0x10] sm:$0xf]
        %v1249 = vld [vmem:[%s14 + $0x14] sm:$0xf]
        %v1250 = vld [vmem:[%s14 + $0x18] sm:$0xf]
        %v1251 = vld [vmem:[%s14 + $0x1c] sm:$0xf]
        %v1260 = vunpack.c.l.b16 %v1244
        %v1261 = vunpack.c.l.b16 %v1245
        %v1262 = vunpack.c.l.b16 %v1246
        %v1263 = vunpack.c.l.b16 %v1247
        %v1264 = vunpack.c.l.b16 %v1248
        %v1265 = vunpack.c.l.b16 %v1249
        %v1266 = vunpack.c.l.b16 %v1250
        %v1267 = vunpack.c.l.b16 %v1251
        %v1268 = vpack.c.b16 %v1261, %v1260
        %v1269 = vpack.c.b16 %v1263, %v1262
        %v1270 = vpack.c.b16 %v1265, %v1264
        %v1271 = vpack.c.b16 %v1267, %v1266
        %vm1276 = vcmask 523264
        %v1278 = vsel %vm1276, %v1243, 0
        %1280 = vmatpush.bf16.msra.mxu0 0
        %1281 = vmatpush.bf16.msra.mxu0 0
        %1282 = vmatpush.bf16.msra.mxu0 0
        %1283 = vmatpush.bf16.msra.mxu0 0
        %1284 = vmatpush.bf16.msra.mxu0 %v1271
        %1285 = vmatpush.bf16.msra.mxu0 %v1270
        %1286 = vmatpush.bf16.msra.mxu0 %v1269
        %1287 = vmatpush.bf16.msra.mxu0 %v1268
        %1288 = vmatmul.bf16.gmra.mxu0 %v1278
        %v1289 = vpop.f32.mrf.mxu0
        %v1290 = vadd.f32 0.0, %v1289
        %v1291 = vpop.f32.mrf.mxu0
        %1292 = vdwg.mxu0
        %v1293 = vadd.f32 %v1242, %v1290
        %1294 = vst.msk [vmem:[#allocation6] sm:$0xff] %vm1216, %v1293
        // Predicated region
        $region117: #{tpu_custom_call.1} parent=91 // pred_check
          %p1295 = pneg %p719
        $region118: #{tpu_custom_call.1} parent=91 // pred_check_branch
          %1297 = sbr.rel (%p1295) target = $region120
        $region119: #{tpu_custom_call.1} parent=91 // pred_region
          %v1298 = vld [vmem:[#allocation4] sm:$0xff]
          %v1299 = vld [vmem:[#allocation6] sm:$0xff]
          %v1300 = vadd.f32 %v1298, %v1299
          %v1301 = vld [vmem:[%s15] sm:$0x1]
          %v1303 = vperm.slane %v1301, 0
          %v1305 = vadd.f32 %v1300, %v1303
          %v1306 = vld [vmem:[%s16] sm:$0x1]
          %v1307 = vld [vmem:[%s17] sm:$0x1]
          %v1308 = vsel %vm1216, %v1305, 0.0
          %1309 = vadd.xlane.f32.xlu0 %v1308
          %v1310 = vpop.xlane.xlu0 %1309
          %v1311 = vrcp.pop 32.0
          %v1312 = vmul.f32 32.0, %v1311
          %v1313 = vsub.f32 1.0, %v1312
          %v1314 = vmul.f32 %v1311, %v1313
          %v1315 = vadd.f32 %v1311, %v1314
          %vm1316 = vweird.f32 %v1311
          %v1317 = vsel %vm1316, %v1311, %v1315
          %v1318 = vmul.f32 %v1310, %v1317
          %v1319 = vsub.f32 %v1305, %v1318
          %v1320 = vmul.f32 %v1319, %v1319
          %v1321 = vsel %vm1216, %v1320, 0.0
          %1322 = vadd.xlane.f32.xlu0 %v1321
          %v1323 = vpop.xlane.xlu0 %1322
          %v1324 = vmul.f32 %v1323, %v1317
          %v1325 = vadd.f32 %v1324, 1e-12
          %v1326 = vrsqrt.pop %v1325
          %v1327 = vmul.f32 %v1326, %v1325
          %v1328 = vmul.f32 %v1327, %v1326
          %v1329 = vmul.f32 0.5, %v1328
          %v1330 = vsub.f32 1.5, %v1329
          %v1331 = vmul.f32 %v1326, %v1330
          %vm1332 = vweird.f32 %v1325
          %vm1333 = vweird.f32 %v1326
          %vm1334 = vmor %vm1332, %vm1333
          %v1335 = vsel %vm1334, %v1326, %v1331
          %v1336 = vmul.f32 %v1319, %v1335
          %v1338 = vperm.slane %v1306, 0
          %v1340 = vmul.f32 %v1336, %v1338
          %v1342 = vperm.slane %v1307, 0
          %v1344 = vadd.f32 %v1340, %v1342
          %1345 = vst.msk [vmem:[%s705] sm:$0xff] %vm1216, %v1344
        $region120: #{tpu_custom_call.1} parent=91 // pred_fallthru
          _
        %s1346 = sand.u32 %s459, 1
        %s1347 = scalar_lea.sflag [#allocation10], %s1346
        %s1348 = sand.u32 %s459, 1
        %s1349 = smul.addr %s1348, 8
        %s1350 = scalar_lea.vmem [#allocation16], %s1349
        %s1351 = sand.u32 %s487, 1
        %s1352 = scalar_lea.sflag [#allocation18], %s1351
        %s1353 = sand.u32 %s487, 1
        %s1354 = smul.addr %s1353, 16
        %s1355 = scalar_lea.vmem [#allocation17], %s1354
        // Predicated region
        $region121: #{tpu_custom_call.1} parent=91 // pred_check
          %p1356 = pneg %p469
        $region122: #{tpu_custom_call.1} parent=91 // pred_check_branch
          %1358 = sbr.rel (%p1356) target = $region124
        $region123: #{tpu_custom_call.1} parent=91 // pred_region
          %1360 = vsyncadd %s1347, 0
          %s1361 = sadd.s32 %s48, %s47
          %s1362 = smul.addr %s1361, 8
          %s1363 = scalar_lea.hbm %s18, %s1362
          %s1365 = sshll.u32 %s1350, 4
          %s1366 = int_to_ptr.vmem [resolvable:$true] %s1365
          %s1367 = sshll.u32 %s1363, 4
          %s1368 = int_to_ptr.hbm [resolvable:$true] %s1367
          %1370 = dma.vmem_to_hbm [thread:$0]  %s1366, 128, %s1368, %s1347
        $region124: #{tpu_custom_call.1} parent=91 // pred_fallthru
          _
        // Predicated region
        $region125: #{tpu_custom_call.1} parent=91 // pred_check
          %p1371 = pneg %p497
        $region126: #{tpu_custom_call.1} parent=91 // pred_check_branch
          %1373 = sbr.rel (%p1371) target = $region128
        $region127: #{tpu_custom_call.1} parent=91 // pred_region
          %1375 = vsyncadd %s1352, 0
          %s1376 = smul.addr %s47, 4
          %s1377 = sadd.s32 %s48, %s1376
          %s1378 = smul.addr %s1377, 4
          %s1379 = scalar_lea.hbm %s19, %s1378
          %s1380 = sshll.u32 %s1355, 4
          %s1381 = int_to_ptr.vmem [resolvable:$true] %s1380
          %s1382 = sshll.u32 %s1379, 4
          %s1383 = int_to_ptr.hbm [resolvable:$true] %s1382
          %1388 = dma.vmem_to_hbm [thread:$0]  %s1381, 256, %s1383, %s1352, 64, 64, 4
        $region128: #{tpu_custom_call.1} parent=91 // pred_fallthru
          _
      $region92: #{tpu_custom_call.1} parent=5 // pred_fallthru
        _
      %p1389 = scmp.le.s32.totalorder 2, %s37
      // Predicated region
      $region129: #{tpu_custom_call.1} parent=5 // pred_check
        %p1390 = pneg %p1389
      $region130: #{tpu_custom_call.1} parent=5 // pred_check_branch
        %1392 = sbr.rel (%p1390) target = $region132
      $region131: #{tpu_custom_call.1} parent=5 // pred_region
        %s1393 = ssub.s32 %s37, 2
        // Predicated region
        $region133: #{tpu_custom_call.1} parent=131 // pred_check
          %p1394 = pneg %p475
        $region134: #{tpu_custom_call.1} parent=131 // pred_check_branch
          %1396 = sbr.rel (%p1394) target = $region136
        $region135: #{tpu_custom_call.1} parent=131 // pred_region
          %s1397 = sand.u32 %s460, 1
          %s1398 = scalar_lea.sflag [#allocation10], %s1397
          %s1399 = sand.u32 %s460, 1
          %s1400 = smul.addr %s1399, 8
          %s1401 = scalar_lea.vmem [#allocation16], %s1400
          %1403 = dma.done %s1398, 128
        $region136: #{tpu_custom_call.1} parent=131 // pred_fallthru
          _
        // Predicated region
        $region137: #{tpu_custom_call.1} parent=131 // pred_check
          %p1404 = pneg %p503
        $region138: #{tpu_custom_call.1} parent=131 // pred_check_branch
          %1406 = sbr.rel (%p1404) target = $region140
        $region139: #{tpu_custom_call.1} parent=131 // pred_region
          %s1407 = sand.u32 %s488, 1
          %s1408 = scalar_lea.sflag [#allocation18], %s1407
          %s1409 = sand.u32 %s488, 1
          %s1410 = smul.addr %s1409, 16
          %s1411 = scalar_lea.vmem [#allocation17], %s1410
          %1413 = dma.done %s1408, 256
        $region140: #{tpu_custom_call.1} parent=131 // pred_fallthru
          _
      $region132: #{tpu_custom_call.1} parent=5 // pred_fallthru
        _
    $region6: #{tpu_custom_call.1} parent=1 // loop_footer
      %s41 = sadd.s32 1, %s37
    $region7: #{tpu_custom_call.1} parent=1 // loop_footer_branch
      %36 = sbr.rel target = $region3
    $region8: #{tpu_custom_call.1} parent=1 // loop_exit
      _
    %1414 = vsyncpa [#allocation9], 1
    %s1415 = scalar_lea.sflag [#allocation9], 1
    %1416 = vsyncpa %s1415, 1
    %1417 = vsyncpa [#allocation12], 1
    %1418 = vsyncpa [#allocation15], 1
    %1419 = vsyncpa [#allocation10], 1
    %s1420 = scalar_lea.sflag [#allocation10], 1
    %1421 = vsyncpa %s1420, 1
    %1422 = vsyncpa [#allocation18], 1
    %s1423 = scalar_lea.sflag [#allocation18], 1
    %1424 = vsyncpa %s1423, 1

</llo_original>
